<compile_context>
chip_gen: v7x
topology: tpu7x:2x2x1
jax: 0.10.0
libtpu: 0.0.40
codegen_flags: <defaults>
</compile_context>

<pallas_src>
import jax
import jax.numpy as jnp
from jax.experimental import pallas as pl
from jax.experimental.pallas import tpu as pltpu


# ----------------------------------------------------------------------------
# Fused Pallas kernel: the whole batch block in one grid step
# ----------------------------------------------------------------------------
def _route_func_kernel(x_ref, wg_ref, bg_ref, wa_ref, sa_ref, ta_ref, wb_ref, o_ref):
    """Fused RouteFuncMLP for a block of NB batch elements (native NCHW layout).

    x_ref : (NB, C, T, V)   input activation block, as stored in HBM (no transpose)
    wg_ref: (C, C)          conv_g 1x1 weight (out, in), bf16
    bg_ref: (C, 1)          conv_g bias, f32
    wa_ref: (k0, R, C)      conv_a weight (tap, out, in), bf16
    sa_ref: (R, 1)          BN scale, f32
    ta_ref: (R, 1)          BN shift (conv_a bias folded in), f32
    wb_ref: (k1, O, R)      conv_b weight (tap, out, in), bf16
    o_ref : (NB, O, T)      output (O<->T transpose already folded in)
    """
    nb, c, t, v = x_ref.shape
    k0 = wa_ref.shape[0]
    k1 = wb_ref.shape[0]
    pad0, pad1 = k0 // 2, k1 // 2

    # (T, T) one-hot shift operators:  (p @ S[s])[:, t] == p[:, t + s], zero-filled
    # outside [0, T).  Built once from 2-D iota (VPU); applying one is an MXU
    # matmul, so the temporal halo needs no concat / unaligned-slice relayouts
    # and no boundary masking.
    rows = jax.lax.broadcasted_iota(jnp.int32, (t, t), 0)
    cols = jax.lax.broadcasted_iota(jnp.int32, (t, t), 1)
    shift_mats = {}
    for s in set(range(-pad0, pad0 + 1)) | set(range(-pad1, pad1 + 1)):
        if s != 0:
            shift_mats[s] = (rows == cols + s).astype(jnp.bfloat16)

    def temporal_conv(h_bf16, w_ref):
        # 'same' temporal conv over lanes: out[o, t] = sum_{j,c} w[j,o,c] * h[c, t+j-pad]
        k = w_ref.shape[0]
        pad = k // 2
        # centre tap initializes the accumulator (no zeros + add)
        acc = jnp.dot(w_ref[pad], h_bf16, preferred_element_type=jnp.float32)
        for j in range(k):
            if j == pad:
                continue
            p = jnp.dot(w_ref[j], h_bf16, preferred_element_type=jnp.float32)
            acc = acc + jnp.dot(p.astype(jnp.bfloat16), shift_mats[j - pad],
                                preferred_element_type=jnp.float32)
        return acc

    # Whole (small) batch statically unrolled inside ONE grid step.
    for n in range(nb):
        xn = x_ref[n].astype(jnp.float32)                    # (C, T, V)
        xa = jnp.mean(xn, axis=2)                            # avgpool over V   -> (C, T)
        g = jnp.mean(xa, axis=1, keepdims=True)              # globalpool (T,V) -> (C, 1)

        # conv_g (1x1) on the globally pooled vector, broadcast-add over T lanes.
        gp = jnp.dot(wg_ref[...], g.astype(jnp.bfloat16),
                     preferred_element_type=jnp.float32) + bg_ref[...]   # (C, 1)
        h = (xa + gp).astype(jnp.bfloat16)                   # (C, T)

        # conv_a (temporal, 'same') fused with inference BN + ReLU.
        ya = temporal_conv(h, wa_ref)                        # (R, T)
        y = jnp.maximum(ya * sa_ref[...] + ta_ref[...], 0.0).astype(jnp.bfloat16)

        # conv_b (temporal, 'same', bias-free), then + 1.
        yb = temporal_conv(y, wb_ref)                        # (O, T)
        o_ref[n] = (yb + 1.0).astype(o_ref.dtype)


def _default_batch_splits(n_batch):
    """2-way 'parallel' batch split only where a second TensorCore exists
    (v7x, megacore v4/v5p); one fused grid step on single-TC v5e/v6e."""
    if n_batch < 2 or n_batch % 2 != 0:
        return 1
    try:
        kind = jax.devices()[0].device_kind.lower().replace(" ", "")
    except Exception:
        return 1
    return 2 if any(tag in kind for tag in ("v7", "v4", "v5p")) else 1


def route_func_mlp_forward(x_nchw, params, *, batch_splits=None):
    """RouteFuncMLP forward.  x_nchw: (N, C_in, T, V) -> (N, out_channels, T, 1)."""
    n, c, t, v = x_nchw.shape
    k0, r, _ = params['wa'].shape
    k1, o_ch, _ = params['wb'].shape
    if (k0 % 2 != 1) or (k1 % 2 != 1):
        # PyTorch's padding=(k//2, 0) only yields a same-length output for odd k.
        raise ValueError("temporal kernel sizes must be odd")

    if batch_splits is None:
        batch_splits = _default_batch_splits(n)
    if n % batch_splits != 0:
        raise ValueError("batch must divide evenly into batch_splits")
    nb = n // batch_splits

    flops = 2 * n * (c * c
                     + t * (k0 * c * r + (k0 - 1) * t * r)
                     + t * (k1 * r * o_ch + (k1 - 1) * t * o_ch))
    bytes_accessed = (4 * n * c * t * v + 4 * n * o_ch * t
                      + 2 * (c * c + k0 * r * c + k1 * o_ch * r)
                      + 4 * (c + 2 * r))

    out = pl.pallas_call(
        _route_func_kernel,
        out_shape=jax.ShapeDtypeStruct((n, o_ch, t), jnp.float32),
        grid_spec=pltpu.PrefetchScalarGridSpec(
            num_scalar_prefetch=0,
            grid=(batch_splits,),
            in_specs=[
                pl.BlockSpec((nb, c, t, v), lambda i: (i, 0, 0, 0)),   # native NCHW block
                pl.BlockSpec((c, c), lambda i: (0, 0)),
                pl.BlockSpec((c, 1), lambda i: (0, 0)),
                pl.BlockSpec((k0, r, c), lambda i: (0, 0, 0)),
                pl.BlockSpec((r, 1), lambda i: (0, 0)),
                pl.BlockSpec((r, 1), lambda i: (0, 0)),
                pl.BlockSpec((k1, o_ch, r), lambda i: (0, 0, 0)),
            ],
            out_specs=pl.BlockSpec((nb, o_ch, t), lambda i: (i, 0, 0)),
        ),
        compiler_params=pltpu.CompilerParams(
            dimension_semantics=("parallel",)),
        cost_estimate=pl.CostEstimate(flops=int(flops), transcendentals=0,
                                      bytes_accessed=int(bytes_accessed)),
    )(x_nchw, params['wg'], params['bg'], params['wa'],
      params['bn_scale'], params['bn_shift'], params['wb'])

    # Only the PyTorch trailing width-1 spatial axis remains for the wrapper;
    # the O<->T transpose is already done inside the kernel.
    return out[:, :, :, None]


# ----------------------------------------------------------------------------
# Pure-JAX reference (same math / same param convention, f32 activations)
# ----------------------------------------------------------------------------
def route_func_mlp_ref(x_nchw, params):
    x = x_nchw.astype(jnp.float32)                            # (N, C, T, V)
    t = x.shape[2]
    xa = jnp.mean(x, axis=3)                                  # (N, C, T)
    g = jnp.mean(xa, axis=2, keepdims=True)                   # (N, C, 1)
    wg = params['wg'].astype(jnp.float32)
    gp = jnp.einsum('dc,nco->ndo', wg, g) + params['bg'][None]
    h = xa + gp                                               # (N, C, T)

    wa = params['wa'].astype(jnp.float32)                     # (k0, R, C)
    k0 = wa.shape[0]
    pad0 = k0 // 2
    hp = jnp.pad(h, ((0, 0), (0, 0), (pad0, pad0)))
    acc = sum(jnp.einsum('rc,nct->nrt', wa[j], hp[:, :, j:j + t]) for j in range(k0))
    y = jnp.maximum(acc * params['bn_scale'][None] + params['bn_shift'][None], 0.0)

    wb = params['wb'].astype(jnp.float32)                     # (k1, O, R)
    k1 = wb.shape[0]
    pad1 = k1 // 2
    yp = jnp.pad(y, ((0, 0), (0, 0), (pad1, pad1)))
    accb = sum(jnp.einsum('or,nrt->not', wb[j], yp[:, :, j:j + t]) for j in range(k1))
    return (accb + 1.0)[:, :, :, None]                        # (N, O, T, 1)


# ----------------------------------------------------------------------------
# Deterministic synthetic parameters (shapes follow the PyTorch __init__)
# ----------------------------------------------------------------------------
class _KeyGen:
    def __init__(self, seed):
        self._key = jax.random.PRNGKey(seed)

    def __call__(self):
        self._key, sub = jax.random.split(self._key)
        return sub


def make_params(c_in, out_channels, ratio, kernels, seed=1, bn_eps=1e-5):
    kg = _KeyGen(seed)
    r = int(c_in // ratio)
    k0, k1 = kernels
    # Conv weights kept in native torch (out, in) orientation, one slab per
    # temporal tap, stored bf16 (MXU-native); biases / BN affine stay f32.
    wg = (0.1 * jax.random.normal(kg(), (c_in, c_in), jnp.float32)).astype(jnp.bfloat16)
    bg = 0.05 * jax.random.normal(kg(), (c_in, 1), jnp.float32)
    wa = (0.1 * jax.random.normal(kg(), (k0, r, c_in), jnp.float32)).astype(jnp.bfloat16)
    ba = 0.05 * jax.random.normal(kg(), (r, 1), jnp.float32)        # conv_a bias
    # Inference-mode BatchNorm fold.  Here running_mean=0 / running_var=1 (fresh
    # module); with a real checkpoint use the actual running stats:
    #   scale = gamma / sqrt(running_var + eps);  shift = beta + (bias - running_mean) * scale
    gamma = (1.0 + 0.01 * jnp.arange(r, dtype=jnp.float32)).reshape(r, 1)
    beta = (0.005 * jnp.arange(r, dtype=jnp.float32)).reshape(r, 1)
    running_mean = jnp.zeros((r, 1), jnp.float32)
    running_var = jnp.ones((r, 1), jnp.float32)
    scale = gamma / jnp.sqrt(running_var + bn_eps)
    shift = beta + (ba - running_mean) * scale
    # PyTorch zero-inits conv_b's weight (output would be identically 1); use
    # nonzero synthetic weights here to exercise the compute path.
    wb = (0.1 * jax.random.normal(kg(), (k1, out_channels, r), jnp.float32)).astype(jnp.bfloat16)
    return {'wg': wg, 'bg': bg, 'wa': wa,
            'bn_scale': scale, 'bn_shift': shift, 'wb': wb}


# ----------------------------------------------------------------------------
if __name__ == "__main__":
    N, C_IN, T, V = 2, 32, 16, 8
    OUT_CH, RATIO, KERNELS = 32, 4, (3, 3)

    kx = jax.random.PRNGKey(0)
    x = jax.random.normal(kx, (N, C_IN, T, V), dtype=jnp.float32)     # NCHW like PyTorch
    params = make_params(C_IN, OUT_CH, RATIO, KERNELS, seed=1)

    fwd = jax.jit(route_func_mlp_forward)
    y = fwd(x, params)
    jax.block_until_ready(y)

    assert y.shape == (N, OUT_CH, T, 1), y.shape
    assert bool(jnp.all(jnp.isfinite(y)))
    y_ref = route_func_mlp_ref(x, params)
    max_err = float(jnp.max(jnp.abs(y - y_ref)))
    # bf16 MXU operands with f32 accumulation -> relaxed tolerance vs f32 ref.
    assert bool(jnp.allclose(y, y_ref, rtol=2e-2, atol=2e-2)), max_err
    print("KERNEL_OK")
</pallas_src>

<mosaic_0001>
module attributes {stable_mosaic.version = 11 : i64} {
  func.func @_route_func_kernel(%arg0: i32, %arg1: memref<2x32x16x8xf32, #tpu.memory_space<vmem>>, %arg2: memref<32x32xbf16, #tpu.memory_space<vmem>>, %arg3: memref<32x1xf32, #tpu.memory_space<vmem>>, %arg4: memref<3x8x32xbf16, #tpu.memory_space<vmem>>, %arg5: memref<8x1xf32, #tpu.memory_space<vmem>>, %arg6: memref<8x1xf32, #tpu.memory_space<vmem>>, %arg7: memref<3x32x8xbf16, #tpu.memory_space<vmem>>, %arg8: memref<2x32x16xf32, #tpu.memory_space<vmem>>) attributes {dimension_semantics = [#tpu.dimension_semantics<parallel>], iteration_bounds = array<i64: 1>, scalar_prefetch = 0 : i64, scratch_operands = 0 : i64, tpu.core_type = #tpu.core_type<tc>, window_params = [{transform_indices = @transform_0, window_bounds = array<i64: 2, 32, 16, 8>}, {pipeline_mode = #tpu.pipeline_mode<synchronous>, transform_indices = @transform_1, window_bounds = array<i64: 32, 32>}, {pipeline_mode = #tpu.pipeline_mode<synchronous>, transform_indices = @transform_2, window_bounds = array<i64: 32, 1>}, {pipeline_mode = #tpu.pipeline_mode<synchronous>, transform_indices = @transform_3, window_bounds = array<i64: 3, 8, 32>}, {pipeline_mode = #tpu.pipeline_mode<synchronous>, transform_indices = @transform_4, window_bounds = array<i64: 8, 1>}, {pipeline_mode = #tpu.pipeline_mode<synchronous>, transform_indices = @transform_5, window_bounds = array<i64: 8, 1>}, {pipeline_mode = #tpu.pipeline_mode<synchronous>, transform_indices = @transform_6, window_bounds = array<i64: 3, 32, 8>}, {transform_indices = @transform_7, window_bounds = array<i64: 2, 32, 16>}]} {
    %0 = tpu.iota {dimensions = array<i32: 0>} : vector<16x16xi32>
    %1 = tpu.iota {dimensions = array<i32: 1>} : vector<16x16xi32>
    %c1_i32 = arith.constant 1 : i32
    %2 = vector.broadcast %c1_i32 : i32 to vector<16x16xi32>
    %3 = arith.addi %1, %2 : vector<16x16xi32>
    %4 = arith.cmpi eq, %0, %3 : vector<16x16xi32>
    %5 = arith.extui %4 : vector<16x16xi1> to vector<16x16xi32>
    %6 = arith.sitofp %5 : vector<16x16xi32> to vector<16x16xf32>
    %7 = arith.truncf %6 : vector<16x16xf32> to vector<16x16xbf16>
    %c-1_i32 = arith.constant -1 : i32
    %8 = vector.broadcast %c-1_i32 : i32 to vector<16x16xi32>
    %9 = arith.addi %1, %8 : vector<16x16xi32>
    %10 = arith.cmpi eq, %0, %9 : vector<16x16xi32>
    %11 = arith.extui %10 : vector<16x16xi1> to vector<16x16xi32>
    %12 = arith.sitofp %11 : vector<16x16xi32> to vector<16x16xf32>
    %13 = arith.truncf %12 : vector<16x16xf32> to vector<16x16xbf16>
    %c0 = arith.constant 0 : index
    %c0_0 = arith.constant 0 : index
    %c0_1 = arith.constant 0 : index
    %c0_2 = arith.constant 0 : index
    %14 = vector.load %arg1[%c0, %c0_0, %c0_1, %c0_2] : memref<2x32x16x8xf32, #tpu.memory_space<vmem>>, vector<1x32x16x8xf32>
    %15 = vector.shape_cast %14 : vector<1x32x16x8xf32> to vector<32x16x8xf32>
    %cst = arith.constant dense<0.000000e+00> : vector<32x16xf32>
    %16 = vector.multi_reduction <add>, %15, %cst [2] : vector<32x16x8xf32> to vector<32x16xf32>
    %cst_3 = arith.constant 8.000000e+00 : f32
    %17 = vector.broadcast %cst_3 : f32 to vector<32x16xf32>
    %18 = arith.divf %16, %17 : vector<32x16xf32>
    %cst_4 = arith.constant dense<0.000000e+00> : vector<32xf32>
    %19 = vector.multi_reduction <add>, %18, %cst_4 [1] : vector<32x16xf32> to vector<32xf32>
    %20 = vector.shape_cast %19 : vector<32xf32> to vector<32x1xf32>
    %cst_5 = arith.constant 1.600000e+01 : f32
    %21 = vector.broadcast %cst_5 : f32 to vector<32x1xf32>
    %22 = arith.divf %20, %21 : vector<32x1xf32>
    %c0_6 = arith.constant 0 : index
    %c0_7 = arith.constant 0 : index
    %23 = vector.load %arg2[%c0_6, %c0_7] : memref<32x32xbf16, #tpu.memory_space<vmem>>, vector<32x32xbf16>
    %24 = arith.truncf %22 : vector<32x1xf32> to vector<32x1xbf16>
    %cst_8 = arith.constant dense<0.000000e+00> : vector<32x1xf32>
    %25 = tpu.matmul %23, %24, %cst_8 {dimension_numbers = #tpu.dot_dimension_numbers<[1], [0], [0], [1], [0, 0, 1, 1], [], []>} : vector<32x32xbf16>, vector<32x1xbf16>, vector<32x1xf32> -> vector<32x1xf32>
    %c0_9 = arith.constant 0 : index
    %c0_10 = arith.constant 0 : index
    %26 = vector.load %arg3[%c0_9, %c0_10] : memref<32x1xf32, #tpu.memory_space<vmem>>, vector<32x1xf32>
    %27 = arith.addf %25, %26 : vector<32x1xf32>
    %28 = vector.broadcast %27 : vector<32x1xf32> to vector<32x16xf32>
    %29 = arith.addf %18, %28 : vector<32x16xf32>
    %30 = arith.truncf %29 : vector<32x16xf32> to vector<32x16xbf16>
    %c1 = arith.constant 1 : index
    %c0_11 = arith.constant 0 : index
    %c0_12 = arith.constant 0 : index
    %31 = vector.load %arg4[%c1, %c0_11, %c0_12] : memref<3x8x32xbf16, #tpu.memory_space<vmem>>, vector<1x8x32xbf16>
    %32 = vector.shape_cast %31 : vector<1x8x32xbf16> to vector<8x32xbf16>
    %cst_13 = arith.constant dense<0.000000e+00> : vector<8x16xf32>
    %33 = tpu.matmul %32, %30, %cst_13 {dimension_numbers = #tpu.dot_dimension_numbers<[1], [0], [0], [1], [0, 0, 1, 1], [], []>} : vector<8x32xbf16>, vector<32x16xbf16>, vector<8x16xf32> -> vector<8x16xf32>
    %c0_14 = arith.constant 0 : index
    %c0_15 = arith.constant 0 : index
    %c0_16 = arith.constant 0 : index
    %34 = vector.load %arg4[%c0_14, %c0_15, %c0_16] : memref<3x8x32xbf16, #tpu.memory_space<vmem>>, vector<1x8x32xbf16>
    %35 = vector.shape_cast %34 : vector<1x8x32xbf16> to vector<8x32xbf16>
    %cst_17 = arith.constant dense<0.000000e+00> : vector<8x16xf32>
    %36 = tpu.matmul %35, %30, %cst_17 {dimension_numbers = #tpu.dot_dimension_numbers<[1], [0], [0], [1], [0, 0, 1, 1], [], []>} : vector<8x32xbf16>, vector<32x16xbf16>, vector<8x16xf32> -> vector<8x16xf32>
    %37 = arith.truncf %36 : vector<8x16xf32> to vector<8x16xbf16>
    %cst_18 = arith.constant dense<0.000000e+00> : vector<8x16xf32>
    %38 = tpu.matmul %37, %13, %cst_18 {dimension_numbers = #tpu.dot_dimension_numbers<[1], [0], [0], [1], [0, 0, 1, 1], [], []>} : vector<8x16xbf16>, vector<16x16xbf16>, vector<8x16xf32> -> vector<8x16xf32>
    %39 = arith.addf %33, %38 : vector<8x16xf32>
    %c2 = arith.constant 2 : index
    %c0_19 = arith.constant 0 : index
    %c0_20 = arith.constant 0 : index
    %40 = vector.load %arg4[%c2, %c0_19, %c0_20] : memref<3x8x32xbf16, #tpu.memory_space<vmem>>, vector<1x8x32xbf16>
    %41 = vector.shape_cast %40 : vector<1x8x32xbf16> to vector<8x32xbf16>
    %cst_21 = arith.constant dense<0.000000e+00> : vector<8x16xf32>
    %42 = tpu.matmul %41, %30, %cst_21 {dimension_numbers = #tpu.dot_dimension_numbers<[1], [0], [0], [1], [0, 0, 1, 1], [], []>} : vector<8x32xbf16>, vector<32x16xbf16>, vector<8x16xf32> -> vector<8x16xf32>
    %43 = arith.truncf %42 : vector<8x16xf32> to vector<8x16xbf16>
    %cst_22 = arith.constant dense<0.000000e+00> : vector<8x16xf32>
    %44 = tpu.matmul %43, %7, %cst_22 {dimension_numbers = #tpu.dot_dimension_numbers<[1], [0], [0], [1], [0, 0, 1, 1], [], []>} : vector<8x16xbf16>, vector<16x16xbf16>, vector<8x16xf32> -> vector<8x16xf32>
    %45 = arith.addf %39, %44 : vector<8x16xf32>
    %c0_23 = arith.constant 0 : index
    %c0_24 = arith.constant 0 : index
    %46 = vector.load %arg5[%c0_23, %c0_24] : memref<8x1xf32, #tpu.memory_space<vmem>>, vector<8x1xf32>
    %47 = vector.broadcast %46 : vector<8x1xf32> to vector<8x16xf32>
    %48 = arith.mulf %45, %47 : vector<8x16xf32>
    %c0_25 = arith.constant 0 : index
    %c0_26 = arith.constant 0 : index
    %49 = vector.load %arg6[%c0_25, %c0_26] : memref<8x1xf32, #tpu.memory_space<vmem>>, vector<8x1xf32>
    %50 = vector.broadcast %49 : vector<8x1xf32> to vector<8x16xf32>
    %51 = arith.addf %48, %50 : vector<8x16xf32>
    %cst_27 = arith.constant 0.000000e+00 : f32
    %52 = vector.broadcast %cst_27 : f32 to vector<8x16xf32>
    %53 = arith.maximumf %51, %52 : vector<8x16xf32>
    %54 = arith.truncf %53 : vector<8x16xf32> to vector<8x16xbf16>
    %c1_28 = arith.constant 1 : index
    %c0_29 = arith.constant 0 : index
    %c0_30 = arith.constant 0 : index
    %55 = vector.load %arg7[%c1_28, %c0_29, %c0_30] : memref<3x32x8xbf16, #tpu.memory_space<vmem>>, vector<1x32x8xbf16>
    %56 = vector.shape_cast %55 : vector<1x32x8xbf16> to vector<32x8xbf16>
    %cst_31 = arith.constant dense<0.000000e+00> : vector<32x16xf32>
    %57 = tpu.matmul %56, %54, %cst_31 {dimension_numbers = #tpu.dot_dimension_numbers<[1], [0], [0], [1], [0, 0, 1, 1], [], []>} : vector<32x8xbf16>, vector<8x16xbf16>, vector<32x16xf32> -> vector<32x16xf32>
    %c0_32 = arith.constant 0 : index
    %c0_33 = arith.constant 0 : index
    %c0_34 = arith.constant 0 : index
    %58 = vector.load %arg7[%c0_32, %c0_33, %c0_34] : memref<3x32x8xbf16, #tpu.memory_space<vmem>>, vector<1x32x8xbf16>
    %59 = vector.shape_cast %58 : vector<1x32x8xbf16> to vector<32x8xbf16>
    %cst_35 = arith.constant dense<0.000000e+00> : vector<32x16xf32>
    %60 = tpu.matmul %59, %54, %cst_35 {dimension_numbers = #tpu.dot_dimension_numbers<[1], [0], [0], [1], [0, 0, 1, 1], [], []>} : vector<32x8xbf16>, vector<8x16xbf16>, vector<32x16xf32> -> vector<32x16xf32>
    %61 = arith.truncf %60 : vector<32x16xf32> to vector<32x16xbf16>
    %cst_36 = arith.constant dense<0.000000e+00> : vector<32x16xf32>
    %62 = tpu.matmul %61, %13, %cst_36 {dimension_numbers = #tpu.dot_dimension_numbers<[1], [0], [0], [1], [0, 0, 1, 1], [], []>} : vector<32x16xbf16>, vector<16x16xbf16>, vector<32x16xf32> -> vector<32x16xf32>
    %63 = arith.addf %57, %62 : vector<32x16xf32>
    %c2_37 = arith.constant 2 : index
    %c0_38 = arith.constant 0 : index
    %c0_39 = arith.constant 0 : index
    %64 = vector.load %arg7[%c2_37, %c0_38, %c0_39] : memref<3x32x8xbf16, #tpu.memory_space<vmem>>, vector<1x32x8xbf16>
    %65 = vector.shape_cast %64 : vector<1x32x8xbf16> to vector<32x8xbf16>
    %cst_40 = arith.constant dense<0.000000e+00> : vector<32x16xf32>
    %66 = tpu.matmul %65, %54, %cst_40 {dimension_numbers = #tpu.dot_dimension_numbers<[1], [0], [0], [1], [0, 0, 1, 1], [], []>} : vector<32x8xbf16>, vector<8x16xbf16>, vector<32x16xf32> -> vector<32x16xf32>
    %67 = arith.truncf %66 : vector<32x16xf32> to vector<32x16xbf16>
    %cst_41 = arith.constant dense<0.000000e+00> : vector<32x16xf32>
    %68 = tpu.matmul %67, %7, %cst_41 {dimension_numbers = #tpu.dot_dimension_numbers<[1], [0], [0], [1], [0, 0, 1, 1], [], []>} : vector<32x16xbf16>, vector<16x16xbf16>, vector<32x16xf32> -> vector<32x16xf32>
    %69 = arith.addf %63, %68 : vector<32x16xf32>
    %cst_42 = arith.constant 1.000000e+00 : f32
    %70 = vector.broadcast %cst_42 : f32 to vector<32x16xf32>
    %71 = arith.addf %69, %70 : vector<32x16xf32>
    %c0_43 = arith.constant 0 : index
    %c0_44 = arith.constant 0 : index
    %c0_45 = arith.constant 0 : index
    %72 = vector.load %arg8[%c0_43, %c0_44, %c0_45] : memref<2x32x16xf32, #tpu.memory_space<vmem>>, vector<1x32x16xf32>
    %73 = vector.shape_cast %72 : vector<1x32x16xf32> to vector<32x16xf32>
    %74 = vector.shape_cast %71 : vector<32x16xf32> to vector<1x32x16xf32>
    tpu.vector_store %arg8[%c0_43, %c0_44, %c0_45], %74 {strides = array<i32>} : memref<2x32x16xf32, #tpu.memory_space<vmem>>, vector<1x32x16xf32>,
    %c1_46 = arith.constant 1 : index
    %c0_47 = arith.constant 0 : index
    %c0_48 = arith.constant 0 : index
    %c0_49 = arith.constant 0 : index
    %75 = vector.load %arg1[%c1_46, %c0_47, %c0_48, %c0_49] : memref<2x32x16x8xf32, #tpu.memory_space<vmem>>, vector<1x32x16x8xf32>
    %76 = vector.shape_cast %75 : vector<1x32x16x8xf32> to vector<32x16x8xf32>
    %cst_50 = arith.constant dense<0.000000e+00> : vector<32x16xf32>
    %77 = vector.multi_reduction <add>, %76, %cst_50 [2] : vector<32x16x8xf32> to vector<32x16xf32>
    %cst_51 = arith.constant 8.000000e+00 : f32
    %78 = vector.broadcast %cst_51 : f32 to vector<32x16xf32>
    %79 = arith.divf %77, %78 : vector<32x16xf32>
    %cst_52 = arith.constant dense<0.000000e+00> : vector<32xf32>
    %80 = vector.multi_reduction <add>, %79, %cst_52 [1] : vector<32x16xf32> to vector<32xf32>
    %81 = vector.shape_cast %80 : vector<32xf32> to vector<32x1xf32>
    %cst_53 = arith.constant 1.600000e+01 : f32
    %82 = vector.broadcast %cst_53 : f32 to vector<32x1xf32>
    %83 = arith.divf %81, %82 : vector<32x1xf32>
    %c0_54 = arith.constant 0 : index
    %c0_55 = arith.constant 0 : index
    %84 = vector.load %arg2[%c0_54, %c0_55] : memref<32x32xbf16, #tpu.memory_space<vmem>>, vector<32x32xbf16>
    %85 = arith.truncf %83 : vector<32x1xf32> to vector<32x1xbf16>
    %cst_56 = arith.constant dense<0.000000e+00> : vector<32x1xf32>
    %86 = tpu.matmul %84, %85, %cst_56 {dimension_numbers = #tpu.dot_dimension_numbers<[1], [0], [0], [1], [0, 0, 1, 1], [], []>} : vector<32x32xbf16>, vector<32x1xbf16>, vector<32x1xf32> -> vector<32x1xf32>
    %c0_57 = arith.constant 0 : index
    %c0_58 = arith.constant 0 : index
    %87 = vector.load %arg3[%c0_57, %c0_58] : memref<32x1xf32, #tpu.memory_space<vmem>>, vector<32x1xf32>
    %88 = arith.addf %86, %87 : vector<32x1xf32>
    %89 = vector.broadcast %88 : vector<32x1xf32> to vector<32x16xf32>
    %90 = arith.addf %79, %89 : vector<32x16xf32>
    %91 = arith.truncf %90 : vector<32x16xf32> to vector<32x16xbf16>
    %c1_59 = arith.constant 1 : index
    %c0_60 = arith.constant 0 : index
    %c0_61 = arith.constant 0 : index
    %92 = vector.load %arg4[%c1_59, %c0_60, %c0_61] : memref<3x8x32xbf16, #tpu.memory_space<vmem>>, vector<1x8x32xbf16>
    %93 = vector.shape_cast %92 : vector<1x8x32xbf16> to vector<8x32xbf16>
    %cst_62 = arith.constant dense<0.000000e+00> : vector<8x16xf32>
    %94 = tpu.matmul %93, %91, %cst_62 {dimension_numbers = #tpu.dot_dimension_numbers<[1], [0], [0], [1], [0, 0, 1, 1], [], []>} : vector<8x32xbf16>, vector<32x16xbf16>, vector<8x16xf32> -> vector<8x16xf32>
    %c0_63 = arith.constant 0 : index
    %c0_64 = arith.constant 0 : index
    %c0_65 = arith.constant 0 : index
    %95 = vector.load %arg4[%c0_63, %c0_64, %c0_65] : memref<3x8x32xbf16, #tpu.memory_space<vmem>>, vector<1x8x32xbf16>
    %96 = vector.shape_cast %95 : vector<1x8x32xbf16> to vector<8x32xbf16>
    %cst_66 = arith.constant dense<0.000000e+00> : vector<8x16xf32>
    %97 = tpu.matmul %96, %91, %cst_66 {dimension_numbers = #tpu.dot_dimension_numbers<[1], [0], [0], [1], [0, 0, 1, 1], [], []>} : vector<8x32xbf16>, vector<32x16xbf16>, vector<8x16xf32> -> vector<8x16xf32>
    %98 = arith.truncf %97 : vector<8x16xf32> to vector<8x16xbf16>
    %cst_67 = arith.constant dense<0.000000e+00> : vector<8x16xf32>
    %99 = tpu.matmul %98, %13, %cst_67 {dimension_numbers = #tpu.dot_dimension_numbers<[1], [0], [0], [1], [0, 0, 1, 1], [], []>} : vector<8x16xbf16>, vector<16x16xbf16>, vector<8x16xf32> -> vector<8x16xf32>
    %100 = arith.addf %94, %99 : vector<8x16xf32>
    %c2_68 = arith.constant 2 : index
    %c0_69 = arith.constant 0 : index
    %c0_70 = arith.constant 0 : index
    %101 = vector.load %arg4[%c2_68, %c0_69, %c0_70] : memref<3x8x32xbf16, #tpu.memory_space<vmem>>, vector<1x8x32xbf16>
    %102 = vector.shape_cast %101 : vector<1x8x32xbf16> to vector<8x32xbf16>
    %cst_71 = arith.constant dense<0.000000e+00> : vector<8x16xf32>
    %103 = tpu.matmul %102, %91, %cst_71 {dimension_numbers = #tpu.dot_dimension_numbers<[1], [0], [0], [1], [0, 0, 1, 1], [], []>} : vector<8x32xbf16>, vector<32x16xbf16>, vector<8x16xf32> -> vector<8x16xf32>
    %104 = arith.truncf %103 : vector<8x16xf32> to vector<8x16xbf16>
    %cst_72 = arith.constant dense<0.000000e+00> : vector<8x16xf32>
    %105 = tpu.matmul %104, %7, %cst_72 {dimension_numbers = #tpu.dot_dimension_numbers<[1], [0], [0], [1], [0, 0, 1, 1], [], []>} : vector<8x16xbf16>, vector<16x16xbf16>, vector<8x16xf32> -> vector<8x16xf32>
    %106 = arith.addf %100, %105 : vector<8x16xf32>
    %c0_73 = arith.constant 0 : index
    %c0_74 = arith.constant 0 : index
    %107 = vector.load %arg5[%c0_73, %c0_74] : memref<8x1xf32, #tpu.memory_space<vmem>>, vector<8x1xf32>
    %108 = vector.broadcast %107 : vector<8x1xf32> to vector<8x16xf32>
    %109 = arith.mulf %106, %108 : vector<8x16xf32>
    %c0_75 = arith.constant 0 : index
    %c0_76 = arith.constant 0 : index
    %110 = vector.load %arg6[%c0_75, %c0_76] : memref<8x1xf32, #tpu.memory_space<vmem>>, vector<8x1xf32>
    %111 = vector.broadcast %110 : vector<8x1xf32> to vector<8x16xf32>
    %112 = arith.addf %109, %111 : vector<8x16xf32>
    %cst_77 = arith.constant 0.000000e+00 : f32
    %113 = vector.broadcast %cst_77 : f32 to vector<8x16xf32>
    %114 = arith.maximumf %112, %113 : vector<8x16xf32>
    %115 = arith.truncf %114 : vector<8x16xf32> to vector<8x16xbf16>
    %c1_78 = arith.constant 1 : index
    %c0_79 = arith.constant 0 : index
    %c0_80 = arith.constant 0 : index
    %116 = vector.load %arg7[%c1_78, %c0_79, %c0_80] : memref<3x32x8xbf16, #tpu.memory_space<vmem>>, vector<1x32x8xbf16>
    %117 = vector.shape_cast %116 : vector<1x32x8xbf16> to vector<32x8xbf16>
    %cst_81 = arith.constant dense<0.000000e+00> : vector<32x16xf32>
    %118 = tpu.matmul %117, %115, %cst_81 {dimension_numbers = #tpu.dot_dimension_numbers<[1], [0], [0], [1], [0, 0, 1, 1], [], []>} : vector<32x8xbf16>, vector<8x16xbf16>, vector<32x16xf32> -> vector<32x16xf32>
    %c0_82 = arith.constant 0 : index
    %c0_83 = arith.constant 0 : index
    %c0_84 = arith.constant 0 : index
    %119 = vector.load %arg7[%c0_82, %c0_83, %c0_84] : memref<3x32x8xbf16, #tpu.memory_space<vmem>>, vector<1x32x8xbf16>
    %120 = vector.shape_cast %119 : vector<1x32x8xbf16> to vector<32x8xbf16>
    %cst_85 = arith.constant dense<0.000000e+00> : vector<32x16xf32>
    %121 = tpu.matmul %120, %115, %cst_85 {dimension_numbers = #tpu.dot_dimension_numbers<[1], [0], [0], [1], [0, 0, 1, 1], [], []>} : vector<32x8xbf16>, vector<8x16xbf16>, vector<32x16xf32> -> vector<32x16xf32>
    %122 = arith.truncf %121 : vector<32x16xf32> to vector<32x16xbf16>
    %cst_86 = arith.constant dense<0.000000e+00> : vector<32x16xf32>
    %123 = tpu.matmul %122, %13, %cst_86 {dimension_numbers = #tpu.dot_dimension_numbers<[1], [0], [0], [1], [0, 0, 1, 1], [], []>} : vector<32x16xbf16>, vector<16x16xbf16>, vector<32x16xf32> -> vector<32x16xf32>
    %124 = arith.addf %118, %123 : vector<32x16xf32>
    %c2_87 = arith.constant 2 : index
    %c0_88 = arith.constant 0 : index
    %c0_89 = arith.constant 0 : index
    %125 = vector.load %arg7[%c2_87, %c0_88, %c0_89] : memref<3x32x8xbf16, #tpu.memory_space<vmem>>, vector<1x32x8xbf16>
    %126 = vector.shape_cast %125 : vector<1x32x8xbf16> to vector<32x8xbf16>
    %cst_90 = arith.constant dense<0.000000e+00> : vector<32x16xf32>
    %127 = tpu.matmul %126, %115, %cst_90 {dimension_numbers = #tpu.dot_dimension_numbers<[1], [0], [0], [1], [0, 0, 1, 1], [], []>} : vector<32x8xbf16>, vector<8x16xbf16>, vector<32x16xf32> -> vector<32x16xf32>
    %128 = arith.truncf %127 : vector<32x16xf32> to vector<32x16xbf16>
    %cst_91 = arith.constant dense<0.000000e+00> : vector<32x16xf32>
    %129 = tpu.matmul %128, %7, %cst_91 {dimension_numbers = #tpu.dot_dimension_numbers<[1], [0], [0], [1], [0, 0, 1, 1], [], []>} : vector<32x16xbf16>, vector<16x16xbf16>, vector<32x16xf32> -> vector<32x16xf32>
    %130 = arith.addf %124, %129 : vector<32x16xf32>
    %cst_92 = arith.constant 1.000000e+00 : f32
    %131 = vector.broadcast %cst_92 : f32 to vector<32x16xf32>
    %132 = arith.addf %130, %131 : vector<32x16xf32>
    %c1_93 = arith.constant 1 : index
    %c0_94 = arith.constant 0 : index
    %c0_95 = arith.constant 0 : index
    %133 = vector.load %arg8[%c1_93, %c0_94, %c0_95] : memref<2x32x16xf32, #tpu.memory_space<vmem>>, vector<1x32x16xf32>
    %134 = vector.shape_cast %133 : vector<1x32x16xf32> to vector<32x16xf32>
    %135 = vector.shape_cast %132 : vector<32x16xf32> to vector<1x32x16xf32>
    tpu.vector_store %arg8[%c1_93, %c0_94, %c0_95], %135 {strides = array<i32>} : memref<2x32x16xf32, #tpu.memory_space<vmem>>, vector<1x32x16xf32>,
    return
  }
  func.func @transform_0(%arg0: i32) -> (i32, i32, i32, i32) {
    %c0_i32 = arith.constant 0 : i32
    %c0_i32_0 = arith.constant 0 : i32
    %c0_i32_1 = arith.constant 0 : i32
    %c0_i32_2 = arith.constant 0 : i32
    return %arg0, %c0_i32, %c0_i32_0, %c0_i32_1 : i32, i32, i32, i32
  }
  func.func @transform_1(%arg0: i32) -> (i32, i32) {
    %c0_i32 = arith.constant 0 : i32
    %c0_i32_0 = arith.constant 0 : i32
    %c0_i32_1 = arith.constant 0 : i32
    return %c0_i32, %c0_i32_0 : i32, i32
  }
  func.func @transform_2(%arg0: i32) -> (i32, i32) {
    %c0_i32 = arith.constant 0 : i32
    %c0_i32_0 = arith.constant 0 : i32
    %c0_i32_1 = arith.constant 0 : i32
    return %c0_i32, %c0_i32_0 : i32, i32
  }
  func.func @transform_3(%arg0: i32) -> (i32, i32, i32) {
    %c0_i32 = arith.constant 0 : i32
    %c0_i32_0 = arith.constant 0 : i32
    %c0_i32_1 = arith.constant 0 : i32
    %c0_i32_2 = arith.constant 0 : i32
    return %c0_i32, %c0_i32_0, %c0_i32_1 : i32, i32, i32
  }
  func.func @transform_4(%arg0: i32) -> (i32, i32) {
    %c0_i32 = arith.constant 0 : i32
    %c0_i32_0 = arith.constant 0 : i32
    %c0_i32_1 = arith.constant 0 : i32
    return %c0_i32, %c0_i32_0 : i32, i32
  }
  func.func @transform_5(%arg0: i32) -> (i32, i32) {
    %c0_i32 = arith.constant 0 : i32
    %c0_i32_0 = arith.constant 0 : i32
    %c0_i32_1 = arith.constant 0 : i32
    return %c0_i32, %c0_i32_0 : i32, i32
  }
  func.func @transform_6(%arg0: i32) -> (i32, i32, i32) {
    %c0_i32 = arith.constant 0 : i32
    %c0_i32_0 = arith.constant 0 : i32
    %c0_i32_1 = arith.constant 0 : i32
    %c0_i32_2 = arith.constant 0 : i32
    return %c0_i32, %c0_i32_0, %c0_i32_1 : i32, i32, i32
  }
  func.func @transform_7(%arg0: i32) -> (i32, i32, i32) {
    %c0_i32 = arith.constant 0 : i32
    %c0_i32_0 = arith.constant 0 : i32
    %c0_i32_1 = arith.constant 0 : i32
    return %arg0, %c0_i32, %c0_i32_0 : i32, i32, i32
  }
}

</mosaic_0001>

<llo_original>
// kernel: route_func_mlp_forward.1
$region0: #{route_func_mlp_forward.1}
  #allocation0 [shape = 'u32[]', space=smem, size = 0x4, offset = 0x4, fixed_abs, tag = 'smem constant byte address 0x4 - core index']
  #allocation1 [shape = 'u32[144,128]{1,0:T(1,128)}', space=vmem, size = 0x12000, scoped, tag = 'internal scratch']
  %s0 = inlined_call_operand.vmem [shape: f32[2,32,16,8], index: 0, kind: input, shape index: {}]
  %s1 = inlined_call_operand.vmem [shape: bf16[32,32], index: 1, kind: input, shape index: {}]
  %s2 = inlined_call_operand.vmem [shape: f32[32,1], index: 2, kind: input, shape index: {}]
  %s3 = inlined_call_operand.vmem [shape: bf16[3,8,32], index: 3, kind: input, shape index: {}]
  %s4 = inlined_call_operand.vmem [shape: f32[8,1], index: 4, kind: input, shape index: {}]
  %s5 = inlined_call_operand.vmem [shape: f32[8,1], index: 5, kind: input, shape index: {}]
  %s6 = inlined_call_operand.vmem [shape: bf16[3,32,8], index: 6, kind: input, shape index: {}]
  %s7 = inlined_call_operand.vmem [shape: f32[2,32,16], index: 7, kind: output, shape index: {}]
  %s8 = sld [smem:[#allocation0]]
  $region38: #{route_func_mlp_forward.1} parent=0
    _
  %s10 = ssub.s32 1, %s8
  %s11 = scalar_select 0, %s10, %s8
  // Predicated region
  $region2: #{route_func_mlp_forward.1} parent=0 // pred_check
    _
  $region3: #{route_func_mlp_forward.1} parent=0 // pred_check_branch
    %13 = sbr.rel (0) target = $region5
  $region4: #{route_func_mlp_forward.1} parent=0 // pred_region
    _
  $region5: #{route_func_mlp_forward.1} parent=0 // pred_fallthru
    _
  // Predicated region
  $region6: #{route_func_mlp_forward.1} parent=0 // pred_check
    _
  $region7: #{route_func_mlp_forward.1} parent=0 // pred_check_branch
    %15 = sbr.rel (0) target = $region9
  $region8: #{route_func_mlp_forward.1} parent=0 // pred_region
    _
  $region9: #{route_func_mlp_forward.1} parent=0 // pred_fallthru
    _
  // Predicated region
  $region10: #{route_func_mlp_forward.1} parent=0 // pred_check
    _
  $region11: #{route_func_mlp_forward.1} parent=0 // pred_check_branch
    %17 = sbr.rel (0) target = $region13
  $region12: #{route_func_mlp_forward.1} parent=0 // pred_region
    _
  $region13: #{route_func_mlp_forward.1} parent=0 // pred_fallthru
    _
  // Predicated region
  $region14: #{route_func_mlp_forward.1} parent=0 // pred_check
    _
  $region15: #{route_func_mlp_forward.1} parent=0 // pred_check_branch
    %19 = sbr.rel (0) target = $region17
  $region16: #{route_func_mlp_forward.1} parent=0 // pred_region
    _
  $region17: #{route_func_mlp_forward.1} parent=0 // pred_fallthru
    _
  // Predicated region
  $region18: #{route_func_mlp_forward.1} parent=0 // pred_check
    _
  $region19: #{route_func_mlp_forward.1} parent=0 // pred_check_branch
    %21 = sbr.rel (0) target = $region21
  $region20: #{route_func_mlp_forward.1} parent=0 // pred_region
    _
  $region21: #{route_func_mlp_forward.1} parent=0 // pred_fallthru
    _
  // Predicated region
  $region22: #{route_func_mlp_forward.1} parent=0 // pred_check
    _
  $region23: #{route_func_mlp_forward.1} parent=0 // pred_check_branch
    %23 = sbr.rel (0) target = $region25
  $region24: #{route_func_mlp_forward.1} parent=0 // pred_region
    _
  $region25: #{route_func_mlp_forward.1} parent=0 // pred_fallthru
    _
  // Predicated region
  $region26: #{route_func_mlp_forward.1} parent=0 // pred_check
    _
  $region27: #{route_func_mlp_forward.1} parent=0 // pred_check_branch
    %25 = sbr.rel (0) target = $region29
  $region28: #{route_func_mlp_forward.1} parent=0 // pred_region
    _
  $region29: #{route_func_mlp_forward.1} parent=0 // pred_fallthru
    _
  %v27 = vlaneseq
  %v28 = vshrl.u32 %v27, 7
  %v29 = vadd.s32 %v28, 8
  %v30 = vlaneseq
  %v31 = vand.u32 %v30, 127
  %v32 = vadd.s32 %v31, 1
  %vm33 = vcmp.eq.s32.totalorder %v28, %v32
  %vm34 = vcmp.eq.s32.totalorder %v29, %v32
  %v35 = vsel %vm33, 1, 0
  %v36 = vsel %vm34, 1, 0
  %v37 = vcvt.s32.f32 %v35
  %v38 = vcvt.s32.f32 %v36
  %v39 = vpack.c.bf16 %v38, %v37
  %v40 = vadd.s32 %v31, 4294967295
  %vm41 = vcmp.eq.s32.totalorder %v28, %v40
  %vm42 = vcmp.eq.s32.totalorder %v29, %v40
  %v43 = vsel %vm41, 1, 0
  %v44 = vsel %vm42, 1, 0
  %v45 = vcvt.s32.f32 %v43
  %v46 = vcvt.s32.f32 %v44
  %v47 = vpack.c.bf16 %v46, %v45
  %v48 = vld [vmem:[%s0] sm:$0xff]
  %v49 = vld [vmem:[%s0 + $0x8] sm:$0xff]
  %v50 = vld [vmem:[%s0 + $0x10] sm:$0xff]
  %v51 = vld [vmem:[%s0 + $0x18] sm:$0xff]
  %v52 = vld [vmem:[%s0 + $0x20] sm:$0xff]
  %v53 = vld [vmem:[%s0 + $0x28] sm:$0xff]
  %v54 = vld [vmem:[%s0 + $0x30] sm:$0xff]
  %v55 = vld [vmem:[%s0 + $0x38] sm:$0xff]
  %v56 = vld [vmem:[%s0 + $0x40] sm:$0xff]
  %v57 = vld [vmem:[%s0 + $0x48] sm:$0xff]
  %v58 = vld [vmem:[%s0 + $0x50] sm:$0xff]
  %v59 = vld [vmem:[%s0 + $0x58] sm:$0xff]
  %v60 = vld [vmem:[%s0 + $0x60] sm:$0xff]
  %v61 = vld [vmem:[%s0 + $0x68] sm:$0xff]
  %v62 = vld [vmem:[%s0 + $0x70] sm:$0xff]
  %v63 = vld [vmem:[%s0 + $0x78] sm:$0xff]
  %v64 = vld [vmem:[%s0 + $0x80] sm:$0xff]
  %v65 = vld [vmem:[%s0 + $0x88] sm:$0xff]
  %v66 = vld [vmem:[%s0 + $0x90] sm:$0xff]
  %v67 = vld [vmem:[%s0 + $0x98] sm:$0xff]
  %v68 = vld [vmem:[%s0 + $0xa0] sm:$0xff]
  %v69 = vld [vmem:[%s0 + $0xa8] sm:$0xff]
  %v70 = vld [vmem:[%s0 + $0xb0] sm:$0xff]
  %v71 = vld [vmem:[%s0 + $0xb8] sm:$0xff]
  %v72 = vld [vmem:[%s0 + $0xc0] sm:$0xff]
  %v73 = vld [vmem:[%s0 + $0xc8] sm:$0xff]
  %v74 = vld [vmem:[%s0 + $0xd0] sm:$0xff]
  %v75 = vld [vmem:[%s0 + $0xd8] sm:$0xff]
  %v76 = vld [vmem:[%s0 + $0xe0] sm:$0xff]
  %v77 = vld [vmem:[%s0 + $0xe8] sm:$0xff]
  %v78 = vld [vmem:[%s0 + $0xf0] sm:$0xff]
  %v79 = vld [vmem:[%s0 + $0xf8] sm:$0xff]
  %v80 = vld [vmem:[%s0 + $0x100] sm:$0xff]
  %v81 = vld [vmem:[%s0 + $0x108] sm:$0xff]
  %v82 = vld [vmem:[%s0 + $0x110] sm:$0xff]
  %v83 = vld [vmem:[%s0 + $0x118] sm:$0xff]
  %v84 = vld [vmem:[%s0 + $0x120] sm:$0xff]
  %v85 = vld [vmem:[%s0 + $0x128] sm:$0xff]
  %v86 = vld [vmem:[%s0 + $0x130] sm:$0xff]
  %v87 = vld [vmem:[%s0 + $0x138] sm:$0xff]
  %v88 = vld [vmem:[%s0 + $0x140] sm:$0xff]
  %v89 = vld [vmem:[%s0 + $0x148] sm:$0xff]
  %v90 = vld [vmem:[%s0 + $0x150] sm:$0xff]
  %v91 = vld [vmem:[%s0 + $0x158] sm:$0xff]
  %v92 = vld [vmem:[%s0 + $0x160] sm:$0xff]
  %v93 = vld [vmem:[%s0 + $0x168] sm:$0xff]
  %v94 = vld [vmem:[%s0 + $0x170] sm:$0xff]
  %v95 = vld [vmem:[%s0 + $0x178] sm:$0xff]
  %v96 = vld [vmem:[%s0 + $0x180] sm:$0xff]
  %v97 = vld [vmem:[%s0 + $0x188] sm:$0xff]
  %v98 = vld [vmem:[%s0 + $0x190] sm:$0xff]
  %v99 = vld [vmem:[%s0 + $0x198] sm:$0xff]
  %v100 = vld [vmem:[%s0 + $0x1a0] sm:$0xff]
  %v101 = vld [vmem:[%s0 + $0x1a8] sm:$0xff]
  %v102 = vld [vmem:[%s0 + $0x1b0] sm:$0xff]
  %v103 = vld [vmem:[%s0 + $0x1b8] sm:$0xff]
  %v104 = vld [vmem:[%s0 + $0x1c0] sm:$0xff]
  %v105 = vld [vmem:[%s0 + $0x1c8] sm:$0xff]
  %v106 = vld [vmem:[%s0 + $0x1d0] sm:$0xff]
  %v107 = vld [vmem:[%s0 + $0x1d8] sm:$0xff]
  %v108 = vld [vmem:[%s0 + $0x1e0] sm:$0xff]
  %v109 = vld [vmem:[%s0 + $0x1e8] sm:$0xff]
  %v110 = vld [vmem:[%s0 + $0x1f0] sm:$0xff]
  %v111 = vld [vmem:[%s0 + $0x1f8] sm:$0xff]
  %vm112 = vcmask 64512
  %v113 = vsel %vm112, %v48, 0.0
  %114 = vadd.xlane.f32.xlu0 %v113
  %v115 = vpop.xlane.xlu0 %114
  %v116 = vsel %vm112, %v49, 0.0
  %117 = vadd.xlane.f32.xlu0 %v116
  %v118 = vpop.xlane.xlu0 %117
  %v119 = vsel %vm112, %v50, 0.0
  %120 = vadd.xlane.f32.xlu0 %v119
  %v121 = vpop.xlane.xlu0 %120
  %v122 = vsel %vm112, %v51, 0.0
  %123 = vadd.xlane.f32.xlu0 %v122
  %v124 = vpop.xlane.xlu0 %123
  %v125 = vsel %vm112, %v52, 0.0
  %126 = vadd.xlane.f32.xlu0 %v125
  %v127 = vpop.xlane.xlu0 %126
  %v128 = vsel %vm112, %v53, 0.0
  %129 = vadd.xlane.f32.xlu0 %v128
  %v130 = vpop.xlane.xlu0 %129
  %v131 = vsel %vm112, %v54, 0.0
  %132 = vadd.xlane.f32.xlu0 %v131
  %v133 = vpop.xlane.xlu0 %132
  %v134 = vsel %vm112, %v55, 0.0
  %135 = vadd.xlane.f32.xlu0 %v134
  %v136 = vpop.xlane.xlu0 %135
  %v137 = vsel %vm112, %v56, 0.0
  %138 = vadd.xlane.f32.xlu0 %v137
  %v139 = vpop.xlane.xlu0 %138
  %v140 = vsel %vm112, %v57, 0.0
  %141 = vadd.xlane.f32.xlu0 %v140
  %v142 = vpop.xlane.xlu0 %141
  %v143 = vsel %vm112, %v58, 0.0
  %144 = vadd.xlane.f32.xlu0 %v143
  %v145 = vpop.xlane.xlu0 %144
  %v146 = vsel %vm112, %v59, 0.0
  %147 = vadd.xlane.f32.xlu0 %v146
  %v148 = vpop.xlane.xlu0 %147
  %v149 = vsel %vm112, %v60, 0.0
  %150 = vadd.xlane.f32.xlu0 %v149
  %v151 = vpop.xlane.xlu0 %150
  %v152 = vsel %vm112, %v61, 0.0
  %153 = vadd.xlane.f32.xlu0 %v152
  %v154 = vpop.xlane.xlu0 %153
  %v155 = vsel %vm112, %v62, 0.0
  %156 = vadd.xlane.f32.xlu0 %v155
  %v157 = vpop.xlane.xlu0 %156
  %v158 = vsel %vm112, %v63, 0.0
  %159 = vadd.xlane.f32.xlu0 %v158
  %v160 = vpop.xlane.xlu0 %159
  %v161 = vsel %vm112, %v64, 0.0
  %162 = vadd.xlane.f32.xlu0 %v161
  %v163 = vpop.xlane.xlu0 %162
  %v164 = vsel %vm112, %v65, 0.0
  %165 = vadd.xlane.f32.xlu0 %v164
  %v166 = vpop.xlane.xlu0 %165
  %v167 = vsel %vm112, %v66, 0.0
  %168 = vadd.xlane.f32.xlu0 %v167
  %v169 = vpop.xlane.xlu0 %168
  %v170 = vsel %vm112, %v67, 0.0
  %171 = vadd.xlane.f32.xlu0 %v170
  %v172 = vpop.xlane.xlu0 %171
  %v173 = vsel %vm112, %v68, 0.0
  %174 = vadd.xlane.f32.xlu0 %v173
  %v175 = vpop.xlane.xlu0 %174
  %v176 = vsel %vm112, %v69, 0.0
  %177 = vadd.xlane.f32.xlu0 %v176
  %v178 = vpop.xlane.xlu0 %177
  %v179 = vsel %vm112, %v70, 0.0
  %180 = vadd.xlane.f32.xlu0 %v179
  %v181 = vpop.xlane.xlu0 %180
  %v182 = vsel %vm112, %v71, 0.0
  %183 = vadd.xlane.f32.xlu0 %v182
  %v184 = vpop.xlane.xlu0 %183
  %v185 = vsel %vm112, %v72, 0.0
  %186 = vadd.xlane.f32.xlu0 %v185
  %v187 = vpop.xlane.xlu0 %186
  %v188 = vsel %vm112, %v73, 0.0
  %189 = vadd.xlane.f32.xlu0 %v188
  %v190 = vpop.xlane.xlu0 %189
  %v191 = vsel %vm112, %v74, 0.0
  %192 = vadd.xlane.f32.xlu0 %v191
  %v193 = vpop.xlane.xlu0 %192
  %v194 = vsel %vm112, %v75, 0.0
  %195 = vadd.xlane.f32.xlu0 %v194
  %v196 = vpop.xlane.xlu0 %195
  %v197 = vsel %vm112, %v76, 0.0
  %198 = vadd.xlane.f32.xlu0 %v197
  %v199 = vpop.xlane.xlu0 %198
  %v200 = vsel %vm112, %v77, 0.0
  %201 = vadd.xlane.f32.xlu0 %v200
  %v202 = vpop.xlane.xlu0 %201
  %v203 = vsel %vm112, %v78, 0.0
  %204 = vadd.xlane.f32.xlu0 %v203
  %v205 = vpop.xlane.xlu0 %204
  %v206 = vsel %vm112, %v79, 0.0
  %207 = vadd.xlane.f32.xlu0 %v206
  %v208 = vpop.xlane.xlu0 %207
  %v209 = vsel %vm112, %v80, 0.0
  %210 = vadd.xlane.f32.xlu0 %v209
  %v211 = vpop.xlane.xlu0 %210
  %v212 = vsel %vm112, %v81, 0.0
  %213 = vadd.xlane.f32.xlu0 %v212
  %v214 = vpop.xlane.xlu0 %213
  %v215 = vsel %vm112, %v82, 0.0
  %216 = vadd.xlane.f32.xlu0 %v215
  %v217 = vpop.xlane.xlu0 %216
  %v218 = vsel %vm112, %v83, 0.0
  %219 = vadd.xlane.f32.xlu0 %v218
  %v220 = vpop.xlane.xlu0 %219
  %v221 = vsel %vm112, %v84, 0.0
  %222 = vadd.xlane.f32.xlu0 %v221
  %v223 = vpop.xlane.xlu0 %222
  %v224 = vsel %vm112, %v85, 0.0
  %225 = vadd.xlane.f32.xlu0 %v224
  %v226 = vpop.xlane.xlu0 %225
  %v227 = vsel %vm112, %v86, 0.0
  %228 = vadd.xlane.f32.xlu0 %v227
  %v229 = vpop.xlane.xlu0 %228
  %v230 = vsel %vm112, %v87, 0.0
  %231 = vadd.xlane.f32.xlu0 %v230
  %v232 = vpop.xlane.xlu0 %231
  %v233 = vsel %vm112, %v88, 0.0
  %234 = vadd.xlane.f32.xlu0 %v233
  %v235 = vpop.xlane.xlu0 %234
  %v236 = vsel %vm112, %v89, 0.0
  %237 = vadd.xlane.f32.xlu0 %v236
  %v238 = vpop.xlane.xlu0 %237
  %v239 = vsel %vm112, %v90, 0.0
  %240 = vadd.xlane.f32.xlu0 %v239
  %v241 = vpop.xlane.xlu0 %240
  %v242 = vsel %vm112, %v91, 0.0
  %243 = vadd.xlane.f32.xlu0 %v242
  %v244 = vpop.xlane.xlu0 %243
  %v245 = vsel %vm112, %v92, 0.0
  %246 = vadd.xlane.f32.xlu0 %v245
  %v247 = vpop.xlane.xlu0 %246
  %v248 = vsel %vm112, %v93, 0.0
  %249 = vadd.xlane.f32.xlu0 %v248
  %v250 = vpop.xlane.xlu0 %249
  %v251 = vsel %vm112, %v94, 0.0
  %252 = vadd.xlane.f32.xlu0 %v251
  %v253 = vpop.xlane.xlu0 %252
  %v254 = vsel %vm112, %v95, 0.0
  %255 = vadd.xlane.f32.xlu0 %v254
  %v256 = vpop.xlane.xlu0 %255
  %v257 = vsel %vm112, %v96, 0.0
  %258 = vadd.xlane.f32.xlu0 %v257
  %v259 = vpop.xlane.xlu0 %258
  %v260 = vsel %vm112, %v97, 0.0
  %261 = vadd.xlane.f32.xlu0 %v260
  %v262 = vpop.xlane.xlu0 %261
  %v263 = vsel %vm112, %v98, 0.0
  %264 = vadd.xlane.f32.xlu0 %v263
  %v265 = vpop.xlane.xlu0 %264
  %v266 = vsel %vm112, %v99, 0.0
  %267 = vadd.xlane.f32.xlu0 %v266
  %v268 = vpop.xlane.xlu0 %267
  %v269 = vsel %vm112, %v100, 0.0
  %270 = vadd.xlane.f32.xlu0 %v269
  %v271 = vpop.xlane.xlu0 %270
  %v272 = vsel %vm112, %v101, 0.0
  %273 = vadd.xlane.f32.xlu0 %v272
  %v274 = vpop.xlane.xlu0 %273
  %v275 = vsel %vm112, %v102, 0.0
  %276 = vadd.xlane.f32.xlu0 %v275
  %v277 = vpop.xlane.xlu0 %276
  %v278 = vsel %vm112, %v103, 0.0
  %279 = vadd.xlane.f32.xlu0 %v278
  %v280 = vpop.xlane.xlu0 %279
  %v281 = vsel %vm112, %v104, 0.0
  %282 = vadd.xlane.f32.xlu0 %v281
  %v283 = vpop.xlane.xlu0 %282
  %v284 = vsel %vm112, %v105, 0.0
  %285 = vadd.xlane.f32.xlu0 %v284
  %v286 = vpop.xlane.xlu0 %285
  %v287 = vsel %vm112, %v106, 0.0
  %288 = vadd.xlane.f32.xlu0 %v287
  %v289 = vpop.xlane.xlu0 %288
  %v290 = vsel %vm112, %v107, 0.0
  %291 = vadd.xlane.f32.xlu0 %v290
  %v292 = vpop.xlane.xlu0 %291
  %v293 = vsel %vm112, %v108, 0.0
  %294 = vadd.xlane.f32.xlu0 %v293
  %v295 = vpop.xlane.xlu0 %294
  %v296 = vsel %vm112, %v109, 0.0
  %297 = vadd.xlane.f32.xlu0 %v296
  %v298 = vpop.xlane.xlu0 %297
  %v299 = vsel %vm112, %v110, 0.0
  %300 = vadd.xlane.f32.xlu0 %v299
  %v301 = vpop.xlane.xlu0 %300
  %v302 = vsel %vm112, %v111, 0.0
  %303 = vadd.xlane.f32.xlu0 %v302
  %v304 = vpop.xlane.xlu0 %303
  %v305 = vrcp.pop 8.0
  %v306 = vmul.f32 %v115, %v305
  %v307 = vmul.f32 %v118, %v305
  %v308 = vmul.f32 %v121, %v305
  %v309 = vmul.f32 %v124, %v305
  %v310 = vmul.f32 %v127, %v305
  %v311 = vmul.f32 %v130, %v305
  %v312 = vmul.f32 %v133, %v305
  %v313 = vmul.f32 %v136, %v305
  %v314 = vmul.f32 %v139, %v305
  %v315 = vmul.f32 %v142, %v305
  %v316 = vmul.f32 %v145, %v305
  %v317 = vmul.f32 %v148, %v305
  %v318 = vmul.f32 %v151, %v305
  %v319 = vmul.f32 %v154, %v305
  %v320 = vmul.f32 %v157, %v305
  %v321 = vmul.f32 %v160, %v305
  %v322 = vmul.f32 %v163, %v305
  %v323 = vmul.f32 %v166, %v305
  %v324 = vmul.f32 %v169, %v305
  %v325 = vmul.f32 %v172, %v305
  %v326 = vmul.f32 %v175, %v305
  %v327 = vmul.f32 %v178, %v305
  %v328 = vmul.f32 %v181, %v305
  %v329 = vmul.f32 %v184, %v305
  %v330 = vmul.f32 %v187, %v305
  %v331 = vmul.f32 %v190, %v305
  %v332 = vmul.f32 %v193, %v305
  %v333 = vmul.f32 %v196, %v305
  %v334 = vmul.f32 %v199, %v305
  %v335 = vmul.f32 %v202, %v305
  %v336 = vmul.f32 %v205, %v305
  %v337 = vmul.f32 %v208, %v305
  %v338 = vmul.f32 %v211, %v305
  %v339 = vmul.f32 %v214, %v305
  %v340 = vmul.f32 %v217, %v305
  %v341 = vmul.f32 %v220, %v305
  %v342 = vmul.f32 %v223, %v305
  %v343 = vmul.f32 %v226, %v305
  %v344 = vmul.f32 %v229, %v305
  %v345 = vmul.f32 %v232, %v305
  %v346 = vmul.f32 %v235, %v305
  %v347 = vmul.f32 %v238, %v305
  %v348 = vmul.f32 %v241, %v305
  %v349 = vmul.f32 %v244, %v305
  %v350 = vmul.f32 %v247, %v305
  %v351 = vmul.f32 %v250, %v305
  %v352 = vmul.f32 %v253, %v305
  %v353 = vmul.f32 %v256, %v305
  %v354 = vmul.f32 %v259, %v305
  %v355 = vmul.f32 %v262, %v305
  %v356 = vmul.f32 %v265, %v305
  %v357 = vmul.f32 %v268, %v305
  %v358 = vmul.f32 %v271, %v305
  %v359 = vmul.f32 %v274, %v305
  %v360 = vmul.f32 %v277, %v305
  %v361 = vmul.f32 %v280, %v305
  %v362 = vmul.f32 %v283, %v305
  %v363 = vmul.f32 %v286, %v305
  %v364 = vmul.f32 %v289, %v305
  %v365 = vmul.f32 %v292, %v305
  %v366 = vmul.f32 %v295, %v305
  %v367 = vmul.f32 %v298, %v305
  %v368 = vmul.f32 %v301, %v305
  %v369 = vmul.f32 %v304, %v305
  %v434 = vlaneseq
  %v435 = vshrl.u32 %v434, 7
  %v436 = vsub.s32 %v31, %v435
  %v437 = vrot.slane %v306, %v436
  %v438 = vadd.s32 %v31, 4294967288
  %v439 = vlaneseq
  %v440 = vshrl.u32 %v439, 7
  %v441 = vsub.s32 %v438, %v440
  %v442 = vrot.slane %v307, %v441
  %vm443 = vcmask 130112
  %v444 = vsel %vm443, %v442, %v437
  %v445 = vlaneseq
  %v446 = vshrl.u32 %v445, 7
  %v447 = vsub.s32 %v31, %v446
  %v448 = vrot.slane %v308, %v447
  %v449 = vlaneseq
  %v450 = vshrl.u32 %v449, 7
  %v451 = vsub.s32 %v438, %v450
  %v452 = vrot.slane %v309, %v451
  %v453 = vsel %vm443, %v452, %v448
  %v454 = vlaneseq
  %v455 = vshrl.u32 %v454, 7
  %v456 = vsub.s32 %v31, %v455
  %v457 = vrot.slane %v310, %v456
  %v458 = vlaneseq
  %v459 = vshrl.u32 %v458, 7
  %v460 = vsub.s32 %v438, %v459
  %v461 = vrot.slane %v311, %v460
  %v462 = vsel %vm443, %v461, %v457
  %v463 = vlaneseq
  %v464 = vshrl.u32 %v463, 7
  %v465 = vsub.s32 %v31, %v464
  %v466 = vrot.slane %v312, %v465
  %v467 = vlaneseq
  %v468 = vshrl.u32 %v467, 7
  %v469 = vsub.s32 %v438, %v468
  %v470 = vrot.slane %v313, %v469
  %v471 = vsel %vm443, %v470, %v466
  %v472 = vlaneseq
  %v473 = vshrl.u32 %v472, 7
  %v474 = vsub.s32 %v31, %v473
  %v475 = vrot.slane %v314, %v474
  %v476 = vlaneseq
  %v477 = vshrl.u32 %v476, 7
  %v478 = vsub.s32 %v438, %v477
  %v479 = vrot.slane %v315, %v478
  %v480 = vsel %vm443, %v479, %v475
  %v481 = vlaneseq
  %v482 = vshrl.u32 %v481, 7
  %v483 = vsub.s32 %v31, %v482
  %v484 = vrot.slane %v316, %v483
  %v485 = vlaneseq
  %v486 = vshrl.u32 %v485, 7
  %v487 = vsub.s32 %v438, %v486
  %v488 = vrot.slane %v317, %v487
  %v489 = vsel %vm443, %v488, %v484
  %v490 = vlaneseq
  %v491 = vshrl.u32 %v490, 7
  %v492 = vsub.s32 %v31, %v491
  %v493 = vrot.slane %v318, %v492
  %v494 = vlaneseq
  %v495 = vshrl.u32 %v494, 7
  %v496 = vsub.s32 %v438, %v495
  %v497 = vrot.slane %v319, %v496
  %v498 = vsel %vm443, %v497, %v493
  %v499 = vlaneseq
  %v500 = vshrl.u32 %v499, 7
  %v501 = vsub.s32 %v31, %v500
  %v502 = vrot.slane %v320, %v501
  %v503 = vlaneseq
  %v504 = vshrl.u32 %v503, 7
  %v505 = vsub.s32 %v438, %v504
  %v506 = vrot.slane %v321, %v505
  %v507 = vsel %vm443, %v506, %v502
  %v508 = vlaneseq
  %v509 = vshrl.u32 %v508, 7
  %v510 = vsub.s32 %v31, %v509
  %v511 = vrot.slane %v322, %v510
  %v512 = vlaneseq
  %v513 = vshrl.u32 %v512, 7
  %v514 = vsub.s32 %v438, %v513
  %v515 = vrot.slane %v323, %v514
  %v516 = vsel %vm443, %v515, %v511
  %v517 = vlaneseq
  %v518 = vshrl.u32 %v517, 7
  %v519 = vsub.s32 %v31, %v518
  %v520 = vrot.slane %v324, %v519
  %v521 = vlaneseq
  %v522 = vshrl.u32 %v521, 7
  %v523 = vsub.s32 %v438, %v522
  %v524 = vrot.slane %v325, %v523
  %v525 = vsel %vm443, %v524, %v520
  %v526 = vlaneseq
  %v527 = vshrl.u32 %v526, 7
  %v528 = vsub.s32 %v31, %v527
  %v529 = vrot.slane %v326, %v528
  %v530 = vlaneseq
  %v531 = vshrl.u32 %v530, 7
  %v532 = vsub.s32 %v438, %v531
  %v533 = vrot.slane %v327, %v532
  %v534 = vsel %vm443, %v533, %v529
  %v535 = vlaneseq
  %v536 = vshrl.u32 %v535, 7
  %v537 = vsub.s32 %v31, %v536
  %v538 = vrot.slane %v328, %v537
  %v539 = vlaneseq
  %v540 = vshrl.u32 %v539, 7
  %v541 = vsub.s32 %v438, %v540
  %v542 = vrot.slane %v329, %v541
  %v543 = vsel %vm443, %v542, %v538
  %v544 = vlaneseq
  %v545 = vshrl.u32 %v544, 7
  %v546 = vsub.s32 %v31, %v545
  %v547 = vrot.slane %v330, %v546
  %v548 = vlaneseq
  %v549 = vshrl.u32 %v548, 7
  %v550 = vsub.s32 %v438, %v549
  %v551 = vrot.slane %v331, %v550
  %v552 = vsel %vm443, %v551, %v547
  %v553 = vlaneseq
  %v554 = vshrl.u32 %v553, 7
  %v555 = vsub.s32 %v31, %v554
  %v556 = vrot.slane %v332, %v555
  %v557 = vlaneseq
  %v558 = vshrl.u32 %v557, 7
  %v559 = vsub.s32 %v438, %v558
  %v560 = vrot.slane %v333, %v559
  %v561 = vsel %vm443, %v560, %v556
  %v562 = vlaneseq
  %v563 = vshrl.u32 %v562, 7
  %v564 = vsub.s32 %v31, %v563
  %v565 = vrot.slane %v334, %v564
  %v566 = vlaneseq
  %v567 = vshrl.u32 %v566, 7
  %v568 = vsub.s32 %v438, %v567
  %v569 = vrot.slane %v335, %v568
  %v570 = vsel %vm443, %v569, %v565
  %v571 = vlaneseq
  %v572 = vshrl.u32 %v571, 7
  %v573 = vsub.s32 %v31, %v572
  %v574 = vrot.slane %v336, %v573
  %v575 = vlaneseq
  %v576 = vshrl.u32 %v575, 7
  %v577 = vsub.s32 %v438, %v576
  %v578 = vrot.slane %v337, %v577
  %v579 = vsel %vm443, %v578, %v574
  %v580 = vlaneseq
  %v581 = vshrl.u32 %v580, 7
  %v582 = vsub.s32 %v31, %v581
  %v583 = vrot.slane %v338, %v582
  %v584 = vlaneseq
  %v585 = vshrl.u32 %v584, 7
  %v586 = vsub.s32 %v438, %v585
  %v587 = vrot.slane %v339, %v586
  %v588 = vsel %vm443, %v587, %v583
  %v589 = vlaneseq
  %v590 = vshrl.u32 %v589, 7
  %v591 = vsub.s32 %v31, %v590
  %v592 = vrot.slane %v340, %v591
  %v593 = vlaneseq
  %v594 = vshrl.u32 %v593, 7
  %v595 = vsub.s32 %v438, %v594
  %v596 = vrot.slane %v341, %v595
  %v597 = vsel %vm443, %v596, %v592
  %v598 = vlaneseq
  %v599 = vshrl.u32 %v598, 7
  %v600 = vsub.s32 %v31, %v599
  %v601 = vrot.slane %v342, %v600
  %v602 = vlaneseq
  %v603 = vshrl.u32 %v602, 7
  %v604 = vsub.s32 %v438, %v603
  %v605 = vrot.slane %v343, %v604
  %v606 = vsel %vm443, %v605, %v601
  %v607 = vlaneseq
  %v608 = vshrl.u32 %v607, 7
  %v609 = vsub.s32 %v31, %v608
  %v610 = vrot.slane %v344, %v609
  %v611 = vlaneseq
  %v612 = vshrl.u32 %v611, 7
  %v613 = vsub.s32 %v438, %v612
  %v614 = vrot.slane %v345, %v613
  %v615 = vsel %vm443, %v614, %v610
  %v616 = vlaneseq
  %v617 = vshrl.u32 %v616, 7
  %v618 = vsub.s32 %v31, %v617
  %v619 = vrot.slane %v346, %v618
  %v620 = vlaneseq
  %v621 = vshrl.u32 %v620, 7
  %v622 = vsub.s32 %v438, %v621
  %v623 = vrot.slane %v347, %v622
  %v624 = vsel %vm443, %v623, %v619
  %v625 = vlaneseq
  %v626 = vshrl.u32 %v625, 7
  %v627 = vsub.s32 %v31, %v626
  %v628 = vrot.slane %v348, %v627
  %v629 = vlaneseq
  %v630 = vshrl.u32 %v629, 7
  %v631 = vsub.s32 %v438, %v630
  %v632 = vrot.slane %v349, %v631
  %v633 = vsel %vm443, %v632, %v628
  %v634 = vlaneseq
  %v635 = vshrl.u32 %v634, 7
  %v636 = vsub.s32 %v31, %v635
  %v637 = vrot.slane %v350, %v636
  %v638 = vlaneseq
  %v639 = vshrl.u32 %v638, 7
  %v640 = vsub.s32 %v438, %v639
  %v641 = vrot.slane %v351, %v640
  %v642 = vsel %vm443, %v641, %v637
  %v643 = vlaneseq
  %v644 = vshrl.u32 %v643, 7
  %v645 = vsub.s32 %v31, %v644
  %v646 = vrot.slane %v352, %v645
  %v647 = vlaneseq
  %v648 = vshrl.u32 %v647, 7
  %v649 = vsub.s32 %v438, %v648
  %v650 = vrot.slane %v353, %v649
  %v651 = vsel %vm443, %v650, %v646
  %v652 = vlaneseq
  %v653 = vshrl.u32 %v652, 7
  %v654 = vsub.s32 %v31, %v653
  %v655 = vrot.slane %v354, %v654
  %v656 = vlaneseq
  %v657 = vshrl.u32 %v656, 7
  %v658 = vsub.s32 %v438, %v657
  %v659 = vrot.slane %v355, %v658
  %v660 = vsel %vm443, %v659, %v655
  %v661 = vlaneseq
  %v662 = vshrl.u32 %v661, 7
  %v663 = vsub.s32 %v31, %v662
  %v664 = vrot.slane %v356, %v663
  %v665 = vlaneseq
  %v666 = vshrl.u32 %v665, 7
  %v667 = vsub.s32 %v438, %v666
  %v668 = vrot.slane %v357, %v667
  %v669 = vsel %vm443, %v668, %v664
  %v670 = vlaneseq
  %v671 = vshrl.u32 %v670, 7
  %v672 = vsub.s32 %v31, %v671
  %v673 = vrot.slane %v358, %v672
  %v674 = vlaneseq
  %v675 = vshrl.u32 %v674, 7
  %v676 = vsub.s32 %v438, %v675
  %v677 = vrot.slane %v359, %v676
  %v678 = vsel %vm443, %v677, %v673
  %v679 = vlaneseq
  %v680 = vshrl.u32 %v679, 7
  %v681 = vsub.s32 %v31, %v680
  %v682 = vrot.slane %v360, %v681
  %v683 = vlaneseq
  %v684 = vshrl.u32 %v683, 7
  %v685 = vsub.s32 %v438, %v684
  %v686 = vrot.slane %v361, %v685
  %v687 = vsel %vm443, %v686, %v682
  %v688 = vlaneseq
  %v689 = vshrl.u32 %v688, 7
  %v690 = vsub.s32 %v31, %v689
  %v691 = vrot.slane %v362, %v690
  %v692 = vlaneseq
  %v693 = vshrl.u32 %v692, 7
  %v694 = vsub.s32 %v438, %v693
  %v695 = vrot.slane %v363, %v694
  %v696 = vsel %vm443, %v695, %v691
  %v697 = vlaneseq
  %v698 = vshrl.u32 %v697, 7
  %v699 = vsub.s32 %v31, %v698
  %v700 = vrot.slane %v364, %v699
  %v701 = vlaneseq
  %v702 = vshrl.u32 %v701, 7
  %v703 = vsub.s32 %v438, %v702
  %v704 = vrot.slane %v365, %v703
  %v705 = vsel %vm443, %v704, %v700
  %v706 = vlaneseq
  %v707 = vshrl.u32 %v706, 7
  %v708 = vsub.s32 %v31, %v707
  %v709 = vrot.slane %v366, %v708
  %v710 = vlaneseq
  %v711 = vshrl.u32 %v710, 7
  %v712 = vsub.s32 %v438, %v711
  %v713 = vrot.slane %v367, %v712
  %v714 = vsel %vm443, %v713, %v709
  %v715 = vlaneseq
  %v716 = vshrl.u32 %v715, 7
  %v717 = vsub.s32 %v31, %v716
  %v718 = vrot.slane %v368, %v717
  %v719 = vlaneseq
  %v720 = vshrl.u32 %v719, 7
  %v721 = vsub.s32 %v438, %v720
  %v722 = vrot.slane %v369, %v721
  %v723 = vsel %vm443, %v722, %v718
  %vm724 = vcmask 1041409
  %v725 = vsel %vm724, %v453, %v444
  %vm726 = vcmask 1042434
  %v727 = vsel %vm726, %v462, %v725
  %vm728 = vcmask 1043459
  %v729 = vsel %vm728, %v471, %v727
  %vm730 = vcmask 1044484
  %v731 = vsel %vm730, %v480, %v729
  %vm732 = vcmask 1045509
  %v733 = vsel %vm732, %v489, %v731
  %vm734 = vcmask 1046534
  %v735 = vsel %vm734, %v498, %v733
  %vm736 = vcmask 1047559
  %v737 = vsel %vm736, %v507, %v735
  %v738 = vsel %vm724, %v525, %v516
  %v739 = vsel %vm726, %v534, %v738
  %v740 = vsel %vm728, %v543, %v739
  %v741 = vsel %vm730, %v552, %v740
  %v742 = vsel %vm732, %v561, %v741
  %v743 = vsel %vm734, %v570, %v742
  %v744 = vsel %vm736, %v579, %v743
  %v745 = vsel %vm724, %v597, %v588
  %v746 = vsel %vm726, %v606, %v745
  %v747 = vsel %vm728, %v615, %v746
  %v748 = vsel %vm730, %v624, %v747
  %v749 = vsel %vm732, %v633, %v748
  %v750 = vsel %vm734, %v642, %v749
  %v751 = vsel %vm736, %v651, %v750
  %v752 = vsel %vm724, %v669, %v660
  %v753 = vsel %vm726, %v678, %v752
  %v754 = vsel %vm728, %v687, %v753
  %v755 = vsel %vm730, %v696, %v754
  %v756 = vsel %vm732, %v705, %v755
  %v757 = vsel %vm734, %v714, %v756
  %v758 = vsel %vm736, %v723, %v757
  %vm763 = vcmask 130048
  %v764 = vsel %vm763, %v737, 0.0
  %765 = vadd.xlane.f32.xlu0 %v764
  %v766 = vpop.xlane.xlu0 %765
  %v767 = vsel %vm763, %v744, 0.0
  %768 = vadd.xlane.f32.xlu0 %v767
  %v769 = vpop.xlane.xlu0 %768
  %v770 = vsel %vm763, %v751, 0.0
  %771 = vadd.xlane.f32.xlu0 %v770
  %v772 = vpop.xlane.xlu0 %771
  %v773 = vsel %vm763, %v758, 0.0
  %774 = vadd.xlane.f32.xlu0 %v773
  %v775 = vpop.xlane.xlu0 %774
  %v776 = vrcp.pop 16.0
  %v777 = vmul.f32 %v766, %v776
  %v778 = vmul.f32 %v769, %v776
  %v779 = vmul.f32 %v772, %v776
  %v780 = vmul.f32 %v775, %v776
  %v781 = vld [vmem:[%s1] sm:$0xf]
  %v782 = vld [vmem:[%s1 + $0x4] sm:$0xf]
  %v783 = vld [vmem:[%s1 + $0x8] sm:$0xf]
  %v784 = vld [vmem:[%s1 + $0xc] sm:$0xf]
  %v785 = vpack.c.bf16 %v778, %v777
  %v786 = vpack.c.bf16 %v780, %v779
  %v787 = vld [vmem:[%s2] sm:$0xff]
  %v788 = vld [vmem:[%s2 + $0x8] sm:$0xff]
  %v789 = vld [vmem:[%s2 + $0x10] sm:$0xff]
  %v790 = vld [vmem:[%s2 + $0x18] sm:$0xff]
  %v795 = vunpack.c.l.b16 %v781
  %v796 = vunpack.c.l.b16 %v782
  %v797 = vunpack.c.l.b16 %v783
  %v798 = vunpack.c.l.b16 %v784
  %v799 = vpack.c.b16 %v796, %v795
  %v800 = vpack.c.b16 %v798, %v797
  %vm801 = vcmask 261120
  %v803 = vsel %vm801, %v799, 0
  %v806 = vsel %vm801, %v800, 0
  %808 = vmatprep.subr.bf16.mxu0 0
  %809 = vmatpush1.bf16.msra.mxu0 %v785
  %810 = vmatprep.subr.bf16.mxu0 0
  %811 = vmatpush1.bf16.msra.mxu0 %v786
  %812 = vmatprep.subr.bf16.mxu0 0
  %813 = vmatpush1.bf16.msra.mxu0 0
  %814 = vmatprep.subr.bf16.mxu0 0
  %815 = vmatpush1.bf16.msra.mxu0 0
  %816 = vmatprep.subr.bf16.mxu0 0
  %817 = vmatpush1.bf16.msra.mxu0 0
  %818 = vmatprep.subr.bf16.mxu0 0
  %819 = vmatpush1.bf16.msra.mxu0 0
  %820 = vmatprep.subr.bf16.mxu0 0
  %821 = vmatpush1.bf16.msra.mxu0 0
  %822 = vmatprep.subr.bf16.mxu0 0
  %823 = vmatpush1.bf16.msra.mxu0 0
  %824 = vmatprep.subr.bf16.mxu0 0
  %825 = vmatpush1.bf16.msra.mxu0 0
  %826 = vmatprep.subr.bf16.mxu0 0
  %827 = vmatpush1.bf16.msra.mxu0 0
  %828 = vmatprep.subr.bf16.mxu0 0
  %829 = vmatpush1.bf16.msra.mxu0 0
  %830 = vmatprep.subr.bf16.mxu0 0
  %831 = vmatpush1.bf16.msra.mxu0 0
  %832 = vmatprep.subr.bf16.mxu0 0
  %833 = vmatpush1.bf16.msra.mxu0 0
  %834 = vmatprep.subr.bf16.mxu0 0
  %835 = vmatpush1.bf16.msra.mxu0 0
  %836 = vmatprep.subr.bf16.mxu0 0
  %837 = vmatpush1.bf16.msra.mxu0 0
  %838 = vmatprep.subr.bf16.mxu0 0
  %839 = vmatpush1.bf16.msra.mxu0 0
  %840 = vmatprep.mubr.bf16.mxu0 0
  %841 = vmatmul.mubr.bf16.gmra.mrb[0].mxu0 %v803
  %v842 = vpop.f32.mrb[0].mxu0
  %v843 = vadd.f32 %v787, %v842
  %v844 = vpop.f32.mrb[0].mxu0
  %v845 = vpop.f32.mrb[0].mxu0
  %v846 = vadd.f32 %v788, %v845
  %v847 = vpop.f32.mrb[0].mxu0
  %848 = vmatprep.mubr.bf16.mxu0 0
  %849 = vmatmul.mubr.bf16.gmra.mrb[0].mxu0 %v806
  %v850 = vpop.f32.mrb[0].mxu0
  %v851 = vadd.f32 %v789, %v850
  %v852 = vpop.f32.mrb[0].mxu0
  %v853 = vpop.f32.mrb[0].mxu0
  %v854 = vadd.f32 %v790, %v853
  %v855 = vpop.f32.mrb[0].mxu0
  %856 = vdwg.mxu0
  %858 = vset.pattern.permute.xlu0 0
  %859 = vperm.xlu0 %858, %v843
  %v860 = vpop.permute.xlu0 %859
  %862 = vset.pattern.permute.xlu0 0
  %863 = vperm.xlu0 %862, %v846
  %v864 = vpop.permute.xlu0 %863
  %866 = vset.pattern.permute.xlu0 0
  %867 = vperm.xlu0 %866, %v851
  %v868 = vpop.permute.xlu0 %867
  %870 = vset.pattern.permute.xlu0 0
  %871 = vperm.xlu0 %870, %v854
  %v872 = vpop.permute.xlu0 %871
  %v873 = vlaneseq
  %v874 = vshrl.u32 %v873, 7
  %v875 = vsub.s32 0, %v874
  %v876 = vrot.slane %v860, %v875
  %v877 = vlaneseq
  %v878 = vshrl.u32 %v877, 7
  %v879 = vsub.s32 1, %v878
  %v880 = vrot.slane %v860, %v879
  %v881 = vlaneseq
  %v882 = vshrl.u32 %v881, 7
  %v883 = vsub.s32 2, %v882
  %v884 = vrot.slane %v860, %v883
  %v885 = vlaneseq
  %v886 = vshrl.u32 %v885, 7
  %v887 = vsub.s32 3, %v886
  %v888 = vrot.slane %v860, %v887
  %v889 = vlaneseq
  %v890 = vshrl.u32 %v889, 7
  %v891 = vsub.s32 4, %v890
  %v892 = vrot.slane %v860, %v891
  %v893 = vlaneseq
  %v894 = vshrl.u32 %v893, 7
  %v895 = vsub.s32 5, %v894
  %v896 = vrot.slane %v860, %v895
  %v897 = vlaneseq
  %v898 = vshrl.u32 %v897, 7
  %v899 = vsub.s32 6, %v898
  %v900 = vrot.slane %v860, %v899
  %v901 = vlaneseq
  %v902 = vshrl.u32 %v901, 7
  %v903 = vsub.s32 7, %v902
  %v904 = vrot.slane %v860, %v903
  %v905 = vlaneseq
  %v906 = vshrl.u32 %v905, 7
  %v907 = vsub.s32 0, %v906
  %v908 = vrot.slane %v864, %v907
  %v909 = vlaneseq
  %v910 = vshrl.u32 %v909, 7
  %v911 = vsub.s32 1, %v910
  %v912 = vrot.slane %v864, %v911
  %v913 = vlaneseq
  %v914 = vshrl.u32 %v913, 7
  %v915 = vsub.s32 2, %v914
  %v916 = vrot.slane %v864, %v915
  %v917 = vlaneseq
  %v918 = vshrl.u32 %v917, 7
  %v919 = vsub.s32 3, %v918
  %v920 = vrot.slane %v864, %v919
  %v921 = vlaneseq
  %v922 = vshrl.u32 %v921, 7
  %v923 = vsub.s32 4, %v922
  %v924 = vrot.slane %v864, %v923
  %v925 = vlaneseq
  %v926 = vshrl.u32 %v925, 7
  %v927 = vsub.s32 5, %v926
  %v928 = vrot.slane %v864, %v927
  %v929 = vlaneseq
  %v930 = vshrl.u32 %v929, 7
  %v931 = vsub.s32 6, %v930
  %v932 = vrot.slane %v864, %v931
  %v933 = vlaneseq
  %v934 = vshrl.u32 %v933, 7
  %v935 = vsub.s32 7, %v934
  %v936 = vrot.slane %v864, %v935
  %v937 = vlaneseq
  %v938 = vshrl.u32 %v937, 7
  %v939 = vsub.s32 0, %v938
  %v940 = vrot.slane %v868, %v939
  %v941 = vlaneseq
  %v942 = vshrl.u32 %v941, 7
  %v943 = vsub.s32 1, %v942
  %v944 = vrot.slane %v868, %v943
  %v945 = vlaneseq
  %v946 = vshrl.u32 %v945, 7
  %v947 = vsub.s32 2, %v946
  %v948 = vrot.slane %v868, %v947
  %v949 = vlaneseq
  %v950 = vshrl.u32 %v949, 7
  %v951 = vsub.s32 3, %v950
  %v952 = vrot.slane %v868, %v951
  %v953 = vlaneseq
  %v954 = vshrl.u32 %v953, 7
  %v955 = vsub.s32 4, %v954
  %v956 = vrot.slane %v868, %v955
  %v957 = vlaneseq
  %v958 = vshrl.u32 %v957, 7
  %v959 = vsub.s32 5, %v958
  %v960 = vrot.slane %v868, %v959
  %v961 = vlaneseq
  %v962 = vshrl.u32 %v961, 7
  %v963 = vsub.s32 6, %v962
  %v964 = vrot.slane %v868, %v963
  %v965 = vlaneseq
  %v966 = vshrl.u32 %v965, 7
  %v967 = vsub.s32 7, %v966
  %v968 = vrot.slane %v868, %v967
  %v969 = vlaneseq
  %v970 = vshrl.u32 %v969, 7
  %v971 = vsub.s32 0, %v970
  %v972 = vrot.slane %v872, %v971
  %v973 = vlaneseq
  %v974 = vshrl.u32 %v973, 7
  %v975 = vsub.s32 1, %v974
  %v976 = vrot.slane %v872, %v975
  %v977 = vlaneseq
  %v978 = vshrl.u32 %v977, 7
  %v979 = vsub.s32 2, %v978
  %v980 = vrot.slane %v872, %v979
  %v981 = vlaneseq
  %v982 = vshrl.u32 %v981, 7
  %v983 = vsub.s32 3, %v982
  %v984 = vrot.slane %v872, %v983
  %v985 = vlaneseq
  %v986 = vshrl.u32 %v985, 7
  %v987 = vsub.s32 4, %v986
  %v988 = vrot.slane %v872, %v987
  %v989 = vlaneseq
  %v990 = vshrl.u32 %v989, 7
  %v991 = vsub.s32 5, %v990
  %v992 = vrot.slane %v872, %v991
  %v993 = vlaneseq
  %v994 = vshrl.u32 %v993, 7
  %v995 = vsub.s32 6, %v994
  %v996 = vrot.slane %v872, %v995
  %v997 = vlaneseq
  %v998 = vshrl.u32 %v997, 7
  %v999 = vsub.s32 7, %v998
  %v1000 = vrot.slane %v872, %v999
  %v1033 = vadd.f32 %v306, %v876
  %v1034 = vadd.f32 %v307, %v876
  %v1035 = vadd.f32 %v308, %v880
  %v1036 = vadd.f32 %v309, %v880
  %v1037 = vadd.f32 %v310, %v884
  %v1038 = vadd.f32 %v311, %v884
  %v1039 = vadd.f32 %v312, %v888
  %v1040 = vadd.f32 %v313, %v888
  %v1041 = vadd.f32 %v314, %v892
  %v1042 = vadd.f32 %v315, %v892
  %v1043 = vadd.f32 %v316, %v896
  %v1044 = vadd.f32 %v317, %v896
  %v1045 = vadd.f32 %v318, %v900
  %v1046 = vadd.f32 %v319, %v900
  %v1047 = vadd.f32 %v320, %v904
  %v1048 = vadd.f32 %v321, %v904
  %v1049 = vadd.f32 %v322, %v908
  %v1050 = vadd.f32 %v323, %v908
  %v1051 = vadd.f32 %v324, %v912
  %v1052 = vadd.f32 %v325, %v912
  %v1053 = vadd.f32 %v326, %v916
  %v1054 = vadd.f32 %v327, %v916
  %v1055 = vadd.f32 %v328, %v920
  %v1056 = vadd.f32 %v329, %v920
  %v1057 = vadd.f32 %v330, %v924
  %v1058 = vadd.f32 %v331, %v924
  %v1059 = vadd.f32 %v332, %v928
  %v1060 = vadd.f32 %v333, %v928
  %v1061 = vadd.f32 %v334, %v932
  %v1062 = vadd.f32 %v335, %v932
  %v1063 = vadd.f32 %v336, %v936
  %v1064 = vadd.f32 %v337, %v936
  %v1065 = vadd.f32 %v338, %v940
  %v1066 = vadd.f32 %v339, %v940
  %v1067 = vadd.f32 %v340, %v944
  %v1068 = vadd.f32 %v341, %v944
  %v1069 = vadd.f32 %v342, %v948
  %v1070 = vadd.f32 %v343, %v948
  %v1071 = vadd.f32 %v344, %v952
  %v1072 = vadd.f32 %v345, %v952
  %v1073 = vadd.f32 %v346, %v956
  %v1074 = vadd.f32 %v347, %v956
  %v1075 = vadd.f32 %v348, %v960
  %v1076 = vadd.f32 %v349, %v960
  %v1077 = vadd.f32 %v350, %v964
  %v1078 = vadd.f32 %v351, %v964
  %v1079 = vadd.f32 %v352, %v968
  %v1080 = vadd.f32 %v353, %v968
  %v1081 = vadd.f32 %v354, %v972
  %v1082 = vadd.f32 %v355, %v972
  %v1083 = vadd.f32 %v356, %v976
  %v1084 = vadd.f32 %v357, %v976
  %v1085 = vadd.f32 %v358, %v980
  %v1086 = vadd.f32 %v359, %v980
  %v1087 = vadd.f32 %v360, %v984
  %v1088 = vadd.f32 %v361, %v984
  %v1089 = vadd.f32 %v362, %v988
  %v1090 = vadd.f32 %v363, %v988
  %v1091 = vadd.f32 %v364, %v992
  %v1092 = vadd.f32 %v365, %v992
  %v1093 = vadd.f32 %v366, %v996
  %v1094 = vadd.f32 %v367, %v996
  %v1095 = vadd.f32 %v368, %v1000
  %v1096 = vadd.f32 %v369, %v1000
  %v1097 = vpack.c.bf16 %v1034, %v1033
  %v1098 = vpack.c.bf16 %v1036, %v1035
  %v1099 = vpack.c.bf16 %v1038, %v1037
  %v1100 = vpack.c.bf16 %v1040, %v1039
  %v1101 = vpack.c.bf16 %v1042, %v1041
  %v1102 = vpack.c.bf16 %v1044, %v1043
  %v1103 = vpack.c.bf16 %v1046, %v1045
  %v1104 = vpack.c.bf16 %v1048, %v1047
  %v1105 = vpack.c.bf16 %v1050, %v1049
  %v1106 = vpack.c.bf16 %v1052, %v1051
  %v1107 = vpack.c.bf16 %v1054, %v1053
  %v1108 = vpack.c.bf16 %v1056, %v1055
  %v1109 = vpack.c.bf16 %v1058, %v1057
  %v1110 = vpack.c.bf16 %v1060, %v1059
  %v1111 = vpack.c.bf16 %v1062, %v1061
  %v1112 = vpack.c.bf16 %v1064, %v1063
  %v1113 = vpack.c.bf16 %v1066, %v1065
  %v1114 = vpack.c.bf16 %v1068, %v1067
  %v1115 = vpack.c.bf16 %v1070, %v1069
  %v1116 = vpack.c.bf16 %v1072, %v1071
  %v1117 = vpack.c.bf16 %v1074, %v1073
  %v1118 = vpack.c.bf16 %v1076, %v1075
  %v1119 = vpack.c.bf16 %v1078, %v1077
  %v1120 = vpack.c.bf16 %v1080, %v1079
  %v1121 = vpack.c.bf16 %v1082, %v1081
  %v1122 = vpack.c.bf16 %v1084, %v1083
  %v1123 = vpack.c.bf16 %v1086, %v1085
  %v1124 = vpack.c.bf16 %v1088, %v1087
  %v1125 = vpack.c.bf16 %v1090, %v1089
  %v1126 = vpack.c.bf16 %v1092, %v1091
  %v1127 = vpack.c.bf16 %v1094, %v1093
  %v1128 = vpack.c.bf16 %v1096, %v1095
  %s1129 = scalar_lea.vmem %s3, 4
  %v1130 = vld [vmem:[%s1129] sm:$0xf]
  %v1131 = vld [vmem:[%s3] sm:$0xf]
  %v1164 = vunpack.c.l.b16 %v1097
  %v1165 = vunpack.c.h.b16 %v1097
  %v1166 = vunpack.c.l.b16 %v1098
  %v1167 = vunpack.c.h.b16 %v1098
  %v1168 = vunpack.c.l.b16 %v1099
  %v1169 = vunpack.c.h.b16 %v1099
  %v1170 = vunpack.c.l.b16 %v1100
  %v1171 = vunpack.c.h.b16 %v1100
  %v1172 = vunpack.c.l.b16 %v1101
  %v1173 = vunpack.c.h.b16 %v1101
  %v1174 = vunpack.c.l.b16 %v1102
  %v1175 = vunpack.c.h.b16 %v1102
  %v1176 = vunpack.c.l.b16 %v1103
  %v1177 = vunpack.c.h.b16 %v1103
  %v1178 = vunpack.c.l.b16 %v1104
  %v1179 = vunpack.c.h.b16 %v1104
  %v1180 = vunpack.c.l.b16 %v1105
  %v1181 = vunpack.c.h.b16 %v1105
  %v1182 = vunpack.c.l.b16 %v1106
  %v1183 = vunpack.c.h.b16 %v1106
  %v1184 = vunpack.c.l.b16 %v1107
  %v1185 = vunpack.c.h.b16 %v1107
  %v1186 = vunpack.c.l.b16 %v1108
  %v1187 = vunpack.c.h.b16 %v1108
  %v1188 = vunpack.c.l.b16 %v1109
  %v1189 = vunpack.c.h.b16 %v1109
  %v1190 = vunpack.c.l.b16 %v1110
  %v1191 = vunpack.c.h.b16 %v1110
  %v1192 = vunpack.c.l.b16 %v1111
  %v1193 = vunpack.c.h.b16 %v1111
  %v1194 = vunpack.c.l.b16 %v1112
  %v1195 = vunpack.c.h.b16 %v1112
  %v1196 = vunpack.c.l.b16 %v1113
  %v1197 = vunpack.c.h.b16 %v1113
  %v1198 = vunpack.c.l.b16 %v1114
  %v1199 = vunpack.c.h.b16 %v1114
  %v1200 = vunpack.c.l.b16 %v1115
  %v1201 = vunpack.c.h.b16 %v1115
  %v1202 = vunpack.c.l.b16 %v1116
  %v1203 = vunpack.c.h.b16 %v1116
  %v1204 = vunpack.c.l.b16 %v1117
  %v1205 = vunpack.c.h.b16 %v1117
  %v1206 = vunpack.c.l.b16 %v1118
  %v1207 = vunpack.c.h.b16 %v1118
  %v1208 = vunpack.c.l.b16 %v1119
  %v1209 = vunpack.c.h.b16 %v1119
  %v1210 = vunpack.c.l.b16 %v1120
  %v1211 = vunpack.c.h.b16 %v1120
  %v1212 = vunpack.c.l.b16 %v1121
  %v1213 = vunpack.c.h.b16 %v1121
  %v1214 = vunpack.c.l.b16 %v1122
  %v1215 = vunpack.c.h.b16 %v1122
  %v1216 = vunpack.c.l.b16 %v1123
  %v1217 = vunpack.c.h.b16 %v1123
  %v1218 = vunpack.c.l.b16 %v1124
  %v1219 = vunpack.c.h.b16 %v1124
  %v1220 = vunpack.c.l.b16 %v1125
  %v1221 = vunpack.c.h.b16 %v1125
  %v1222 = vunpack.c.l.b16 %v1126
  %v1223 = vunpack.c.h.b16 %v1126
  %v1224 = vunpack.c.l.b16 %v1127
  %v1225 = vunpack.c.h.b16 %v1127
  %v1226 = vunpack.c.l.b16 %v1128
  %v1227 = vunpack.c.h.b16 %v1128
  %1228 = vset.pattern.permute.xlu0 0
  %1229 = vperm.xlu0 %1228, %v1164
  %v1230 = vpop.permute.xlu0 %1229
  %1231 = vset.pattern.permute.xlu0 0
  %1232 = vperm.xlu0 %1231, %v1165
  %v1233 = vpop.permute.xlu0 %1232
  %1234 = vset.pattern.permute.xlu0 0
  %1235 = vperm.xlu0 %1234, %v1166
  %v1236 = vpop.permute.xlu0 %1235
  %1237 = vset.pattern.permute.xlu0 0
  %1238 = vperm.xlu0 %1237, %v1167
  %v1239 = vpop.permute.xlu0 %1238
  %1240 = vset.pattern.permute.xlu0 0
  %1241 = vperm.xlu0 %1240, %v1168
  %v1242 = vpop.permute.xlu0 %1241
  %1243 = vset.pattern.permute.xlu0 0
  %1244 = vperm.xlu0 %1243, %v1169
  %v1245 = vpop.permute.xlu0 %1244
  %1246 = vset.pattern.permute.xlu0 0
  %1247 = vperm.xlu0 %1246, %v1170
  %v1248 = vpop.permute.xlu0 %1247
  %1249 = vset.pattern.permute.xlu0 0
  %1250 = vperm.xlu0 %1249, %v1171
  %v1251 = vpop.permute.xlu0 %1250
  %1252 = vset.pattern.permute.xlu0 0
  %1253 = vperm.xlu0 %1252, %v1172
  %v1254 = vpop.permute.xlu0 %1253
  %1255 = vset.pattern.permute.xlu0 0
  %1256 = vperm.xlu0 %1255, %v1173
  %v1257 = vpop.permute.xlu0 %1256
  %1258 = vset.pattern.permute.xlu0 0
  %1259 = vperm.xlu0 %1258, %v1174
  %v1260 = vpop.permute.xlu0 %1259
  %1261 = vset.pattern.permute.xlu0 0
  %1262 = vperm.xlu0 %1261, %v1175
  %v1263 = vpop.permute.xlu0 %1262
  %1264 = vset.pattern.permute.xlu0 0
  %1265 = vperm.xlu0 %1264, %v1176
  %v1266 = vpop.permute.xlu0 %1265
  %1267 = vset.pattern.permute.xlu0 0
  %1268 = vperm.xlu0 %1267, %v1177
  %v1269 = vpop.permute.xlu0 %1268
  %1270 = vset.pattern.permute.xlu0 0
  %1271 = vperm.xlu0 %1270, %v1178
  %v1272 = vpop.permute.xlu0 %1271
  %1273 = vset.pattern.permute.xlu0 0
  %1274 = vperm.xlu0 %1273, %v1179
  %v1275 = vpop.permute.xlu0 %1274
  %1276 = vset.pattern.permute.xlu0 0
  %1277 = vperm.xlu0 %1276, %v1180
  %v1278 = vpop.permute.xlu0 %1277
  %1279 = vset.pattern.permute.xlu0 0
  %1280 = vperm.xlu0 %1279, %v1181
  %v1281 = vpop.permute.xlu0 %1280
  %1282 = vset.pattern.permute.xlu0 0
  %1283 = vperm.xlu0 %1282, %v1182
  %v1284 = vpop.permute.xlu0 %1283
  %1285 = vset.pattern.permute.xlu0 0
  %1286 = vperm.xlu0 %1285, %v1183
  %v1287 = vpop.permute.xlu0 %1286
  %1288 = vset.pattern.permute.xlu0 0
  %1289 = vperm.xlu0 %1288, %v1184
  %v1290 = vpop.permute.xlu0 %1289
  %1291 = vset.pattern.permute.xlu0 0
  %1292 = vperm.xlu0 %1291, %v1185
  %v1293 = vpop.permute.xlu0 %1292
  %1294 = vset.pattern.permute.xlu0 0
  %1295 = vperm.xlu0 %1294, %v1186
  %v1296 = vpop.permute.xlu0 %1295
  %1297 = vset.pattern.permute.xlu0 0
  %1298 = vperm.xlu0 %1297, %v1187
  %v1299 = vpop.permute.xlu0 %1298
  %1300 = vset.pattern.permute.xlu0 0
  %1301 = vperm.xlu0 %1300, %v1188
  %v1302 = vpop.permute.xlu0 %1301
  %1303 = vset.pattern.permute.xlu0 0
  %1304 = vperm.xlu0 %1303, %v1189
  %v1305 = vpop.permute.xlu0 %1304
  %1306 = vset.pattern.permute.xlu0 0
  %1307 = vperm.xlu0 %1306, %v1190
  %v1308 = vpop.permute.xlu0 %1307
  %1309 = vset.pattern.permute.xlu0 0
  %1310 = vperm.xlu0 %1309, %v1191
  %v1311 = vpop.permute.xlu0 %1310
  %1312 = vset.pattern.permute.xlu0 0
  %1313 = vperm.xlu0 %1312, %v1192
  %v1314 = vpop.permute.xlu0 %1313
  %1315 = vset.pattern.permute.xlu0 0
  %1316 = vperm.xlu0 %1315, %v1193
  %v1317 = vpop.permute.xlu0 %1316
  %1318 = vset.pattern.permute.xlu0 0
  %1319 = vperm.xlu0 %1318, %v1194
  %v1320 = vpop.permute.xlu0 %1319
  %1321 = vset.pattern.permute.xlu0 0
  %1322 = vperm.xlu0 %1321, %v1195
  %v1323 = vpop.permute.xlu0 %1322
  %1324 = vset.pattern.permute.xlu0 0
  %1325 = vperm.xlu0 %1324, %v1196
  %v1326 = vpop.permute.xlu0 %1325
  %1327 = vset.pattern.permute.xlu0 0
  %1328 = vperm.xlu0 %1327, %v1197
  %v1329 = vpop.permute.xlu0 %1328
  %1330 = vset.pattern.permute.xlu0 0
  %1331 = vperm.xlu0 %1330, %v1198
  %v1332 = vpop.permute.xlu0 %1331
  %1333 = vset.pattern.permute.xlu0 0
  %1334 = vperm.xlu0 %1333, %v1199
  %v1335 = vpop.permute.xlu0 %1334
  %1336 = vset.pattern.permute.xlu0 0
  %1337 = vperm.xlu0 %1336, %v1200
  %v1338 = vpop.permute.xlu0 %1337
  %1339 = vset.pattern.permute.xlu0 0
  %1340 = vperm.xlu0 %1339, %v1201
  %v1341 = vpop.permute.xlu0 %1340
  %1342 = vset.pattern.permute.xlu0 0
  %1343 = vperm.xlu0 %1342, %v1202
  %v1344 = vpop.permute.xlu0 %1343
  %1345 = vset.pattern.permute.xlu0 0
  %1346 = vperm.xlu0 %1345, %v1203
  %v1347 = vpop.permute.xlu0 %1346
  %1348 = vset.pattern.permute.xlu0 0
  %1349 = vperm.xlu0 %1348, %v1204
  %v1350 = vpop.permute.xlu0 %1349
  %1351 = vset.pattern.permute.xlu0 0
  %1352 = vperm.xlu0 %1351, %v1205
  %v1353 = vpop.permute.xlu0 %1352
  %1354 = vset.pattern.permute.xlu0 0
  %1355 = vperm.xlu0 %1354, %v1206
  %v1356 = vpop.permute.xlu0 %1355
  %1357 = vset.pattern.permute.xlu0 0
  %1358 = vperm.xlu0 %1357, %v1207
  %v1359 = vpop.permute.xlu0 %1358
  %1360 = vset.pattern.permute.xlu0 0
  %1361 = vperm.xlu0 %1360, %v1208
  %v1362 = vpop.permute.xlu0 %1361
  %1363 = vset.pattern.permute.xlu0 0
  %1364 = vperm.xlu0 %1363, %v1209
  %v1365 = vpop.permute.xlu0 %1364
  %1366 = vset.pattern.permute.xlu0 0
  %1367 = vperm.xlu0 %1366, %v1210
  %v1368 = vpop.permute.xlu0 %1367
  %1369 = vset.pattern.permute.xlu0 0
  %1370 = vperm.xlu0 %1369, %v1211
  %v1371 = vpop.permute.xlu0 %1370
  %1372 = vset.pattern.permute.xlu0 0
  %1373 = vperm.xlu0 %1372, %v1212
  %v1374 = vpop.permute.xlu0 %1373
  %1375 = vset.pattern.permute.xlu0 0
  %1376 = vperm.xlu0 %1375, %v1213
  %v1377 = vpop.permute.xlu0 %1376
  %1378 = vset.pattern.permute.xlu0 0
  %1379 = vperm.xlu0 %1378, %v1214
  %v1380 = vpop.permute.xlu0 %1379
  %1381 = vset.pattern.permute.xlu0 0
  %1382 = vperm.xlu0 %1381, %v1215
  %v1383 = vpop.permute.xlu0 %1382
  %1384 = vset.pattern.permute.xlu0 0
  %1385 = vperm.xlu0 %1384, %v1216
  %v1386 = vpop.permute.xlu0 %1385
  %1387 = vset.pattern.permute.xlu0 0
  %1388 = vperm.xlu0 %1387, %v1217
  %v1389 = vpop.permute.xlu0 %1388
  %1390 = vset.pattern.permute.xlu0 0
  %1391 = vperm.xlu0 %1390, %v1218
  %v1392 = vpop.permute.xlu0 %1391
  %1393 = vset.pattern.permute.xlu0 0
  %1394 = vperm.xlu0 %1393, %v1219
  %v1395 = vpop.permute.xlu0 %1394
  %1396 = vset.pattern.permute.xlu0 0
  %1397 = vperm.xlu0 %1396, %v1220
  %v1398 = vpop.permute.xlu0 %1397
  %1399 = vset.pattern.permute.xlu0 0
  %1400 = vperm.xlu0 %1399, %v1221
  %v1401 = vpop.permute.xlu0 %1400
  %1402 = vset.pattern.permute.xlu0 0
  %1403 = vperm.xlu0 %1402, %v1222
  %v1404 = vpop.permute.xlu0 %1403
  %1405 = vset.pattern.permute.xlu0 0
  %1406 = vperm.xlu0 %1405, %v1223
  %v1407 = vpop.permute.xlu0 %1406
  %1408 = vset.pattern.permute.xlu0 0
  %1409 = vperm.xlu0 %1408, %v1224
  %v1410 = vpop.permute.xlu0 %1409
  %1411 = vset.pattern.permute.xlu0 0
  %1412 = vperm.xlu0 %1411, %v1225
  %v1413 = vpop.permute.xlu0 %1412
  %1414 = vset.pattern.permute.xlu0 0
  %1415 = vperm.xlu0 %1414, %v1226
  %v1416 = vpop.permute.xlu0 %1415
  %1417 = vset.pattern.permute.xlu0 0
  %1418 = vperm.xlu0 %1417, %v1227
  %v1419 = vpop.permute.xlu0 %1418
  %v1420 = vlaneseq
  %v1421 = vshrl.u32 %v1420, 7
  %v1422 = vsub.s32 %v31, %v1421
  %v1423 = vrot.slane %v1230, %v1422
  %v1424 = vlaneseq
  %v1425 = vshrl.u32 %v1424, 7
  %v1426 = vsub.s32 %v438, %v1425
  %v1427 = vrot.slane %v1233, %v1426
  %v1428 = vsel %vm443, %v1427, %v1423
  %v1429 = vlaneseq
  %v1430 = vshrl.u32 %v1429, 7
  %v1431 = vsub.s32 %v31, %v1430
  %v1432 = vrot.slane %v1236, %v1431
  %v1433 = vlaneseq
  %v1434 = vshrl.u32 %v1433, 7
  %v1435 = vsub.s32 %v438, %v1434
  %v1436 = vrot.slane %v1239, %v1435
  %v1437 = vsel %vm443, %v1436, %v1432
  %v1438 = vlaneseq
  %v1439 = vshrl.u32 %v1438, 7
  %v1440 = vsub.s32 %v31, %v1439
  %v1441 = vrot.slane %v1242, %v1440
  %v1442 = vlaneseq
  %v1443 = vshrl.u32 %v1442, 7
  %v1444 = vsub.s32 %v438, %v1443
  %v1445 = vrot.slane %v1245, %v1444
  %v1446 = vsel %vm443, %v1445, %v1441
  %v1447 = vlaneseq
  %v1448 = vshrl.u32 %v1447, 7
  %v1449 = vsub.s32 %v31, %v1448
  %v1450 = vrot.slane %v1248, %v1449
  %v1451 = vlaneseq
  %v1452 = vshrl.u32 %v1451, 7
  %v1453 = vsub.s32 %v438, %v1452
  %v1454 = vrot.slane %v1251, %v1453
  %v1455 = vsel %vm443, %v1454, %v1450
  %v1456 = vlaneseq
  %v1457 = vshrl.u32 %v1456, 7
  %v1458 = vsub.s32 %v31, %v1457
  %v1459 = vrot.slane %v1254, %v1458
  %v1460 = vlaneseq
  %v1461 = vshrl.u32 %v1460, 7
  %v1462 = vsub.s32 %v438, %v1461
  %v1463 = vrot.slane %v1257, %v1462
  %v1464 = vsel %vm443, %v1463, %v1459
  %v1465 = vlaneseq
  %v1466 = vshrl.u32 %v1465, 7
  %v1467 = vsub.s32 %v31, %v1466
  %v1468 = vrot.slane %v1260, %v1467
  %v1469 = vlaneseq
  %v1470 = vshrl.u32 %v1469, 7
  %v1471 = vsub.s32 %v438, %v1470
  %v1472 = vrot.slane %v1263, %v1471
  %v1473 = vsel %vm443, %v1472, %v1468
  %v1474 = vlaneseq
  %v1475 = vshrl.u32 %v1474, 7
  %v1476 = vsub.s32 %v31, %v1475
  %v1477 = vrot.slane %v1266, %v1476
  %v1478 = vlaneseq
  %v1479 = vshrl.u32 %v1478, 7
  %v1480 = vsub.s32 %v438, %v1479
  %v1481 = vrot.slane %v1269, %v1480
  %v1482 = vsel %vm443, %v1481, %v1477
  %v1483 = vlaneseq
  %v1484 = vshrl.u32 %v1483, 7
  %v1485 = vsub.s32 %v31, %v1484
  %v1486 = vrot.slane %v1272, %v1485
  %v1487 = vlaneseq
  %v1488 = vshrl.u32 %v1487, 7
  %v1489 = vsub.s32 %v438, %v1488
  %v1490 = vrot.slane %v1275, %v1489
  %v1491 = vsel %vm443, %v1490, %v1486
  %v1492 = vlaneseq
  %v1493 = vshrl.u32 %v1492, 7
  %v1494 = vsub.s32 %v31, %v1493
  %v1495 = vrot.slane %v1278, %v1494
  %v1496 = vlaneseq
  %v1497 = vshrl.u32 %v1496, 7
  %v1498 = vsub.s32 %v438, %v1497
  %v1499 = vrot.slane %v1281, %v1498
  %v1500 = vsel %vm443, %v1499, %v1495
  %v1501 = vlaneseq
  %v1502 = vshrl.u32 %v1501, 7
  %v1503 = vsub.s32 %v31, %v1502
  %v1504 = vrot.slane %v1284, %v1503
  %v1505 = vlaneseq
  %v1506 = vshrl.u32 %v1505, 7
  %v1507 = vsub.s32 %v438, %v1506
  %v1508 = vrot.slane %v1287, %v1507
  %v1509 = vsel %vm443, %v1508, %v1504
  %v1510 = vlaneseq
  %v1511 = vshrl.u32 %v1510, 7
  %v1512 = vsub.s32 %v31, %v1511
  %v1513 = vrot.slane %v1290, %v1512
  %v1514 = vlaneseq
  %v1515 = vshrl.u32 %v1514, 7
  %v1516 = vsub.s32 %v438, %v1515
  %v1517 = vrot.slane %v1293, %v1516
  %v1518 = vsel %vm443, %v1517, %v1513
  %v1519 = vlaneseq
  %v1520 = vshrl.u32 %v1519, 7
  %v1521 = vsub.s32 %v31, %v1520
  %v1522 = vrot.slane %v1296, %v1521
  %v1523 = vlaneseq
  %v1524 = vshrl.u32 %v1523, 7
  %v1525 = vsub.s32 %v438, %v1524
  %v1526 = vrot.slane %v1299, %v1525
  %v1527 = vsel %vm443, %v1526, %v1522
  %v1528 = vlaneseq
  %v1529 = vshrl.u32 %v1528, 7
  %v1530 = vsub.s32 %v31, %v1529
  %v1531 = vrot.slane %v1302, %v1530
  %v1532 = vlaneseq
  %v1533 = vshrl.u32 %v1532, 7
  %v1534 = vsub.s32 %v438, %v1533
  %v1535 = vrot.slane %v1305, %v1534
  %v1536 = vsel %vm443, %v1535, %v1531
  %v1537 = vlaneseq
  %v1538 = vshrl.u32 %v1537, 7
  %v1539 = vsub.s32 %v31, %v1538
  %v1540 = vrot.slane %v1308, %v1539
  %v1541 = vlaneseq
  %v1542 = vshrl.u32 %v1541, 7
  %v1543 = vsub.s32 %v438, %v1542
  %v1544 = vrot.slane %v1311, %v1543
  %v1545 = vsel %vm443, %v1544, %v1540
  %v1546 = vlaneseq
  %v1547 = vshrl.u32 %v1546, 7
  %v1548 = vsub.s32 %v31, %v1547
  %v1549 = vrot.slane %v1314, %v1548
  %v1550 = vlaneseq
  %v1551 = vshrl.u32 %v1550, 7
  %v1552 = vsub.s32 %v438, %v1551
  %v1553 = vrot.slane %v1317, %v1552
  %v1554 = vsel %vm443, %v1553, %v1549
  %v1555 = vlaneseq
  %v1556 = vshrl.u32 %v1555, 7
  %v1557 = vsub.s32 %v31, %v1556
  %v1558 = vrot.slane %v1320, %v1557
  %v1559 = vlaneseq
  %v1560 = vshrl.u32 %v1559, 7
  %v1561 = vsub.s32 %v438, %v1560
  %v1562 = vrot.slane %v1323, %v1561
  %v1563 = vsel %vm443, %v1562, %v1558
  %v1564 = vlaneseq
  %v1565 = vshrl.u32 %v1564, 7
  %v1566 = vsub.s32 %v31, %v1565
  %v1567 = vrot.slane %v1326, %v1566
  %v1568 = vlaneseq
  %v1569 = vshrl.u32 %v1568, 7
  %v1570 = vsub.s32 %v438, %v1569
  %v1571 = vrot.slane %v1329, %v1570
  %v1572 = vsel %vm443, %v1571, %v1567
  %v1573 = vlaneseq
  %v1574 = vshrl.u32 %v1573, 7
  %v1575 = vsub.s32 %v31, %v1574
  %v1576 = vrot.slane %v1332, %v1575
  %v1577 = vlaneseq
  %v1578 = vshrl.u32 %v1577, 7
  %v1579 = vsub.s32 %v438, %v1578
  %v1580 = vrot.slane %v1335, %v1579
  %v1581 = vsel %vm443, %v1580, %v1576
  %v1582 = vlaneseq
  %v1583 = vshrl.u32 %v1582, 7
  %v1584 = vsub.s32 %v31, %v1583
  %v1585 = vrot.slane %v1338, %v1584
  %v1586 = vlaneseq
  %v1587 = vshrl.u32 %v1586, 7
  %v1588 = vsub.s32 %v438, %v1587
  %v1589 = vrot.slane %v1341, %v1588
  %v1590 = vsel %vm443, %v1589, %v1585
  %v1591 = vlaneseq
  %v1592 = vshrl.u32 %v1591, 7
  %v1593 = vsub.s32 %v31, %v1592
  %v1594 = vrot.slane %v1344, %v1593
  %v1595 = vlaneseq
  %v1596 = vshrl.u32 %v1595, 7
  %v1597 = vsub.s32 %v438, %v1596
  %v1598 = vrot.slane %v1347, %v1597
  %v1599 = vsel %vm443, %v1598, %v1594
  %v1600 = vlaneseq
  %v1601 = vshrl.u32 %v1600, 7
  %v1602 = vsub.s32 %v31, %v1601
  %v1603 = vrot.slane %v1350, %v1602
  %v1604 = vlaneseq
  %v1605 = vshrl.u32 %v1604, 7
  %v1606 = vsub.s32 %v438, %v1605
  %v1607 = vrot.slane %v1353, %v1606
  %v1608 = vsel %vm443, %v1607, %v1603
  %v1609 = vlaneseq
  %v1610 = vshrl.u32 %v1609, 7
  %v1611 = vsub.s32 %v31, %v1610
  %v1612 = vrot.slane %v1356, %v1611
  %v1613 = vlaneseq
  %v1614 = vshrl.u32 %v1613, 7
  %v1615 = vsub.s32 %v438, %v1614
  %v1616 = vrot.slane %v1359, %v1615
  %v1617 = vsel %vm443, %v1616, %v1612
  %v1618 = vlaneseq
  %v1619 = vshrl.u32 %v1618, 7
  %v1620 = vsub.s32 %v31, %v1619
  %v1621 = vrot.slane %v1362, %v1620
  %v1622 = vlaneseq
  %v1623 = vshrl.u32 %v1622, 7
  %v1624 = vsub.s32 %v438, %v1623
  %v1625 = vrot.slane %v1365, %v1624
  %v1626 = vsel %vm443, %v1625, %v1621
  %v1627 = vlaneseq
  %v1628 = vshrl.u32 %v1627, 7
  %v1629 = vsub.s32 %v31, %v1628
  %v1630 = vrot.slane %v1368, %v1629
  %v1631 = vlaneseq
  %v1632 = vshrl.u32 %v1631, 7
  %v1633 = vsub.s32 %v438, %v1632
  %v1634 = vrot.slane %v1371, %v1633
  %v1635 = vsel %vm443, %v1634, %v1630
  %v1636 = vlaneseq
  %v1637 = vshrl.u32 %v1636, 7
  %v1638 = vsub.s32 %v31, %v1637
  %v1639 = vrot.slane %v1374, %v1638
  %v1640 = vlaneseq
  %v1641 = vshrl.u32 %v1640, 7
  %v1642 = vsub.s32 %v438, %v1641
  %v1643 = vrot.slane %v1377, %v1642
  %v1644 = vsel %vm443, %v1643, %v1639
  %v1645 = vlaneseq
  %v1646 = vshrl.u32 %v1645, 7
  %v1647 = vsub.s32 %v31, %v1646
  %v1648 = vrot.slane %v1380, %v1647
  %v1649 = vlaneseq
  %v1650 = vshrl.u32 %v1649, 7
  %v1651 = vsub.s32 %v438, %v1650
  %v1652 = vrot.slane %v1383, %v1651
  %v1653 = vsel %vm443, %v1652, %v1648
  %v1654 = vlaneseq
  %v1655 = vshrl.u32 %v1654, 7
  %v1656 = vsub.s32 %v31, %v1655
  %v1657 = vrot.slane %v1386, %v1656
  %v1658 = vlaneseq
  %v1659 = vshrl.u32 %v1658, 7
  %v1660 = vsub.s32 %v438, %v1659
  %v1661 = vrot.slane %v1389, %v1660
  %v1662 = vsel %vm443, %v1661, %v1657
  %v1663 = vlaneseq
  %v1664 = vshrl.u32 %v1663, 7
  %v1665 = vsub.s32 %v31, %v1664
  %v1666 = vrot.slane %v1392, %v1665
  %v1667 = vlaneseq
  %v1668 = vshrl.u32 %v1667, 7
  %v1669 = vsub.s32 %v438, %v1668
  %v1670 = vrot.slane %v1395, %v1669
  %v1671 = vsel %vm443, %v1670, %v1666
  %v1672 = vlaneseq
  %v1673 = vshrl.u32 %v1672, 7
  %v1674 = vsub.s32 %v31, %v1673
  %v1675 = vrot.slane %v1398, %v1674
  %v1676 = vlaneseq
  %v1677 = vshrl.u32 %v1676, 7
  %v1678 = vsub.s32 %v438, %v1677
  %v1679 = vrot.slane %v1401, %v1678
  %v1680 = vsel %vm443, %v1679, %v1675
  %v1681 = vlaneseq
  %v1682 = vshrl.u32 %v1681, 7
  %v1683 = vsub.s32 %v31, %v1682
  %v1684 = vrot.slane %v1404, %v1683
  %v1685 = vlaneseq
  %v1686 = vshrl.u32 %v1685, 7
  %v1687 = vsub.s32 %v438, %v1686
  %v1688 = vrot.slane %v1407, %v1687
  %v1689 = vsel %vm443, %v1688, %v1684
  %v1690 = vlaneseq
  %v1691 = vshrl.u32 %v1690, 7
  %v1692 = vsub.s32 %v31, %v1691
  %v1693 = vrot.slane %v1410, %v1692
  %v1694 = vlaneseq
  %v1695 = vshrl.u32 %v1694, 7
  %v1696 = vsub.s32 %v438, %v1695
  %v1697 = vrot.slane %v1413, %v1696
  %v1698 = vsel %vm443, %v1697, %v1693
  %v1699 = vlaneseq
  %v1700 = vshrl.u32 %v1699, 7
  %v1701 = vsub.s32 %v31, %v1700
  %v1702 = vrot.slane %v1416, %v1701
  %v1703 = vlaneseq
  %v1704 = vshrl.u32 %v1703, 7
  %v1705 = vsub.s32 %v438, %v1704
  %v1706 = vrot.slane %v1419, %v1705
  %v1707 = vsel %vm443, %v1706, %v1702
  %v1708 = vsel %vm724, %v1437, %v1428
  %v1709 = vsel %vm726, %v1446, %v1708
  %v1710 = vsel %vm728, %v1455, %v1709
  %v1711 = vsel %vm730, %v1464, %v1710
  %v1712 = vsel %vm732, %v1473, %v1711
  %v1713 = vsel %vm734, %v1482, %v1712
  %v1714 = vsel %vm736, %v1491, %v1713
  %v1715 = vsel %vm724, %v1509, %v1500
  %v1716 = vsel %vm726, %v1518, %v1715
  %v1717 = vsel %vm728, %v1527, %v1716
  %v1718 = vsel %vm730, %v1536, %v1717
  %v1719 = vsel %vm732, %v1545, %v1718
  %v1720 = vsel %vm734, %v1554, %v1719
  %v1721 = vsel %vm736, %v1563, %v1720
  %v1722 = vsel %vm724, %v1581, %v1572
  %v1723 = vsel %vm726, %v1590, %v1722
  %v1724 = vsel %vm728, %v1599, %v1723
  %v1725 = vsel %vm730, %v1608, %v1724
  %v1726 = vsel %vm732, %v1617, %v1725
  %v1727 = vsel %vm734, %v1626, %v1726
  %v1728 = vsel %vm736, %v1635, %v1727
  %v1729 = vsel %vm724, %v1653, %v1644
  %v1730 = vsel %vm726, %v1662, %v1729
  %v1731 = vsel %vm728, %v1671, %v1730
  %v1732 = vsel %vm730, %v1680, %v1731
  %v1733 = vsel %vm732, %v1689, %v1732
  %v1734 = vsel %vm734, %v1698, %v1733
  %v1735 = vsel %vm736, %v1707, %v1734
  %v1736 = vpack.c.b16 %v1721, %v1714
  %v1737 = vpack.c.b16 %v1735, %v1728
  %v1741 = vsel %vm801, %v1131, 0
  %1743 = vmatprep.subr.bf16.mxu0 0
  %1744 = vmatpush1.bf16.msra.mxu0 %v1736
  %1745 = vmatprep.subr.bf16.mxu0 0
  %1746 = vmatpush1.bf16.msra.mxu0 %v1737
  %1747 = vmatprep.subr.bf16.mxu0 0
  %1748 = vmatpush1.bf16.msra.mxu0 0
  %1749 = vmatprep.subr.bf16.mxu0 0
  %1750 = vmatpush1.bf16.msra.mxu0 0
  %1751 = vmatprep.subr.bf16.mxu0 0
  %1752 = vmatpush1.bf16.msra.mxu0 0
  %1753 = vmatprep.subr.bf16.mxu0 0
  %1754 = vmatpush1.bf16.msra.mxu0 0
  %1755 = vmatprep.subr.bf16.mxu0 0
  %1756 = vmatpush1.bf16.msra.mxu0 0
  %1757 = vmatprep.subr.bf16.mxu0 0
  %1758 = vmatpush1.bf16.msra.mxu0 0
  %1759 = vmatprep.subr.bf16.mxu0 0
  %1760 = vmatpush1.bf16.msra.mxu0 0
  %1761 = vmatprep.subr.bf16.mxu0 0
  %1762 = vmatpush1.bf16.msra.mxu0 0
  %1763 = vmatprep.subr.bf16.mxu0 0
  %1764 = vmatpush1.bf16.msra.mxu0 0
  %1765 = vmatprep.subr.bf16.mxu0 0
  %1766 = vmatpush1.bf16.msra.mxu0 0
  %1767 = vmatprep.subr.bf16.mxu0 0
  %1768 = vmatpush1.bf16.msra.mxu0 0
  %1769 = vmatprep.subr.bf16.mxu0 0
  %1770 = vmatpush1.bf16.msra.mxu0 0
  %1771 = vmatprep.subr.bf16.mxu0 0
  %1772 = vmatpush1.bf16.msra.mxu0 0
  %1773 = vmatprep.subr.bf16.mxu0 0
  %1774 = vmatpush1.bf16.msra.mxu0 0
  %1775 = vmatprep.mubr.bf16.mxu0 0
  %1776 = vmatmul.mubr.bf16.gmra.mrb[0].mxu0 %v1741
  %v1777 = vpop.f32.mrb[0].mxu0
  %v1778 = vadd.f32 0.0, %v1777
  %v1779 = vpop.f32.mrb[0].mxu0
  %v1780 = vpop.f32.mrb[0].mxu0
  %v1781 = vpop.f32.mrb[0].mxu0
  %1782 = vdwg.mxu0
  %v1783 = vpack.c.bf16 %v1778, %v1778
  %v1785 = vsel %vm763, %v1783, 0
  %1787 = vmatprep.subr.bf16.mxu0 0
  %1788 = vmatpush1.bf16.msra.mxu0 %v47
  %1789 = vmatprep.subr.bf16.mxu0 0
  %1790 = vmatpush1.bf16.msra.mxu0 0
  %1791 = vmatprep.subr.bf16.mxu0 0
  %1792 = vmatpush1.bf16.msra.mxu0 0
  %1793 = vmatprep.subr.bf16.mxu0 0
  %1794 = vmatpush1.bf16.msra.mxu0 0
  %1795 = vmatprep.subr.bf16.mxu0 0
  %1796 = vmatpush1.bf16.msra.mxu0 0
  %1797 = vmatprep.subr.bf16.mxu0 0
  %1798 = vmatpush1.bf16.msra.mxu0 0
  %1799 = vmatprep.subr.bf16.mxu0 0
  %1800 = vmatpush1.bf16.msra.mxu0 0
  %1801 = vmatprep.subr.bf16.mxu0 0
  %1802 = vmatpush1.bf16.msra.mxu0 0
  %1803 = vmatprep.subr.bf16.mxu0 0
  %1804 = vmatpush1.bf16.msra.mxu0 0
  %1805 = vmatprep.subr.bf16.mxu0 0
  %1806 = vmatpush1.bf16.msra.mxu0 0
  %1807 = vmatprep.subr.bf16.mxu0 0
  %1808 = vmatpush1.bf16.msra.mxu0 0
  %1809 = vmatprep.subr.bf16.mxu0 0
  %1810 = vmatpush1.bf16.msra.mxu0 0
  %1811 = vmatprep.subr.bf16.mxu0 0
  %1812 = vmatpush1.bf16.msra.mxu0 0
  %1813 = vmatprep.subr.bf16.mxu0 0
  %1814 = vmatpush1.bf16.msra.mxu0 0
  %1815 = vmatprep.subr.bf16.mxu0 0
  %1816 = vmatpush1.bf16.msra.mxu0 0
  %1817 = vmatprep.subr.bf16.mxu0 0
  %1818 = vmatpush1.bf16.msra.mxu0 0
  %1819 = vmatprep.mubr.bf16.mxu0 0
  %1820 = vmatmul.mubr.bf16.gmra.mrb[0].mxu0 %v1785
  %v1821 = vpop.f32.mrb[0].mxu0
  %v1822 = vadd.f32 0.0, %v1821
  %v1823 = vpop.f32.mrb[0].mxu0
  %v1824 = vpop.f32.mrb[0].mxu0
  %v1825 = vpop.f32.mrb[0].mxu0
  %1826 = vdwg.mxu0
  %v1828 = vsel %vm801, %v1130, 0
  %1830 = vmatprep.subr.bf16.mxu0 0
  %1831 = vmatpush1.bf16.msra.mxu0 %v1736
  %1832 = vmatprep.subr.bf16.mxu0 0
  %1833 = vmatpush1.bf16.msra.mxu0 %v1737
  %1834 = vmatprep.subr.bf16.mxu0 0
  %1835 = vmatpush1.bf16.msra.mxu0 0
  %1836 = vmatprep.subr.bf16.mxu0 0
  %1837 = vmatpush1.bf16.msra.mxu0 0
  %1838 = vmatprep.subr.bf16.mxu0 0
  %1839 = vmatpush1.bf16.msra.mxu0 0
  %1840 = vmatprep.subr.bf16.mxu0 0
  %1841 = vmatpush1.bf16.msra.mxu0 0
  %1842 = vmatprep.subr.bf16.mxu0 0
  %1843 = vmatpush1.bf16.msra.mxu0 0
  %1844 = vmatprep.subr.bf16.mxu0 0
  %1845 = vmatpush1.bf16.msra.mxu0 0
  %1846 = vmatprep.subr.bf16.mxu0 0
  %1847 = vmatpush1.bf16.msra.mxu0 0
  %1848 = vmatprep.subr.bf16.mxu0 0
  %1849 = vmatpush1.bf16.msra.mxu0 0
  %1850 = vmatprep.subr.bf16.mxu0 0
  %1851 = vmatpush1.bf16.msra.mxu0 0
  %1852 = vmatprep.subr.bf16.mxu0 0
  %1853 = vmatpush1.bf16.msra.mxu0 0
  %1854 = vmatprep.subr.bf16.mxu0 0
  %1855 = vmatpush1.bf16.msra.mxu0 0
  %1856 = vmatprep.subr.bf16.mxu0 0
  %1857 = vmatpush1.bf16.msra.mxu0 0
  %1858 = vmatprep.subr.bf16.mxu0 0
  %1859 = vmatpush1.bf16.msra.mxu0 0
  %1860 = vmatprep.subr.bf16.mxu0 0
  %1861 = vmatpush1.bf16.msra.mxu0 0
  %1862 = vmatprep.mubr.bf16.mxu0 0
  %1863 = vmatmul.mubr.bf16.gmra.mrb[0].mxu0 %v1828
  %v1864 = vpop.f32.mrb[0].mxu0
  %v1865 = vadd.f32 %v1822, %v1864
  %v1866 = vpop.f32.mrb[0].mxu0
  %v1867 = vpop.f32.mrb[0].mxu0
  %v1868 = vpop.f32.mrb[0].mxu0
  %1869 = vdwg.mxu0
  %s1870 = scalar_lea.vmem %s3, 8
  %v1871 = vld [vmem:[%s1870] sm:$0xf]
  %v1873 = vsel %vm801, %v1871, 0
  %1875 = vmatprep.subr.bf16.mxu0 0
  %1876 = vmatpush1.bf16.msra.mxu0 %v1736
  %1877 = vmatprep.subr.bf16.mxu0 0
  %1878 = vmatpush1.bf16.msra.mxu0 %v1737
  %1879 = vmatprep.subr.bf16.mxu0 0
  %1880 = vmatpush1.bf16.msra.mxu0 0
  %1881 = vmatprep.subr.bf16.mxu0 0
  %1882 = vmatpush1.bf16.msra.mxu0 0
  %1883 = vmatprep.subr.bf16.mxu0 0
  %1884 = vmatpush1.bf16.msra.mxu0 0
  %1885 = vmatprep.subr.bf16.mxu0 0
  %1886 = vmatpush1.bf16.msra.mxu0 0
  %1887 = vmatprep.subr.bf16.mxu0 0
  %1888 = vmatpush1.bf16.msra.mxu0 0
  %1889 = vmatprep.subr.bf16.mxu0 0
  %1890 = vmatpush1.bf16.msra.mxu0 0
  %1891 = vmatprep.subr.bf16.mxu0 0
  %1892 = vmatpush1.bf16.msra.mxu0 0
  %1893 = vmatprep.subr.bf16.mxu0 0
  %1894 = vmatpush1.bf16.msra.mxu0 0
  %1895 = vmatprep.subr.bf16.mxu0 0
  %1896 = vmatpush1.bf16.msra.mxu0 0
  %1897 = vmatprep.subr.bf16.mxu0 0
  %1898 = vmatpush1.bf16.msra.mxu0 0
  %1899 = vmatprep.subr.bf16.mxu0 0
  %1900 = vmatpush1.bf16.msra.mxu0 0
  %1901 = vmatprep.subr.bf16.mxu0 0
  %1902 = vmatpush1.bf16.msra.mxu0 0
  %1903 = vmatprep.subr.bf16.mxu0 0
  %1904 = vmatpush1.bf16.msra.mxu0 0
  %1905 = vmatprep.subr.bf16.mxu0 0
  %1906 = vmatpush1.bf16.msra.mxu0 0
  %1907 = vmatprep.mubr.bf16.mxu0 0
  %1908 = vmatmul.mubr.bf16.gmra.mrb[0].mxu0 %v1873
  %v1909 = vpop.f32.mrb[0].mxu0
  %v1910 = vadd.f32 0.0, %v1909
  %v1911 = vpop.f32.mrb[0].mxu0
  %v1912 = vpop.f32.mrb[0].mxu0
  %v1913 = vpop.f32.mrb[0].mxu0
  %1914 = vdwg.mxu0
  %v1915 = vpack.c.bf16 %v1910, %v1910
  %v1917 = vsel %vm763, %v1915, 0
  %1919 = vmatprep.subr.bf16.mxu0 0
  %1920 = vmatpush1.bf16.msra.mxu0 %v39
  %1921 = vmatprep.subr.bf16.mxu0 0
  %1922 = vmatpush1.bf16.msra.mxu0 0
  %1923 = vmatprep.subr.bf16.mxu0 0
  %1924 = vmatpush1.bf16.msra.mxu0 0
  %1925 = vmatprep.subr.bf16.mxu0 0
  %1926 = vmatpush1.bf16.msra.mxu0 0
  %1927 = vmatprep.subr.bf16.mxu0 0
  %1928 = vmatpush1.bf16.msra.mxu0 0
  %1929 = vmatprep.subr.bf16.mxu0 0
  %1930 = vmatpush1.bf16.msra.mxu0 0
  %1931 = vmatprep.subr.bf16.mxu0 0
  %1932 = vmatpush1.bf16.msra.mxu0 0
  %1933 = vmatprep.subr.bf16.mxu0 0
  %1934 = vmatpush1.bf16.msra.mxu0 0
  %1935 = vmatprep.subr.bf16.mxu0 0
  %1936 = vmatpush1.bf16.msra.mxu0 0
  %1937 = vmatprep.subr.bf16.mxu0 0
  %1938 = vmatpush1.bf16.msra.mxu0 0
  %1939 = vmatprep.subr.bf16.mxu0 0
  %1940 = vmatpush1.bf16.msra.mxu0 0
  %1941 = vmatprep.subr.bf16.mxu0 0
  %1942 = vmatpush1.bf16.msra.mxu0 0
  %1943 = vmatprep.subr.bf16.mxu0 0
  %1944 = vmatpush1.bf16.msra.mxu0 0
  %1945 = vmatprep.subr.bf16.mxu0 0
  %1946 = vmatpush1.bf16.msra.mxu0 0
  %1947 = vmatprep.subr.bf16.mxu0 0
  %1948 = vmatpush1.bf16.msra.mxu0 0
  %1949 = vmatprep.subr.bf16.mxu0 0
  %1950 = vmatpush1.bf16.msra.mxu0 0
  %1951 = vmatprep.mubr.bf16.mxu0 0
  %1952 = vmatmul.mubr.bf16.gmra.mrb[0].mxu0 %v1917
  %v1953 = vpop.f32.mrb[0].mxu0
  %v1954 = vadd.f32 0.0, %v1953
  %v1955 = vpop.f32.mrb[0].mxu0
  %v1956 = vpop.f32.mrb[0].mxu0
  %v1957 = vpop.f32.mrb[0].mxu0
  %1958 = vdwg.mxu0
  %v1959 = vadd.f32 %v1865, %v1954
  %v1960 = vld [vmem:[%s4] sm:$0xff]
  %1962 = vset.pattern.permute.xlu0 0
  %1963 = vperm.xlu0 %1962, %v1960
  %v1964 = vpop.permute.xlu0 %1963
  %v1966 = vmul.f32 %v1959, %v1964
  %v1967 = vld [vmem:[%s5] sm:$0xff]
  %1969 = vset.pattern.permute.xlu0 0
  %1970 = vperm.xlu0 %1969, %v1967
  %v1971 = vpop.permute.xlu0 %1970
  %v1973 = vadd.f32 %v1966, %v1971
  %v1974 = vmax.f32 %v1973, 0.0
  %v1975 = vpack.c.bf16 %v1974, %v1974
  %s1976 = scalar_lea.vmem %s6, 16
  %v1977 = vld [vmem:[%s1976] sm:$0xf]
  %v1978 = vld [vmem:[%s1976 + $0x4] sm:$0xf]
  %v1979 = vld [vmem:[%s1976 + $0x8] sm:$0xf]
  %v1980 = vld [vmem:[%s1976 + $0xc] sm:$0xf]
  %v1981 = vld [vmem:[%s6] sm:$0xf]
  %v1982 = vld [vmem:[%s6 + $0x4] sm:$0xf]
  %v1983 = vld [vmem:[%s6 + $0x8] sm:$0xf]
  %v1984 = vld [vmem:[%s6 + $0xc] sm:$0xf]
  %v1989 = vunpack.c.l.b16 %v1981
  %v1990 = vunpack.c.l.b16 %v1982
  %v1991 = vunpack.c.l.b16 %v1983
  %v1992 = vunpack.c.l.b16 %v1984
  %v1993 = vpack.c.b16 %v1990, %v1989
  %v1994 = vpack.c.b16 %v1992, %v1991
  %v1996 = vsel %vm112, %v1993, 0
  %v1999 = vsel %vm112, %v1994, 0
  %vm2001 = vcmask 1043456
  %v2003 = vsel %vm2001, %v1975, 0
  %2005 = vmatprep.subr.bf16.mxu0 0
  %2006 = vmatpush1.bf16.msra.mxu0 %v2003
  %2007 = vmatprep.subr.bf16.mxu0 0
  %2008 = vmatpush1.bf16.msra.mxu0 0
  %2009 = vmatprep.subr.bf16.mxu0 0
  %2010 = vmatpush1.bf16.msra.mxu0 0
  %2011 = vmatprep.subr.bf16.mxu0 0
  %2012 = vmatpush1.bf16.msra.mxu0 0
  %2013 = vmatprep.subr.bf16.mxu0 0
  %2014 = vmatpush1.bf16.msra.mxu0 0
  %2015 = vmatprep.subr.bf16.mxu0 0
  %2016 = vmatpush1.bf16.msra.mxu0 0
  %2017 = vmatprep.subr.bf16.mxu0 0
  %2018 = vmatpush1.bf16.msra.mxu0 0
  %2019 = vmatprep.subr.bf16.mxu0 0
  %2020 = vmatpush1.bf16.msra.mxu0 0
  %2021 = vmatprep.subr.bf16.mxu0 0
  %2022 = vmatpush1.bf16.msra.mxu0 0
  %2023 = vmatprep.subr.bf16.mxu0 0
  %2024 = vmatpush1.bf16.msra.mxu0 0
  %2025 = vmatprep.subr.bf16.mxu0 0
  %2026 = vmatpush1.bf16.msra.mxu0 0
  %2027 = vmatprep.subr.bf16.mxu0 0
  %2028 = vmatpush1.bf16.msra.mxu0 0
  %2029 = vmatprep.subr.bf16.mxu0 0
  %2030 = vmatpush1.bf16.msra.mxu0 0
  %2031 = vmatprep.subr.bf16.mxu0 0
  %2032 = vmatpush1.bf16.msra.mxu0 0
  %2033 = vmatprep.subr.bf16.mxu0 0
  %2034 = vmatpush1.bf16.msra.mxu0 0
  %2035 = vmatprep.subr.bf16.mxu0 0
  %2036 = vmatpush1.bf16.msra.mxu0 0
  %2037 = vmatprep.mubr.bf16.mxu0 0
  %2038 = vmatmul.mubr.bf16.gmra.mrb[0].mxu0 %v1996
  %v2039 = vpop.f32.mrb[0].mxu0
  %v2040 = vadd.f32 0.0, %v2039
  %v2041 = vpop.f32.mrb[0].mxu0
  %v2042 = vpop.f32.mrb[0].mxu0
  %v2043 = vadd.f32 0.0, %v2042
  %v2044 = vpop.f32.mrb[0].mxu0
  %2045 = vmatprep.mubr.bf16.mxu0 0
  %2046 = vmatmul.mubr.bf16.gmra.mrb[0].mxu0 %v1999
  %v2047 = vpop.f32.mrb[0].mxu0
  %v2048 = vadd.f32 0.0, %v2047
  %v2049 = vpop.f32.mrb[0].mxu0
  %v2050 = vpop.f32.mrb[0].mxu0
  %v2051 = vadd.f32 0.0, %v2050
  %v2052 = vpop.f32.mrb[0].mxu0
  %2053 = vdwg.mxu0
  %v2054 = vpack.c.bf16 %v2043, %v2040
  %v2055 = vpack.c.bf16 %v2051, %v2048
  %v2057 = vsel %vm763, %v2054, 0
  %v2060 = vsel %vm763, %v2055, 0
  %2062 = vmatprep.subr.bf16.mxu0 0
  %2063 = vmatpush1.bf16.msra.mxu0 %v47
  %2064 = vmatprep.subr.bf16.mxu0 0
  %2065 = vmatpush1.bf16.msra.mxu0 0
  %2066 = vmatprep.subr.bf16.mxu0 0
  %2067 = vmatpush1.bf16.msra.mxu0 0
  %2068 = vmatprep.subr.bf16.mxu0 0
  %2069 = vmatpush1.bf16.msra.mxu0 0
  %2070 = vmatprep.subr.bf16.mxu0 0
  %2071 = vmatpush1.bf16.msra.mxu0 0
  %2072 = vmatprep.subr.bf16.mxu0 0
  %2073 = vmatpush1.bf16.msra.mxu0 0
  %2074 = vmatprep.subr.bf16.mxu0 0
  %2075 = vmatpush1.bf16.msra.mxu0 0
  %2076 = vmatprep.subr.bf16.mxu0 0
  %2077 = vmatpush1.bf16.msra.mxu0 0
  %2078 = vmatprep.subr.bf16.mxu0 0
  %2079 = vmatpush1.bf16.msra.mxu0 0
  %2080 = vmatprep.subr.bf16.mxu0 0
  %2081 = vmatpush1.bf16.msra.mxu0 0
  %2082 = vmatprep.subr.bf16.mxu0 0
  %2083 = vmatpush1.bf16.msra.mxu0 0
  %2084 = vmatprep.subr.bf16.mxu0 0
  %2085 = vmatpush1.bf16.msra.mxu0 0
  %2086 = vmatprep.subr.bf16.mxu0 0
  %2087 = vmatpush1.bf16.msra.mxu0 0
  %2088 = vmatprep.subr.bf16.mxu0 0
  %2089 = vmatpush1.bf16.msra.mxu0 0
  %2090 = vmatprep.subr.bf16.mxu0 0
  %2091 = vmatpush1.bf16.msra.mxu0 0
  %2092 = vmatprep.subr.bf16.mxu0 0
  %2093 = vmatpush1.bf16.msra.mxu0 0
  %2094 = vmatprep.mubr.bf16.mxu0 0
  %2095 = vmatmul.mubr.bf16.gmra.mrb[0].mxu0 %v2057
  %v2096 = vpop.f32.mrb[0].mxu0
  %v2097 = vadd.f32 0.0, %v2096
  %v2098 = vpop.f32.mrb[0].mxu0
  %v2099 = vpop.f32.mrb[0].mxu0
  %v2100 = vadd.f32 0.0, %v2099
  %v2101 = vpop.f32.mrb[0].mxu0
  %2102 = vmatprep.mubr.bf16.mxu0 0
  %2103 = vmatmul.mubr.bf16.gmra.mrb[0].mxu0 %v2060
  %v2104 = vpop.f32.mrb[0].mxu0
  %v2105 = vadd.f32 0.0, %v2104
  %v2106 = vpop.f32.mrb[0].mxu0
  %v2107 = vpop.f32.mrb[0].mxu0
  %v2108 = vadd.f32 0.0, %v2107
  %v2109 = vpop.f32.mrb[0].mxu0
  %2110 = vdwg.mxu0
  %v2115 = vunpack.c.l.b16 %v1977
  %v2116 = vunpack.c.l.b16 %v1978
  %v2117 = vunpack.c.l.b16 %v1979
  %v2118 = vunpack.c.l.b16 %v1980
  %v2119 = vpack.c.b16 %v2116, %v2115
  %v2120 = vpack.c.b16 %v2118, %v2117
  %v2122 = vsel %vm112, %v2119, 0
  %v2125 = vsel %vm112, %v2120, 0
  %2127 = vmatprep.subr.bf16.mxu0 0
  %2128 = vmatpush1.bf16.msra.mxu0 %v2003
  %2129 = vmatprep.subr.bf16.mxu0 0
  %2130 = vmatpush1.bf16.msra.mxu0 0
  %2131 = vmatprep.subr.bf16.mxu0 0
  %2132 = vmatpush1.bf16.msra.mxu0 0
  %2133 = vmatprep.subr.bf16.mxu0 0
  %2134 = vmatpush1.bf16.msra.mxu0 0
  %2135 = vmatprep.subr.bf16.mxu0 0
  %2136 = vmatpush1.bf16.msra.mxu0 0
  %2137 = vmatprep.subr.bf16.mxu0 0
  %2138 = vmatpush1.bf16.msra.mxu0 0
  %2139 = vmatprep.subr.bf16.mxu0 0
  %2140 = vmatpush1.bf16.msra.mxu0 0
  %2141 = vmatprep.subr.bf16.mxu0 0
  %2142 = vmatpush1.bf16.msra.mxu0 0
  %2143 = vmatprep.subr.bf16.mxu0 0
  %2144 = vmatpush1.bf16.msra.mxu0 0
  %2145 = vmatprep.subr.bf16.mxu0 0
  %2146 = vmatpush1.bf16.msra.mxu0 0
  %2147 = vmatprep.subr.bf16.mxu0 0
  %2148 = vmatpush1.bf16.msra.mxu0 0
  %2149 = vmatprep.subr.bf16.mxu0 0
  %2150 = vmatpush1.bf16.msra.mxu0 0
  %2151 = vmatprep.subr.bf16.mxu0 0
  %2152 = vmatpush1.bf16.msra.mxu0 0
  %2153 = vmatprep.subr.bf16.mxu0 0
  %2154 = vmatpush1.bf16.msra.mxu0 0
  %2155 = vmatprep.subr.bf16.mxu0 0
  %2156 = vmatpush1.bf16.msra.mxu0 0
  %2157 = vmatprep.subr.bf16.mxu0 0
  %2158 = vmatpush1.bf16.msra.mxu0 0
  %2159 = vmatprep.mubr.bf16.mxu0 0
  %2160 = vmatmul.mubr.bf16.gmra.mrb[0].mxu0 %v2122
  %v2161 = vpop.f32.mrb[0].mxu0
  %v2162 = vadd.f32 %v2097, %v2161
  %v2163 = vpop.f32.mrb[0].mxu0
  %v2164 = vpop.f32.mrb[0].mxu0
  %v2165 = vadd.f32 %v2100, %v2164
  %v2166 = vpop.f32.mrb[0].mxu0
  %2167 = vmatprep.mubr.bf16.mxu0 0
  %2168 = vmatmul.mubr.bf16.gmra.mrb[0].mxu0 %v2125
  %v2169 = vpop.f32.mrb[0].mxu0
  %v2170 = vadd.f32 %v2105, %v2169
  %v2171 = vpop.f32.mrb[0].mxu0
  %v2172 = vpop.f32.mrb[0].mxu0
  %v2173 = vadd.f32 %v2108, %v2172
  %v2174 = vpop.f32.mrb[0].mxu0
  %2175 = vdwg.mxu0
  %s2176 = scalar_lea.vmem %s6, 32
  %v2177 = vld [vmem:[%s2176] sm:$0xf]
  %v2178 = vld [vmem:[%s2176 + $0x4] sm:$0xf]
  %v2179 = vld [vmem:[%s2176 + $0x8] sm:$0xf]
  %v2180 = vld [vmem:[%s2176 + $0xc] sm:$0xf]
  %v2185 = vunpack.c.l.b16 %v2177
  %v2186 = vunpack.c.l.b16 %v2178
  %v2187 = vunpack.c.l.b16 %v2179
  %v2188 = vunpack.c.l.b16 %v2180
  %v2189 = vpack.c.b16 %v2186, %v2185
  %v2190 = vpack.c.b16 %v2188, %v2187
  %v2192 = vsel %vm112, %v2189, 0
  %v2195 = vsel %vm112, %v2190, 0
  %2197 = vmatprep.subr.bf16.mxu0 0
  %2198 = vmatpush1.bf16.msra.mxu0 %v2003
  %2199 = vmatprep.subr.bf16.mxu0 0
  %2200 = vmatpush1.bf16.msra.mxu0 0
  %2201 = vmatprep.subr.bf16.mxu0 0
  %2202 = vmatpush1.bf16.msra.mxu0 0
  %2203 = vmatprep.subr.bf16.mxu0 0
  %2204 = vmatpush1.bf16.msra.mxu0 0
  %2205 = vmatprep.subr.bf16.mxu0 0
  %2206 = vmatpush1.bf16.msra.mxu0 0
  %2207 = vmatprep.subr.bf16.mxu0 0
  %2208 = vmatpush1.bf16.msra.mxu0 0
  %2209 = vmatprep.subr.bf16.mxu0 0
  %2210 = vmatpush1.bf16.msra.mxu0 0
  %2211 = vmatprep.subr.bf16.mxu0 0
  %2212 = vmatpush1.bf16.msra.mxu0 0
  %2213 = vmatprep.subr.bf16.mxu0 0
  %2214 = vmatpush1.bf16.msra.mxu0 0
  %2215 = vmatprep.subr.bf16.mxu0 0
  %2216 = vmatpush1.bf16.msra.mxu0 0
  %2217 = vmatprep.subr.bf16.mxu0 0
  %2218 = vmatpush1.bf16.msra.mxu0 0
  %2219 = vmatprep.subr.bf16.mxu0 0
  %2220 = vmatpush1.bf16.msra.mxu0 0
  %2221 = vmatprep.subr.bf16.mxu0 0
  %2222 = vmatpush1.bf16.msra.mxu0 0
  %2223 = vmatprep.subr.bf16.mxu0 0
  %2224 = vmatpush1.bf16.msra.mxu0 0
  %2225 = vmatprep.subr.bf16.mxu0 0
  %2226 = vmatpush1.bf16.msra.mxu0 0
  %2227 = vmatprep.subr.bf16.mxu0 0
  %2228 = vmatpush1.bf16.msra.mxu0 0
  %2229 = vmatprep.mubr.bf16.mxu0 0
  %2230 = vmatmul.mubr.bf16.gmra.mrb[0].mxu0 %v2192
  %v2231 = vpop.f32.mrb[0].mxu0
  %v2232 = vadd.f32 0.0, %v2231
  %v2233 = vpop.f32.mrb[0].mxu0
  %v2234 = vpop.f32.mrb[0].mxu0
  %v2235 = vadd.f32 0.0, %v2234
  %v2236 = vpop.f32.mrb[0].mxu0
  %2237 = vmatprep.mubr.bf16.mxu0 0
  %2238 = vmatmul.mubr.bf16.gmra.mrb[0].mxu0 %v2195
  %v2239 = vpop.f32.mrb[0].mxu0
  %v2240 = vadd.f32 0.0, %v2239
  %v2241 = vpop.f32.mrb[0].mxu0
  %v2242 = vpop.f32.mrb[0].mxu0
  %v2243 = vadd.f32 0.0, %v2242
  %v2244 = vpop.f32.mrb[0].mxu0
  %2245 = vdwg.mxu0
  %v2246 = vpack.c.bf16 %v2235, %v2232
  %v2247 = vpack.c.bf16 %v2243, %v2240
  %v2249 = vsel %vm763, %v2246, 0
  %v2252 = vsel %vm763, %v2247, 0
  %2254 = vmatprep.subr.bf16.mxu0 0
  %2255 = vmatpush1.bf16.msra.mxu0 %v39
  %2256 = vmatprep.subr.bf16.mxu0 0
  %2257 = vmatpush1.bf16.msra.mxu0 0
  %2258 = vmatprep.subr.bf16.mxu0 0
  %2259 = vmatpush1.bf16.msra.mxu0 0
  %2260 = vmatprep.subr.bf16.mxu0 0
  %2261 = vmatpush1.bf16.msra.mxu0 0
  %2262 = vmatprep.subr.bf16.mxu0 0
  %2263 = vmatpush1.bf16.msra.mxu0 0
  %2264 = vmatprep.subr.bf16.mxu0 0
  %2265 = vmatpush1.bf16.msra.mxu0 0
  %2266 = vmatprep.subr.bf16.mxu0 0
  %2267 = vmatpush1.bf16.msra.mxu0 0
  %2268 = vmatprep.subr.bf16.mxu0 0
  %2269 = vmatpush1.bf16.msra.mxu0 0
  %2270 = vmatprep.subr.bf16.mxu0 0
  %2271 = vmatpush1.bf16.msra.mxu0 0
  %2272 = vmatprep.subr.bf16.mxu0 0
  %2273 = vmatpush1.bf16.msra.mxu0 0
  %2274 = vmatprep.subr.bf16.mxu0 0
  %2275 = vmatpush1.bf16.msra.mxu0 0
  %2276 = vmatprep.subr.bf16.mxu0 0
  %2277 = vmatpush1.bf16.msra.mxu0 0
  %2278 = vmatprep.subr.bf16.mxu0 0
  %2279 = vmatpush1.bf16.msra.mxu0 0
  %2280 = vmatprep.subr.bf16.mxu0 0
  %2281 = vmatpush1.bf16.msra.mxu0 0
  %2282 = vmatprep.subr.bf16.mxu0 0
  %2283 = vmatpush1.bf16.msra.mxu0 0
  %2284 = vmatprep.subr.bf16.mxu0 0
  %2285 = vmatpush1.bf16.msra.mxu0 0
  %2286 = vmatprep.mubr.bf16.mxu0 0
  %2287 = vmatmul.mubr.bf16.gmra.mrb[0].mxu0 %v2249
  %v2288 = vpop.f32.mrb[0].mxu0
  %v2289 = vadd.f32 0.0, %v2288
  %v2290 = vpop.f32.mrb[0].mxu0
  %v2291 = vpop.f32.mrb[0].mxu0
  %v2292 = vadd.f32 0.0, %v2291
  %v2293 = vpop.f32.mrb[0].mxu0
  %2294 = vmatprep.mubr.bf16.mxu0 0
  %2295 = vmatmul.mubr.bf16.gmra.mrb[0].mxu0 %v2252
  %v2296 = vpop.f32.mrb[0].mxu0
  %v2297 = vadd.f32 0.0, %v2296
  %v2298 = vpop.f32.mrb[0].mxu0
  %v2299 = vpop.f32.mrb[0].mxu0
  %v2300 = vadd.f32 0.0, %v2299
  %v2301 = vpop.f32.mrb[0].mxu0
  %2302 = vdwg.mxu0
  %v2303 = vadd.f32 %v2162, %v2289
  %v2304 = vadd.f32 %v2165, %v2292
  %v2305 = vadd.f32 %v2170, %v2297
  %v2306 = vadd.f32 %v2173, %v2300
  %v2307 = vadd.f32 %v2303, 1.0
  %v2308 = vadd.f32 %v2304, 1.0
  %v2309 = vadd.f32 %v2305, 1.0
  %v2310 = vadd.f32 %v2306, 1.0
  %2311 = vst.msk [vmem:[%s7] sm:$0xff] %vm763, %v2307
  %2312 = vst.msk [vmem:[%s7 + $0x8] sm:$0xff] %vm763, %v2308
  %2313 = vst.msk [vmem:[%s7 + $0x10] sm:$0xff] %vm763, %v2309
  %2314 = vst.msk [vmem:[%s7 + $0x18] sm:$0xff] %vm763, %v2310
  %s2315 = scalar_lea.vmem %s0, 512
  %v2316 = vld [vmem:[%s2315] sm:$0xff]
  %v2317 = vld [vmem:[%s2315 + $0x8] sm:$0xff]
  %v2318 = vld [vmem:[%s2315 + $0x10] sm:$0xff]
  %v2319 = vld [vmem:[%s2315 + $0x18] sm:$0xff]
  %v2320 = vld [vmem:[%s2315 + $0x20] sm:$0xff]
  %v2321 = vld [vmem:[%s2315 + $0x28] sm:$0xff]
  %v2322 = vld [vmem:[%s2315 + $0x30] sm:$0xff]
  %v2323 = vld [vmem:[%s2315 + $0x38] sm:$0xff]
  %v2324 = vld [vmem:[%s2315 + $0x40] sm:$0xff]
  %v2325 = vld [vmem:[%s2315 + $0x48] sm:$0xff]
  %v2326 = vld [vmem:[%s2315 + $0x50] sm:$0xff]
  %v2327 = vld [vmem:[%s2315 + $0x58] sm:$0xff]
  %v2328 = vld [vmem:[%s2315 + $0x60] sm:$0xff]
  %v2329 = vld [vmem:[%s2315 + $0x68] sm:$0xff]
  %v2330 = vld [vmem:[%s2315 + $0x70] sm:$0xff]
  %v2331 = vld [vmem:[%s2315 + $0x78] sm:$0xff]
  %v2332 = vld [vmem:[%s2315 + $0x80] sm:$0xff]
  %v2333 = vld [vmem:[%s2315 + $0x88] sm:$0xff]
  %v2334 = vld [vmem:[%s2315 + $0x90] sm:$0xff]
  %v2335 = vld [vmem:[%s2315 + $0x98] sm:$0xff]
  %v2336 = vld [vmem:[%s2315 + $0xa0] sm:$0xff]
  %v2337 = vld [vmem:[%s2315 + $0xa8] sm:$0xff]
  %v2338 = vld [vmem:[%s2315 + $0xb0] sm:$0xff]
  %v2339 = vld [vmem:[%s2315 + $0xb8] sm:$0xff]
  %v2340 = vld [vmem:[%s2315 + $0xc0] sm:$0xff]
  %v2341 = vld [vmem:[%s2315 + $0xc8] sm:$0xff]
  %v2342 = vld [vmem:[%s2315 + $0xd0] sm:$0xff]
  %v2343 = vld [vmem:[%s2315 + $0xd8] sm:$0xff]
  %v2344 = vld [vmem:[%s2315 + $0xe0] sm:$0xff]
  %v2345 = vld [vmem:[%s2315 + $0xe8] sm:$0xff]
  %v2346 = vld [vmem:[%s2315 + $0xf0] sm:$0xff]
  %v2347 = vld [vmem:[%s2315 + $0xf8] sm:$0xff]
  %v2348 = vld [vmem:[%s2315 + $0x100] sm:$0xff]
  %v2349 = vld [vmem:[%s2315 + $0x108] sm:$0xff]
  %v2350 = vld [vmem:[%s2315 + $0x110] sm:$0xff]
  %v2351 = vld [vmem:[%s2315 + $0x118] sm:$0xff]
  %v2352 = vld [vmem:[%s2315 + $0x120] sm:$0xff]
  %v2353 = vld [vmem:[%s2315 + $0x128] sm:$0xff]
  %v2354 = vld [vmem:[%s2315 + $0x130] sm:$0xff]
  %v2355 = vld [vmem:[%s2315 + $0x138] sm:$0xff]
  %v2356 = vld [vmem:[%s2315 + $0x140] sm:$0xff]
  %v2357 = vld [vmem:[%s2315 + $0x148] sm:$0xff]
  %v2358 = vld [vmem:[%s2315 + $0x150] sm:$0xff]
  %v2359 = vld [vmem:[%s2315 + $0x158] sm:$0xff]
  %v2360 = vld [vmem:[%s2315 + $0x160] sm:$0xff]
  %v2361 = vld [vmem:[%s2315 + $0x168] sm:$0xff]
  %v2362 = vld [vmem:[%s2315 + $0x170] sm:$0xff]
  %v2363 = vld [vmem:[%s2315 + $0x178] sm:$0xff]
  %v2364 = vld [vmem:[%s2315 + $0x180] sm:$0xff]
  %v2365 = vld [vmem:[%s2315 + $0x188] sm:$0xff]
  %v2366 = vld [vmem:[%s2315 + $0x190] sm:$0xff]
  %v2367 = vld [vmem:[%s2315 + $0x198] sm:$0xff]
  %v2368 = vld [vmem:[%s2315 + $0x1a0] sm:$0xff]
  %v2369 = vld [vmem:[%s2315 + $0x1a8] sm:$0xff]
  %v2370 = vld [vmem:[%s2315 + $0x1b0] sm:$0xff]
  %v2371 = vld [vmem:[%s2315 + $0x1b8] sm:$0xff]
  %v2372 = vld [vmem:[%s2315 + $0x1c0] sm:$0xff]
  %v2373 = vld [vmem:[%s2315 + $0x1c8] sm:$0xff]
  %v2374 = vld [vmem:[%s2315 + $0x1d0] sm:$0xff]
  %v2375 = vld [vmem:[%s2315 + $0x1d8] sm:$0xff]
  %v2376 = vld [vmem:[%s2315 + $0x1e0] sm:$0xff]
  %v2377 = vld [vmem:[%s2315 + $0x1e8] sm:$0xff]
  %v2378 = vld [vmem:[%s2315 + $0x1f0] sm:$0xff]
  %v2379 = vld [vmem:[%s2315 + $0x1f8] sm:$0xff]
  %v2380 = vsel %vm112, %v2316, 0.0
  %2381 = vadd.xlane.f32.xlu0 %v2380
  %v2382 = vpop.xlane.xlu0 %2381
  %v2383 = vsel %vm112, %v2317, 0.0
  %2384 = vadd.xlane.f32.xlu0 %v2383
  %v2385 = vpop.xlane.xlu0 %2384
  %v2386 = vsel %vm112, %v2318, 0.0
  %2387 = vadd.xlane.f32.xlu0 %v2386
  %v2388 = vpop.xlane.xlu0 %2387
  %v2389 = vsel %vm112, %v2319, 0.0
  %2390 = vadd.xlane.f32.xlu0 %v2389
  %v2391 = vpop.xlane.xlu0 %2390
  %v2392 = vsel %vm112, %v2320, 0.0
  %2393 = vadd.xlane.f32.xlu0 %v2392
  %v2394 = vpop.xlane.xlu0 %2393
  %v2395 = vsel %vm112, %v2321, 0.0
  %2396 = vadd.xlane.f32.xlu0 %v2395
  %v2397 = vpop.xlane.xlu0 %2396
  %v2398 = vsel %vm112, %v2322, 0.0
  %2399 = vadd.xlane.f32.xlu0 %v2398
  %v2400 = vpop.xlane.xlu0 %2399
  %v2401 = vsel %vm112, %v2323, 0.0
  %2402 = vadd.xlane.f32.xlu0 %v2401
  %v2403 = vpop.xlane.xlu0 %2402
  %v2404 = vsel %vm112, %v2324, 0.0
  %2405 = vadd.xlane.f32.xlu0 %v2404
  %v2406 = vpop.xlane.xlu0 %2405
  %v2407 = vsel %vm112, %v2325, 0.0
  %2408 = vadd.xlane.f32.xlu0 %v2407
  %v2409 = vpop.xlane.xlu0 %2408
  %v2410 = vsel %vm112, %v2326, 0.0
  %2411 = vadd.xlane.f32.xlu0 %v2410
  %v2412 = vpop.xlane.xlu0 %2411
  %v2413 = vsel %vm112, %v2327, 0.0
  %2414 = vadd.xlane.f32.xlu0 %v2413
  %v2415 = vpop.xlane.xlu0 %2414
  %v2416 = vsel %vm112, %v2328, 0.0
  %2417 = vadd.xlane.f32.xlu0 %v2416
  %v2418 = vpop.xlane.xlu0 %2417
  %v2419 = vsel %vm112, %v2329, 0.0
  %2420 = vadd.xlane.f32.xlu0 %v2419
  %v2421 = vpop.xlane.xlu0 %2420
  %v2422 = vsel %vm112, %v2330, 0.0
  %2423 = vadd.xlane.f32.xlu0 %v2422
  %v2424 = vpop.xlane.xlu0 %2423
  %v2425 = vsel %vm112, %v2331, 0.0
  %2426 = vadd.xlane.f32.xlu0 %v2425
  %v2427 = vpop.xlane.xlu0 %2426
  %v2428 = vsel %vm112, %v2332, 0.0
  %2429 = vadd.xlane.f32.xlu0 %v2428
  %v2430 = vpop.xlane.xlu0 %2429
  %v2431 = vsel %vm112, %v2333, 0.0
  %2432 = vadd.xlane.f32.xlu0 %v2431
  %v2433 = vpop.xlane.xlu0 %2432
  %v2434 = vsel %vm112, %v2334, 0.0
  %2435 = vadd.xlane.f32.xlu0 %v2434
  %v2436 = vpop.xlane.xlu0 %2435
  %v2437 = vsel %vm112, %v2335, 0.0
  %2438 = vadd.xlane.f32.xlu0 %v2437
  %v2439 = vpop.xlane.xlu0 %2438
  %v2440 = vsel %vm112, %v2336, 0.0
  %2441 = vadd.xlane.f32.xlu0 %v2440
  %v2442 = vpop.xlane.xlu0 %2441
  %v2443 = vsel %vm112, %v2337, 0.0
  %2444 = vadd.xlane.f32.xlu0 %v2443
  %v2445 = vpop.xlane.xlu0 %2444
  %v2446 = vsel %vm112, %v2338, 0.0
  %2447 = vadd.xlane.f32.xlu0 %v2446
  %v2448 = vpop.xlane.xlu0 %2447
  %v2449 = vsel %vm112, %v2339, 0.0
  %2450 = vadd.xlane.f32.xlu0 %v2449
  %v2451 = vpop.xlane.xlu0 %2450
  %v2452 = vsel %vm112, %v2340, 0.0
  %2453 = vadd.xlane.f32.xlu0 %v2452
  %v2454 = vpop.xlane.xlu0 %2453
  %v2455 = vsel %vm112, %v2341, 0.0
  %2456 = vadd.xlane.f32.xlu0 %v2455
  %v2457 = vpop.xlane.xlu0 %2456
  %v2458 = vsel %vm112, %v2342, 0.0
  %2459 = vadd.xlane.f32.xlu0 %v2458
  %v2460 = vpop.xlane.xlu0 %2459
  %v2461 = vsel %vm112, %v2343, 0.0
  %2462 = vadd.xlane.f32.xlu0 %v2461
  %v2463 = vpop.xlane.xlu0 %2462
  %v2464 = vsel %vm112, %v2344, 0.0
  %2465 = vadd.xlane.f32.xlu0 %v2464
  %v2466 = vpop.xlane.xlu0 %2465
  %v2467 = vsel %vm112, %v2345, 0.0
  %2468 = vadd.xlane.f32.xlu0 %v2467
  %v2469 = vpop.xlane.xlu0 %2468
  %v2470 = vsel %vm112, %v2346, 0.0
  %2471 = vadd.xlane.f32.xlu0 %v2470
  %v2472 = vpop.xlane.xlu0 %2471
  %v2473 = vsel %vm112, %v2347, 0.0
  %2474 = vadd.xlane.f32.xlu0 %v2473
  %v2475 = vpop.xlane.xlu0 %2474
  %v2476 = vsel %vm112, %v2348, 0.0
  %2477 = vadd.xlane.f32.xlu0 %v2476
  %v2478 = vpop.xlane.xlu0 %2477
  %v2479 = vsel %vm112, %v2349, 0.0
  %2480 = vadd.xlane.f32.xlu0 %v2479
  %v2481 = vpop.xlane.xlu0 %2480
  %v2482 = vsel %vm112, %v2350, 0.0
  %2483 = vadd.xlane.f32.xlu0 %v2482
  %v2484 = vpop.xlane.xlu0 %2483
  %v2485 = vsel %vm112, %v2351, 0.0
  %2486 = vadd.xlane.f32.xlu0 %v2485
  %v2487 = vpop.xlane.xlu0 %2486
  %v2488 = vsel %vm112, %v2352, 0.0
  %2489 = vadd.xlane.f32.xlu0 %v2488
  %v2490 = vpop.xlane.xlu0 %2489
  %v2491 = vsel %vm112, %v2353, 0.0
  %2492 = vadd.xlane.f32.xlu0 %v2491
  %v2493 = vpop.xlane.xlu0 %2492
  %v2494 = vsel %vm112, %v2354, 0.0
  %2495 = vadd.xlane.f32.xlu0 %v2494
  %v2496 = vpop.xlane.xlu0 %2495
  %v2497 = vsel %vm112, %v2355, 0.0
  %2498 = vadd.xlane.f32.xlu0 %v2497
  %v2499 = vpop.xlane.xlu0 %2498
  %v2500 = vsel %vm112, %v2356, 0.0
  %2501 = vadd.xlane.f32.xlu0 %v2500
  %v2502 = vpop.xlane.xlu0 %2501
  %v2503 = vsel %vm112, %v2357, 0.0
  %2504 = vadd.xlane.f32.xlu0 %v2503
  %v2505 = vpop.xlane.xlu0 %2504
  %v2506 = vsel %vm112, %v2358, 0.0
  %2507 = vadd.xlane.f32.xlu0 %v2506
  %v2508 = vpop.xlane.xlu0 %2507
  %v2509 = vsel %vm112, %v2359, 0.0
  %2510 = vadd.xlane.f32.xlu0 %v2509
  %v2511 = vpop.xlane.xlu0 %2510
  %v2512 = vsel %vm112, %v2360, 0.0
  %2513 = vadd.xlane.f32.xlu0 %v2512
  %v2514 = vpop.xlane.xlu0 %2513
  %v2515 = vsel %vm112, %v2361, 0.0
  %2516 = vadd.xlane.f32.xlu0 %v2515
  %v2517 = vpop.xlane.xlu0 %2516
  %v2518 = vsel %vm112, %v2362, 0.0
  %2519 = vadd.xlane.f32.xlu0 %v2518
  %v2520 = vpop.xlane.xlu0 %2519
  %v2521 = vsel %vm112, %v2363, 0.0
  %2522 = vadd.xlane.f32.xlu0 %v2521
  %v2523 = vpop.xlane.xlu0 %2522
  %v2524 = vsel %vm112, %v2364, 0.0
  %2525 = vadd.xlane.f32.xlu0 %v2524
  %v2526 = vpop.xlane.xlu0 %2525
  %v2527 = vsel %vm112, %v2365, 0.0
  %2528 = vadd.xlane.f32.xlu0 %v2527
  %v2529 = vpop.xlane.xlu0 %2528
  %v2530 = vsel %vm112, %v2366, 0.0
  %2531 = vadd.xlane.f32.xlu0 %v2530
  %v2532 = vpop.xlane.xlu0 %2531
  %v2533 = vsel %vm112, %v2367, 0.0
  %2534 = vadd.xlane.f32.xlu0 %v2533
  %v2535 = vpop.xlane.xlu0 %2534
  %v2536 = vsel %vm112, %v2368, 0.0
  %2537 = vadd.xlane.f32.xlu0 %v2536
  %v2538 = vpop.xlane.xlu0 %2537
  %v2539 = vsel %vm112, %v2369, 0.0
  %2540 = vadd.xlane.f32.xlu0 %v2539
  %v2541 = vpop.xlane.xlu0 %2540
  %v2542 = vsel %vm112, %v2370, 0.0
  %2543 = vadd.xlane.f32.xlu0 %v2542
  %v2544 = vpop.xlane.xlu0 %2543
  %v2545 = vsel %vm112, %v2371, 0.0
  %2546 = vadd.xlane.f32.xlu0 %v2545
  %v2547 = vpop.xlane.xlu0 %2546
  %v2548 = vsel %vm112, %v2372, 0.0
  %2549 = vadd.xlane.f32.xlu0 %v2548
  %v2550 = vpop.xlane.xlu0 %2549
  %v2551 = vsel %vm112, %v2373, 0.0
  %2552 = vadd.xlane.f32.xlu0 %v2551
  %v2553 = vpop.xlane.xlu0 %2552
  %v2554 = vsel %vm112, %v2374, 0.0
  %2555 = vadd.xlane.f32.xlu0 %v2554
  %v2556 = vpop.xlane.xlu0 %2555
  %v2557 = vsel %vm112, %v2375, 0.0
  %2558 = vadd.xlane.f32.xlu0 %v2557
  %v2559 = vpop.xlane.xlu0 %2558
  %v2560 = vsel %vm112, %v2376, 0.0
  %2561 = vadd.xlane.f32.xlu0 %v2560
  %v2562 = vpop.xlane.xlu0 %2561
  %v2563 = vsel %vm112, %v2377, 0.0
  %2564 = vadd.xlane.f32.xlu0 %v2563
  %v2565 = vpop.xlane.xlu0 %2564
  %v2566 = vsel %vm112, %v2378, 0.0
  %2567 = vadd.xlane.f32.xlu0 %v2566
  %v2568 = vpop.xlane.xlu0 %2567
  %v2569 = vsel %vm112, %v2379, 0.0
  %2570 = vadd.xlane.f32.xlu0 %v2569
  %v2571 = vpop.xlane.xlu0 %2570
  %v2572 = vmul.f32 %v2382, %v305
  %v2573 = vmul.f32 %v2385, %v305
  %v2574 = vmul.f32 %v2388, %v305
  %v2575 = vmul.f32 %v2391, %v305
  %v2576 = vmul.f32 %v2394, %v305
  %v2577 = vmul.f32 %v2397, %v305
  %v2578 = vmul.f32 %v2400, %v305
  %v2579 = vmul.f32 %v2403, %v305
  %v2580 = vmul.f32 %v2406, %v305
  %v2581 = vmul.f32 %v2409, %v305
  %v2582 = vmul.f32 %v2412, %v305
  %v2583 = vmul.f32 %v2415, %v305
  %v2584 = vmul.f32 %v2418, %v305
  %v2585 = vmul.f32 %v2421, %v305
  %v2586 = vmul.f32 %v2424, %v305
  %v2587 = vmul.f32 %v2427, %v305
  %v2588 = vmul.f32 %v2430, %v305
  %v2589 = vmul.f32 %v2433, %v305
  %v2590 = vmul.f32 %v2436, %v305
  %v2591 = vmul.f32 %v2439, %v305
  %v2592 = vmul.f32 %v2442, %v305
  %v2593 = vmul.f32 %v2445, %v305
  %v2594 = vmul.f32 %v2448, %v305
  %v2595 = vmul.f32 %v2451, %v305
  %v2596 = vmul.f32 %v2454, %v305
  %v2597 = vmul.f32 %v2457, %v305
  %v2598 = vmul.f32 %v2460, %v305
  %v2599 = vmul.f32 %v2463, %v305
  %v2600 = vmul.f32 %v2466, %v305
  %v2601 = vmul.f32 %v2469, %v305
  %v2602 = vmul.f32 %v2472, %v305
  %v2603 = vmul.f32 %v2475, %v305
  %v2604 = vmul.f32 %v2478, %v305
  %v2605 = vmul.f32 %v2481, %v305
  %v2606 = vmul.f32 %v2484, %v305
  %v2607 = vmul.f32 %v2487, %v305
  %v2608 = vmul.f32 %v2490, %v305
  %v2609 = vmul.f32 %v2493, %v305
  %v2610 = vmul.f32 %v2496, %v305
  %v2611 = vmul.f32 %v2499, %v305
  %v2612 = vmul.f32 %v2502, %v305
  %v2613 = vmul.f32 %v2505, %v305
  %v2614 = vmul.f32 %v2508, %v305
  %v2615 = vmul.f32 %v2511, %v305
  %v2616 = vmul.f32 %v2514, %v305
  %v2617 = vmul.f32 %v2517, %v305
  %v2618 = vmul.f32 %v2520, %v305
  %v2619 = vmul.f32 %v2523, %v305
  %v2620 = vmul.f32 %v2526, %v305
  %v2621 = vmul.f32 %v2529, %v305
  %v2622 = vmul.f32 %v2532, %v305
  %v2623 = vmul.f32 %v2535, %v305
  %v2624 = vmul.f32 %v2538, %v305
  %v2625 = vmul.f32 %v2541, %v305
  %v2626 = vmul.f32 %v2544, %v305
  %v2627 = vmul.f32 %v2547, %v305
  %v2628 = vmul.f32 %v2550, %v305
  %v2629 = vmul.f32 %v2553, %v305
  %v2630 = vmul.f32 %v2556, %v305
  %v2631 = vmul.f32 %v2559, %v305
  %v2632 = vmul.f32 %v2562, %v305
  %v2633 = vmul.f32 %v2565, %v305
  %v2634 = vmul.f32 %v2568, %v305
  %v2635 = vmul.f32 %v2571, %v305
  %v2700 = vlaneseq
  %v2701 = vshrl.u32 %v2700, 7
  %v2702 = vsub.s32 %v31, %v2701
  %v2703 = vrot.slane %v2572, %v2702
  %v2704 = vlaneseq
  %v2705 = vshrl.u32 %v2704, 7
  %v2706 = vsub.s32 %v438, %v2705
  %v2707 = vrot.slane %v2573, %v2706
  %v2708 = vsel %vm443, %v2707, %v2703
  %v2709 = vlaneseq
  %v2710 = vshrl.u32 %v2709, 7
  %v2711 = vsub.s32 %v31, %v2710
  %v2712 = vrot.slane %v2574, %v2711
  %v2713 = vlaneseq
  %v2714 = vshrl.u32 %v2713, 7
  %v2715 = vsub.s32 %v438, %v2714
  %v2716 = vrot.slane %v2575, %v2715
  %v2717 = vsel %vm443, %v2716, %v2712
  %v2718 = vlaneseq
  %v2719 = vshrl.u32 %v2718, 7
  %v2720 = vsub.s32 %v31, %v2719
  %v2721 = vrot.slane %v2576, %v2720
  %v2722 = vlaneseq
  %v2723 = vshrl.u32 %v2722, 7
  %v2724 = vsub.s32 %v438, %v2723
  %v2725 = vrot.slane %v2577, %v2724
  %v2726 = vsel %vm443, %v2725, %v2721
  %v2727 = vlaneseq
  %v2728 = vshrl.u32 %v2727, 7
  %v2729 = vsub.s32 %v31, %v2728
  %v2730 = vrot.slane %v2578, %v2729
  %v2731 = vlaneseq
  %v2732 = vshrl.u32 %v2731, 7
  %v2733 = vsub.s32 %v438, %v2732
  %v2734 = vrot.slane %v2579, %v2733
  %v2735 = vsel %vm443, %v2734, %v2730
  %v2736 = vlaneseq
  %v2737 = vshrl.u32 %v2736, 7
  %v2738 = vsub.s32 %v31, %v2737
  %v2739 = vrot.slane %v2580, %v2738
  %v2740 = vlaneseq
  %v2741 = vshrl.u32 %v2740, 7
  %v2742 = vsub.s32 %v438, %v2741
  %v2743 = vrot.slane %v2581, %v2742
  %v2744 = vsel %vm443, %v2743, %v2739
  %v2745 = vlaneseq
  %v2746 = vshrl.u32 %v2745, 7
  %v2747 = vsub.s32 %v31, %v2746
  %v2748 = vrot.slane %v2582, %v2747
  %v2749 = vlaneseq
  %v2750 = vshrl.u32 %v2749, 7
  %v2751 = vsub.s32 %v438, %v2750
  %v2752 = vrot.slane %v2583, %v2751
  %v2753 = vsel %vm443, %v2752, %v2748
  %v2754 = vlaneseq
  %v2755 = vshrl.u32 %v2754, 7
  %v2756 = vsub.s32 %v31, %v2755
  %v2757 = vrot.slane %v2584, %v2756
  %v2758 = vlaneseq
  %v2759 = vshrl.u32 %v2758, 7
  %v2760 = vsub.s32 %v438, %v2759
  %v2761 = vrot.slane %v2585, %v2760
  %v2762 = vsel %vm443, %v2761, %v2757
  %v2763 = vlaneseq
  %v2764 = vshrl.u32 %v2763, 7
  %v2765 = vsub.s32 %v31, %v2764
  %v2766 = vrot.slane %v2586, %v2765
  %v2767 = vlaneseq
  %v2768 = vshrl.u32 %v2767, 7
  %v2769 = vsub.s32 %v438, %v2768
  %v2770 = vrot.slane %v2587, %v2769
  %v2771 = vsel %vm443, %v2770, %v2766
  %v2772 = vlaneseq
  %v2773 = vshrl.u32 %v2772, 7
  %v2774 = vsub.s32 %v31, %v2773
  %v2775 = vrot.slane %v2588, %v2774
  %v2776 = vlaneseq
  %v2777 = vshrl.u32 %v2776, 7
  %v2778 = vsub.s32 %v438, %v2777
  %v2779 = vrot.slane %v2589, %v2778
  %v2780 = vsel %vm443, %v2779, %v2775
  %v2781 = vlaneseq
  %v2782 = vshrl.u32 %v2781, 7
  %v2783 = vsub.s32 %v31, %v2782
  %v2784 = vrot.slane %v2590, %v2783
  %v2785 = vlaneseq
  %v2786 = vshrl.u32 %v2785, 7
  %v2787 = vsub.s32 %v438, %v2786
  %v2788 = vrot.slane %v2591, %v2787
  %v2789 = vsel %vm443, %v2788, %v2784
  %v2790 = vlaneseq
  %v2791 = vshrl.u32 %v2790, 7
  %v2792 = vsub.s32 %v31, %v2791
  %v2793 = vrot.slane %v2592, %v2792
  %v2794 = vlaneseq
  %v2795 = vshrl.u32 %v2794, 7
  %v2796 = vsub.s32 %v438, %v2795
  %v2797 = vrot.slane %v2593, %v2796
  %v2798 = vsel %vm443, %v2797, %v2793
  %v2799 = vlaneseq
  %v2800 = vshrl.u32 %v2799, 7
  %v2801 = vsub.s32 %v31, %v2800
  %v2802 = vrot.slane %v2594, %v2801
  %v2803 = vlaneseq
  %v2804 = vshrl.u32 %v2803, 7
  %v2805 = vsub.s32 %v438, %v2804
  %v2806 = vrot.slane %v2595, %v2805
  %v2807 = vsel %vm443, %v2806, %v2802
  %v2808 = vlaneseq
  %v2809 = vshrl.u32 %v2808, 7
  %v2810 = vsub.s32 %v31, %v2809
  %v2811 = vrot.slane %v2596, %v2810
  %v2812 = vlaneseq
  %v2813 = vshrl.u32 %v2812, 7
  %v2814 = vsub.s32 %v438, %v2813
  %v2815 = vrot.slane %v2597, %v2814
  %v2816 = vsel %vm443, %v2815, %v2811
  %v2817 = vlaneseq
  %v2818 = vshrl.u32 %v2817, 7
  %v2819 = vsub.s32 %v31, %v2818
  %v2820 = vrot.slane %v2598, %v2819
  %v2821 = vlaneseq
  %v2822 = vshrl.u32 %v2821, 7
  %v2823 = vsub.s32 %v438, %v2822
  %v2824 = vrot.slane %v2599, %v2823
  %v2825 = vsel %vm443, %v2824, %v2820
  %v2826 = vlaneseq
  %v2827 = vshrl.u32 %v2826, 7
  %v2828 = vsub.s32 %v31, %v2827
  %v2829 = vrot.slane %v2600, %v2828
  %v2830 = vlaneseq
  %v2831 = vshrl.u32 %v2830, 7
  %v2832 = vsub.s32 %v438, %v2831
  %v2833 = vrot.slane %v2601, %v2832
  %v2834 = vsel %vm443, %v2833, %v2829
  %v2835 = vlaneseq
  %v2836 = vshrl.u32 %v2835, 7
  %v2837 = vsub.s32 %v31, %v2836
  %v2838 = vrot.slane %v2602, %v2837
  %v2839 = vlaneseq
  %v2840 = vshrl.u32 %v2839, 7
  %v2841 = vsub.s32 %v438, %v2840
  %v2842 = vrot.slane %v2603, %v2841
  %v2843 = vsel %vm443, %v2842, %v2838
  %v2844 = vlaneseq
  %v2845 = vshrl.u32 %v2844, 7
  %v2846 = vsub.s32 %v31, %v2845
  %v2847 = vrot.slane %v2604, %v2846
  %v2848 = vlaneseq
  %v2849 = vshrl.u32 %v2848, 7
  %v2850 = vsub.s32 %v438, %v2849
  %v2851 = vrot.slane %v2605, %v2850
  %v2852 = vsel %vm443, %v2851, %v2847
  %v2853 = vlaneseq
  %v2854 = vshrl.u32 %v2853, 7
  %v2855 = vsub.s32 %v31, %v2854
  %v2856 = vrot.slane %v2606, %v2855
  %v2857 = vlaneseq
  %v2858 = vshrl.u32 %v2857, 7
  %v2859 = vsub.s32 %v438, %v2858
  %v2860 = vrot.slane %v2607, %v2859
  %v2861 = vsel %vm443, %v2860, %v2856
  %v2862 = vlaneseq
  %v2863 = vshrl.u32 %v2862, 7
  %v2864 = vsub.s32 %v31, %v2863
  %v2865 = vrot.slane %v2608, %v2864
  %v2866 = vlaneseq
  %v2867 = vshrl.u32 %v2866, 7
  %v2868 = vsub.s32 %v438, %v2867
  %v2869 = vrot.slane %v2609, %v2868
  %v2870 = vsel %vm443, %v2869, %v2865
  %v2871 = vlaneseq
  %v2872 = vshrl.u32 %v2871, 7
  %v2873 = vsub.s32 %v31, %v2872
  %v2874 = vrot.slane %v2610, %v2873
  %v2875 = vlaneseq
  %v2876 = vshrl.u32 %v2875, 7
  %v2877 = vsub.s32 %v438, %v2876
  %v2878 = vrot.slane %v2611, %v2877
  %v2879 = vsel %vm443, %v2878, %v2874
  %v2880 = vlaneseq
  %v2881 = vshrl.u32 %v2880, 7
  %v2882 = vsub.s32 %v31, %v2881
  %v2883 = vrot.slane %v2612, %v2882
  %v2884 = vlaneseq
  %v2885 = vshrl.u32 %v2884, 7
  %v2886 = vsub.s32 %v438, %v2885
  %v2887 = vrot.slane %v2613, %v2886
  %v2888 = vsel %vm443, %v2887, %v2883
  %v2889 = vlaneseq
  %v2890 = vshrl.u32 %v2889, 7
  %v2891 = vsub.s32 %v31, %v2890
  %v2892 = vrot.slane %v2614, %v2891
  %v2893 = vlaneseq
  %v2894 = vshrl.u32 %v2893, 7
  %v2895 = vsub.s32 %v438, %v2894
  %v2896 = vrot.slane %v2615, %v2895
  %v2897 = vsel %vm443, %v2896, %v2892
  %v2898 = vlaneseq
  %v2899 = vshrl.u32 %v2898, 7
  %v2900 = vsub.s32 %v31, %v2899
  %v2901 = vrot.slane %v2616, %v2900
  %v2902 = vlaneseq
  %v2903 = vshrl.u32 %v2902, 7
  %v2904 = vsub.s32 %v438, %v2903
  %v2905 = vrot.slane %v2617, %v2904
  %v2906 = vsel %vm443, %v2905, %v2901
  %v2907 = vlaneseq
  %v2908 = vshrl.u32 %v2907, 7
  %v2909 = vsub.s32 %v31, %v2908
  %v2910 = vrot.slane %v2618, %v2909
  %v2911 = vlaneseq
  %v2912 = vshrl.u32 %v2911, 7
  %v2913 = vsub.s32 %v438, %v2912
  %v2914 = vrot.slane %v2619, %v2913
  %v2915 = vsel %vm443, %v2914, %v2910
  %v2916 = vlaneseq
  %v2917 = vshrl.u32 %v2916, 7
  %v2918 = vsub.s32 %v31, %v2917
  %v2919 = vrot.slane %v2620, %v2918
  %v2920 = vlaneseq
  %v2921 = vshrl.u32 %v2920, 7
  %v2922 = vsub.s32 %v438, %v2921
  %v2923 = vrot.slane %v2621, %v2922
  %v2924 = vsel %vm443, %v2923, %v2919
  %v2925 = vlaneseq
  %v2926 = vshrl.u32 %v2925, 7
  %v2927 = vsub.s32 %v31, %v2926
  %v2928 = vrot.slane %v2622, %v2927
  %v2929 = vlaneseq
  %v2930 = vshrl.u32 %v2929, 7
  %v2931 = vsub.s32 %v438, %v2930
  %v2932 = vrot.slane %v2623, %v2931
  %v2933 = vsel %vm443, %v2932, %v2928
  %v2934 = vlaneseq
  %v2935 = vshrl.u32 %v2934, 7
  %v2936 = vsub.s32 %v31, %v2935
  %v2937 = vrot.slane %v2624, %v2936
  %v2938 = vlaneseq
  %v2939 = vshrl.u32 %v2938, 7
  %v2940 = vsub.s32 %v438, %v2939
  %v2941 = vrot.slane %v2625, %v2940
  %v2942 = vsel %vm443, %v2941, %v2937
  %v2943 = vlaneseq
  %v2944 = vshrl.u32 %v2943, 7
  %v2945 = vsub.s32 %v31, %v2944
  %v2946 = vrot.slane %v2626, %v2945
  %v2947 = vlaneseq
  %v2948 = vshrl.u32 %v2947, 7
  %v2949 = vsub.s32 %v438, %v2948
  %v2950 = vrot.slane %v2627, %v2949
  %v2951 = vsel %vm443, %v2950, %v2946
  %v2952 = vlaneseq
  %v2953 = vshrl.u32 %v2952, 7
  %v2954 = vsub.s32 %v31, %v2953
  %v2955 = vrot.slane %v2628, %v2954
  %v2956 = vlaneseq
  %v2957 = vshrl.u32 %v2956, 7
  %v2958 = vsub.s32 %v438, %v2957
  %v2959 = vrot.slane %v2629, %v2958
  %v2960 = vsel %vm443, %v2959, %v2955
  %v2961 = vlaneseq
  %v2962 = vshrl.u32 %v2961, 7
  %v2963 = vsub.s32 %v31, %v2962
  %v2964 = vrot.slane %v2630, %v2963
  %v2965 = vlaneseq
  %v2966 = vshrl.u32 %v2965, 7
  %v2967 = vsub.s32 %v438, %v2966
  %v2968 = vrot.slane %v2631, %v2967
  %v2969 = vsel %vm443, %v2968, %v2964
  %v2970 = vlaneseq
  %v2971 = vshrl.u32 %v2970, 7
  %v2972 = vsub.s32 %v31, %v2971
  %v2973 = vrot.slane %v2632, %v2972
  %v2974 = vlaneseq
  %v2975 = vshrl.u32 %v2974, 7
  %v2976 = vsub.s32 %v438, %v2975
  %v2977 = vrot.slane %v2633, %v2976
  %v2978 = vsel %vm443, %v2977, %v2973
  %v2979 = vlaneseq
  %v2980 = vshrl.u32 %v2979, 7
  %v2981 = vsub.s32 %v31, %v2980
  %v2982 = vrot.slane %v2634, %v2981
  %v2983 = vlaneseq
  %v2984 = vshrl.u32 %v2983, 7
  %v2985 = vsub.s32 %v438, %v2984
  %v2986 = vrot.slane %v2635, %v2985
  %v2987 = vsel %vm443, %v2986, %v2982
  %v2988 = vsel %vm724, %v2717, %v2708
  %v2989 = vsel %vm726, %v2726, %v2988
  %v2990 = vsel %vm728, %v2735, %v2989
  %v2991 = vsel %vm730, %v2744, %v2990
  %v2992 = vsel %vm732, %v2753, %v2991
  %v2993 = vsel %vm734, %v2762, %v2992
  %v2994 = vsel %vm736, %v2771, %v2993
  %v2995 = vsel %vm724, %v2789, %v2780
  %v2996 = vsel %vm726, %v2798, %v2995
  %v2997 = vsel %vm728, %v2807, %v2996
  %v2998 = vsel %vm730, %v2816, %v2997
  %v2999 = vsel %vm732, %v2825, %v2998
  %v3000 = vsel %vm734, %v2834, %v2999
  %v3001 = vsel %vm736, %v2843, %v3000
  %v3002 = vsel %vm724, %v2861, %v2852
  %v3003 = vsel %vm726, %v2870, %v3002
  %v3004 = vsel %vm728, %v2879, %v3003
  %v3005 = vsel %vm730, %v2888, %v3004
  %v3006 = vsel %vm732, %v2897, %v3005
  %v3007 = vsel %vm734, %v2906, %v3006
  %v3008 = vsel %vm736, %v2915, %v3007
  %v3009 = vsel %vm724, %v2933, %v2924
  %v3010 = vsel %vm726, %v2942, %v3009
  %v3011 = vsel %vm728, %v2951, %v3010
  %v3012 = vsel %vm730, %v2960, %v3011
  %v3013 = vsel %vm732, %v2969, %v3012
  %v3014 = vsel %vm734, %v2978, %v3013
  %v3015 = vsel %vm736, %v2987, %v3014
  %v3020 = vsel %vm763, %v2994, 0.0
  %3021 = vadd.xlane.f32.xlu0 %v3020
  %v3022 = vpop.xlane.xlu0 %3021
  %v3023 = vsel %vm763, %v3001, 0.0
  %3024 = vadd.xlane.f32.xlu0 %v3023
  %v3025 = vpop.xlane.xlu0 %3024
  %v3026 = vsel %vm763, %v3008, 0.0
  %3027 = vadd.xlane.f32.xlu0 %v3026
  %v3028 = vpop.xlane.xlu0 %3027
  %v3029 = vsel %vm763, %v3015, 0.0
  %3030 = vadd.xlane.f32.xlu0 %v3029
  %v3031 = vpop.xlane.xlu0 %3030
  %v3032 = vmul.f32 %v3022, %v776
  %v3033 = vmul.f32 %v3025, %v776
  %v3034 = vmul.f32 %v3028, %v776
  %v3035 = vmul.f32 %v3031, %v776
  %v3036 = vld [vmem:[%s1] sm:$0xf]
  %v3037 = vld [vmem:[%s1 + $0x4] sm:$0xf]
  %v3038 = vld [vmem:[%s1 + $0x8] sm:$0xf]
  %v3039 = vld [vmem:[%s1 + $0xc] sm:$0xf]
  %v3040 = vpack.c.bf16 %v3033, %v3032
  %v3041 = vpack.c.bf16 %v3035, %v3034
  %v3042 = vld [vmem:[%s2] sm:$0xff]
  %v3043 = vld [vmem:[%s2 + $0x8] sm:$0xff]
  %v3044 = vld [vmem:[%s2 + $0x10] sm:$0xff]
  %v3045 = vld [vmem:[%s2 + $0x18] sm:$0xff]
  %v3050 = vunpack.c.l.b16 %v3036
  %v3051 = vunpack.c.l.b16 %v3037
  %v3052 = vunpack.c.l.b16 %v3038
  %v3053 = vunpack.c.l.b16 %v3039
  %v3054 = vpack.c.b16 %v3051, %v3050
  %v3055 = vpack.c.b16 %v3053, %v3052
  %v3057 = vsel %vm801, %v3054, 0
  %v3060 = vsel %vm801, %v3055, 0
  %3062 = vmatprep.subr.bf16.mxu0 0
  %3063 = vmatpush1.bf16.msra.mxu0 %v3040
  %3064 = vmatprep.subr.bf16.mxu0 0
  %3065 = vmatpush1.bf16.msra.mxu0 %v3041
  %3066 = vmatprep.subr.bf16.mxu0 0
  %3067 = vmatpush1.bf16.msra.mxu0 0
  %3068 = vmatprep.subr.bf16.mxu0 0
  %3069 = vmatpush1.bf16.msra.mxu0 0
  %3070 = vmatprep.subr.bf16.mxu0 0
  %3071 = vmatpush1.bf16.msra.mxu0 0
  %3072 = vmatprep.subr.bf16.mxu0 0
  %3073 = vmatpush1.bf16.msra.mxu0 0
  %3074 = vmatprep.subr.bf16.mxu0 0
  %3075 = vmatpush1.bf16.msra.mxu0 0
  %3076 = vmatprep.subr.bf16.mxu0 0
  %3077 = vmatpush1.bf16.msra.mxu0 0
  %3078 = vmatprep.subr.bf16.mxu0 0
  %3079 = vmatpush1.bf16.msra.mxu0 0
  %3080 = vmatprep.subr.bf16.mxu0 0
  %3081 = vmatpush1.bf16.msra.mxu0 0
  %3082 = vmatprep.subr.bf16.mxu0 0
  %3083 = vmatpush1.bf16.msra.mxu0 0
  %3084 = vmatprep.subr.bf16.mxu0 0
  %3085 = vmatpush1.bf16.msra.mxu0 0
  %3086 = vmatprep.subr.bf16.mxu0 0
  %3087 = vmatpush1.bf16.msra.mxu0 0
  %3088 = vmatprep.subr.bf16.mxu0 0
  %3089 = vmatpush1.bf16.msra.mxu0 0
  %3090 = vmatprep.subr.bf16.mxu0 0
  %3091 = vmatpush1.bf16.msra.mxu0 0
  %3092 = vmatprep.subr.bf16.mxu0 0
  %3093 = vmatpush1.bf16.msra.mxu0 0
  %3094 = vmatprep.mubr.bf16.mxu0 0
  %3095 = vmatmul.mubr.bf16.gmra.mrb[0].mxu0 %v3057
  %v3096 = vpop.f32.mrb[0].mxu0
  %v3097 = vadd.f32 %v3042, %v3096
  %v3098 = vpop.f32.mrb[0].mxu0
  %v3099 = vpop.f32.mrb[0].mxu0
  %v3100 = vadd.f32 %v3043, %v3099
  %v3101 = vpop.f32.mrb[0].mxu0
  %3102 = vmatprep.mubr.bf16.mxu0 0
  %3103 = vmatmul.mubr.bf16.gmra.mrb[0].mxu0 %v3060
  %v3104 = vpop.f32.mrb[0].mxu0
  %v3105 = vadd.f32 %v3044, %v3104
  %v3106 = vpop.f32.mrb[0].mxu0
  %v3107 = vpop.f32.mrb[0].mxu0
  %v3108 = vadd.f32 %v3045, %v3107
  %v3109 = vpop.f32.mrb[0].mxu0
  %3110 = vdwg.mxu0
  %3112 = vset.pattern.permute.xlu0 0
  %3113 = vperm.xlu0 %3112, %v3097
  %v3114 = vpop.permute.xlu0 %3113
  %3116 = vset.pattern.permute.xlu0 0
  %3117 = vperm.xlu0 %3116, %v3100
  %v3118 = vpop.permute.xlu0 %3117
  %3120 = vset.pattern.permute.xlu0 0
  %3121 = vperm.xlu0 %3120, %v3105
  %v3122 = vpop.permute.xlu0 %3121
  %3124 = vset.pattern.permute.xlu0 0
  %3125 = vperm.xlu0 %3124, %v3108
  %v3126 = vpop.permute.xlu0 %3125
  %v3127 = vlaneseq
  %v3128 = vshrl.u32 %v3127, 7
  %v3129 = vsub.s32 0, %v3128
  %v3130 = vrot.slane %v3114, %v3129
  %v3131 = vlaneseq
  %v3132 = vshrl.u32 %v3131, 7
  %v3133 = vsub.s32 1, %v3132
  %v3134 = vrot.slane %v3114, %v3133
  %v3135 = vlaneseq
  %v3136 = vshrl.u32 %v3135, 7
  %v3137 = vsub.s32 2, %v3136
  %v3138 = vrot.slane %v3114, %v3137
  %v3139 = vlaneseq
  %v3140 = vshrl.u32 %v3139, 7
  %v3141 = vsub.s32 3, %v3140
  %v3142 = vrot.slane %v3114, %v3141
  %v3143 = vlaneseq
  %v3144 = vshrl.u32 %v3143, 7
  %v3145 = vsub.s32 4, %v3144
  %v3146 = vrot.slane %v3114, %v3145
  %v3147 = vlaneseq
  %v3148 = vshrl.u32 %v3147, 7
  %v3149 = vsub.s32 5, %v3148
  %v3150 = vrot.slane %v3114, %v3149
  %v3151 = vlaneseq
  %v3152 = vshrl.u32 %v3151, 7
  %v3153 = vsub.s32 6, %v3152
  %v3154 = vrot.slane %v3114, %v3153
  %v3155 = vlaneseq
  %v3156 = vshrl.u32 %v3155, 7
  %v3157 = vsub.s32 7, %v3156
  %v3158 = vrot.slane %v3114, %v3157
  %v3159 = vlaneseq
  %v3160 = vshrl.u32 %v3159, 7
  %v3161 = vsub.s32 0, %v3160
  %v3162 = vrot.slane %v3118, %v3161
  %v3163 = vlaneseq
  %v3164 = vshrl.u32 %v3163, 7
  %v3165 = vsub.s32 1, %v3164
  %v3166 = vrot.slane %v3118, %v3165
  %v3167 = vlaneseq
  %v3168 = vshrl.u32 %v3167, 7
  %v3169 = vsub.s32 2, %v3168
  %v3170 = vrot.slane %v3118, %v3169
  %v3171 = vlaneseq
  %v3172 = vshrl.u32 %v3171, 7
  %v3173 = vsub.s32 3, %v3172
  %v3174 = vrot.slane %v3118, %v3173
  %v3175 = vlaneseq
  %v3176 = vshrl.u32 %v3175, 7
  %v3177 = vsub.s32 4, %v3176
  %v3178 = vrot.slane %v3118, %v3177
  %v3179 = vlaneseq
  %v3180 = vshrl.u32 %v3179, 7
  %v3181 = vsub.s32 5, %v3180
  %v3182 = vrot.slane %v3118, %v3181
  %v3183 = vlaneseq
  %v3184 = vshrl.u32 %v3183, 7
  %v3185 = vsub.s32 6, %v3184
  %v3186 = vrot.slane %v3118, %v3185
  %v3187 = vlaneseq
  %v3188 = vshrl.u32 %v3187, 7
  %v3189 = vsub.s32 7, %v3188
  %v3190 = vrot.slane %v3118, %v3189
  %v3191 = vlaneseq
  %v3192 = vshrl.u32 %v3191, 7
  %v3193 = vsub.s32 0, %v3192
  %v3194 = vrot.slane %v3122, %v3193
  %v3195 = vlaneseq
  %v3196 = vshrl.u32 %v3195, 7
  %v3197 = vsub.s32 1, %v3196
  %v3198 = vrot.slane %v3122, %v3197
  %v3199 = vlaneseq
  %v3200 = vshrl.u32 %v3199, 7
  %v3201 = vsub.s32 2, %v3200
  %v3202 = vrot.slane %v3122, %v3201
  %v3203 = vlaneseq
  %v3204 = vshrl.u32 %v3203, 7
  %v3205 = vsub.s32 3, %v3204
  %v3206 = vrot.slane %v3122, %v3205
  %v3207 = vlaneseq
  %v3208 = vshrl.u32 %v3207, 7
  %v3209 = vsub.s32 4, %v3208
  %v3210 = vrot.slane %v3122, %v3209
  %v3211 = vlaneseq
  %v3212 = vshrl.u32 %v3211, 7
  %v3213 = vsub.s32 5, %v3212
  %v3214 = vrot.slane %v3122, %v3213
  %v3215 = vlaneseq
  %v3216 = vshrl.u32 %v3215, 7
  %v3217 = vsub.s32 6, %v3216
  %v3218 = vrot.slane %v3122, %v3217
  %v3219 = vlaneseq
  %v3220 = vshrl.u32 %v3219, 7
  %v3221 = vsub.s32 7, %v3220
  %v3222 = vrot.slane %v3122, %v3221
  %v3223 = vlaneseq
  %v3224 = vshrl.u32 %v3223, 7
  %v3225 = vsub.s32 0, %v3224
  %v3226 = vrot.slane %v3126, %v3225
  %v3227 = vlaneseq
  %v3228 = vshrl.u32 %v3227, 7
  %v3229 = vsub.s32 1, %v3228
  %v3230 = vrot.slane %v3126, %v3229
  %v3231 = vlaneseq
  %v3232 = vshrl.u32 %v3231, 7
  %v3233 = vsub.s32 2, %v3232
  %v3234 = vrot.slane %v3126, %v3233
  %v3235 = vlaneseq
  %v3236 = vshrl.u32 %v3235, 7
  %v3237 = vsub.s32 3, %v3236
  %v3238 = vrot.slane %v3126, %v3237
  %v3239 = vlaneseq
  %v3240 = vshrl.u32 %v3239, 7
  %v3241 = vsub.s32 4, %v3240
  %v3242 = vrot.slane %v3126, %v3241
  %v3243 = vlaneseq
  %v3244 = vshrl.u32 %v3243, 7
  %v3245 = vsub.s32 5, %v3244
  %v3246 = vrot.slane %v3126, %v3245
  %v3247 = vlaneseq
  %v3248 = vshrl.u32 %v3247, 7
  %v3249 = vsub.s32 6, %v3248
  %v3250 = vrot.slane %v3126, %v3249
  %v3251 = vlaneseq
  %v3252 = vshrl.u32 %v3251, 7
  %v3253 = vsub.s32 7, %v3252
  %v3254 = vrot.slane %v3126, %v3253
  %v3287 = vadd.f32 %v2572, %v3130
  %v3288 = vadd.f32 %v2573, %v3130
  %v3289 = vadd.f32 %v2574, %v3134
  %v3290 = vadd.f32 %v2575, %v3134
  %v3291 = vadd.f32 %v2576, %v3138
  %v3292 = vadd.f32 %v2577, %v3138
  %v3293 = vadd.f32 %v2578, %v3142
  %v3294 = vadd.f32 %v2579, %v3142
  %v3295 = vadd.f32 %v2580, %v3146
  %v3296 = vadd.f32 %v2581, %v3146
  %v3297 = vadd.f32 %v2582, %v3150
  %v3298 = vadd.f32 %v2583, %v3150
  %v3299 = vadd.f32 %v2584, %v3154
  %v3300 = vadd.f32 %v2585, %v3154
  %v3301 = vadd.f32 %v2586, %v3158
  %v3302 = vadd.f32 %v2587, %v3158
  %v3303 = vadd.f32 %v2588, %v3162
  %v3304 = vadd.f32 %v2589, %v3162
  %v3305 = vadd.f32 %v2590, %v3166
  %v3306 = vadd.f32 %v2591, %v3166
  %v3307 = vadd.f32 %v2592, %v3170
  %v3308 = vadd.f32 %v2593, %v3170
  %v3309 = vadd.f32 %v2594, %v3174
  %v3310 = vadd.f32 %v2595, %v3174
  %v3311 = vadd.f32 %v2596, %v3178
  %v3312 = vadd.f32 %v2597, %v3178
  %v3313 = vadd.f32 %v2598, %v3182
  %v3314 = vadd.f32 %v2599, %v3182
  %v3315 = vadd.f32 %v2600, %v3186
  %v3316 = vadd.f32 %v2601, %v3186
  %v3317 = vadd.f32 %v2602, %v3190
  %v3318 = vadd.f32 %v2603, %v3190
  %v3319 = vadd.f32 %v2604, %v3194
  %v3320 = vadd.f32 %v2605, %v3194
  %v3321 = vadd.f32 %v2606, %v3198
  %v3322 = vadd.f32 %v2607, %v3198
  %v3323 = vadd.f32 %v2608, %v3202
  %v3324 = vadd.f32 %v2609, %v3202
  %v3325 = vadd.f32 %v2610, %v3206
  %v3326 = vadd.f32 %v2611, %v3206
  %v3327 = vadd.f32 %v2612, %v3210
  %v3328 = vadd.f32 %v2613, %v3210
  %v3329 = vadd.f32 %v2614, %v3214
  %v3330 = vadd.f32 %v2615, %v3214
  %v3331 = vadd.f32 %v2616, %v3218
  %v3332 = vadd.f32 %v2617, %v3218
  %v3333 = vadd.f32 %v2618, %v3222
  %v3334 = vadd.f32 %v2619, %v3222
  %v3335 = vadd.f32 %v2620, %v3226
  %v3336 = vadd.f32 %v2621, %v3226
  %v3337 = vadd.f32 %v2622, %v3230
  %v3338 = vadd.f32 %v2623, %v3230
  %v3339 = vadd.f32 %v2624, %v3234
  %v3340 = vadd.f32 %v2625, %v3234
  %v3341 = vadd.f32 %v2626, %v3238
  %v3342 = vadd.f32 %v2627, %v3238
  %v3343 = vadd.f32 %v2628, %v3242
  %v3344 = vadd.f32 %v2629, %v3242
  %v3345 = vadd.f32 %v2630, %v3246
  %v3346 = vadd.f32 %v2631, %v3246
  %v3347 = vadd.f32 %v2632, %v3250
  %v3348 = vadd.f32 %v2633, %v3250
  %v3349 = vadd.f32 %v2634, %v3254
  %v3350 = vadd.f32 %v2635, %v3254
  %v3351 = vpack.c.bf16 %v3288, %v3287
  %v3352 = vpack.c.bf16 %v3290, %v3289
  %v3353 = vpack.c.bf16 %v3292, %v3291
  %v3354 = vpack.c.bf16 %v3294, %v3293
  %v3355 = vpack.c.bf16 %v3296, %v3295
  %v3356 = vpack.c.bf16 %v3298, %v3297
  %v3357 = vpack.c.bf16 %v3300, %v3299
  %v3358 = vpack.c.bf16 %v3302, %v3301
  %v3359 = vpack.c.bf16 %v3304, %v3303
  %v3360 = vpack.c.bf16 %v3306, %v3305
  %v3361 = vpack.c.bf16 %v3308, %v3307
  %v3362 = vpack.c.bf16 %v3310, %v3309
  %v3363 = vpack.c.bf16 %v3312, %v3311
  %v3364 = vpack.c.bf16 %v3314, %v3313
  %v3365 = vpack.c.bf16 %v3316, %v3315
  %v3366 = vpack.c.bf16 %v3318, %v3317
  %v3367 = vpack.c.bf16 %v3320, %v3319
  %v3368 = vpack.c.bf16 %v3322, %v3321
  %v3369 = vpack.c.bf16 %v3324, %v3323
  %v3370 = vpack.c.bf16 %v3326, %v3325
  %v3371 = vpack.c.bf16 %v3328, %v3327
  %v3372 = vpack.c.bf16 %v3330, %v3329
  %v3373 = vpack.c.bf16 %v3332, %v3331
  %v3374 = vpack.c.bf16 %v3334, %v3333
  %v3375 = vpack.c.bf16 %v3336, %v3335
  %v3376 = vpack.c.bf16 %v3338, %v3337
  %v3377 = vpack.c.bf16 %v3340, %v3339
  %v3378 = vpack.c.bf16 %v3342, %v3341
  %v3379 = vpack.c.bf16 %v3344, %v3343
  %v3380 = vpack.c.bf16 %v3346, %v3345
  %v3381 = vpack.c.bf16 %v3348, %v3347
  %v3382 = vpack.c.bf16 %v3350, %v3349
  %v3383 = vld [vmem:[%s1129] sm:$0xf]
  %v3384 = vld [vmem:[%s3] sm:$0xf]
  %v3417 = vunpack.c.l.b16 %v3351
  %v3418 = vunpack.c.h.b16 %v3351
  %v3419 = vunpack.c.l.b16 %v3352
  %v3420 = vunpack.c.h.b16 %v3352
  %v3421 = vunpack.c.l.b16 %v3353
  %v3422 = vunpack.c.h.b16 %v3353
  %v3423 = vunpack.c.l.b16 %v3354
  %v3424 = vunpack.c.h.b16 %v3354
  %v3425 = vunpack.c.l.b16 %v3355
  %v3426 = vunpack.c.h.b16 %v3355
  %v3427 = vunpack.c.l.b16 %v3356
  %v3428 = vunpack.c.h.b16 %v3356
  %v3429 = vunpack.c.l.b16 %v3357
  %v3430 = vunpack.c.h.b16 %v3357
  %v3431 = vunpack.c.l.b16 %v3358
  %v3432 = vunpack.c.h.b16 %v3358
  %v3433 = vunpack.c.l.b16 %v3359
  %v3434 = vunpack.c.h.b16 %v3359
  %v3435 = vunpack.c.l.b16 %v3360
  %v3436 = vunpack.c.h.b16 %v3360
  %v3437 = vunpack.c.l.b16 %v3361
  %v3438 = vunpack.c.h.b16 %v3361
  %v3439 = vunpack.c.l.b16 %v3362
  %v3440 = vunpack.c.h.b16 %v3362
  %v3441 = vunpack.c.l.b16 %v3363
  %v3442 = vunpack.c.h.b16 %v3363
  %v3443 = vunpack.c.l.b16 %v3364
  %v3444 = vunpack.c.h.b16 %v3364
  %v3445 = vunpack.c.l.b16 %v3365
  %v3446 = vunpack.c.h.b16 %v3365
  %v3447 = vunpack.c.l.b16 %v3366
  %v3448 = vunpack.c.h.b16 %v3366
  %v3449 = vunpack.c.l.b16 %v3367
  %v3450 = vunpack.c.h.b16 %v3367
  %v3451 = vunpack.c.l.b16 %v3368
  %v3452 = vunpack.c.h.b16 %v3368
  %v3453 = vunpack.c.l.b16 %v3369
  %v3454 = vunpack.c.h.b16 %v3369
  %v3455 = vunpack.c.l.b16 %v3370
  %v3456 = vunpack.c.h.b16 %v3370
  %v3457 = vunpack.c.l.b16 %v3371
  %v3458 = vunpack.c.h.b16 %v3371
  %v3459 = vunpack.c.l.b16 %v3372
  %v3460 = vunpack.c.h.b16 %v3372
  %v3461 = vunpack.c.l.b16 %v3373
  %v3462 = vunpack.c.h.b16 %v3373
  %v3463 = vunpack.c.l.b16 %v3374
  %v3464 = vunpack.c.h.b16 %v3374
  %v3465 = vunpack.c.l.b16 %v3375
  %v3466 = vunpack.c.h.b16 %v3375
  %v3467 = vunpack.c.l.b16 %v3376
  %v3468 = vunpack.c.h.b16 %v3376
  %v3469 = vunpack.c.l.b16 %v3377
  %v3470 = vunpack.c.h.b16 %v3377
  %v3471 = vunpack.c.l.b16 %v3378
  %v3472 = vunpack.c.h.b16 %v3378
  %v3473 = vunpack.c.l.b16 %v3379
  %v3474 = vunpack.c.h.b16 %v3379
  %v3475 = vunpack.c.l.b16 %v3380
  %v3476 = vunpack.c.h.b16 %v3380
  %v3477 = vunpack.c.l.b16 %v3381
  %v3478 = vunpack.c.h.b16 %v3381
  %v3479 = vunpack.c.l.b16 %v3382
  %v3480 = vunpack.c.h.b16 %v3382
  %3481 = vset.pattern.permute.xlu0 0
  %3482 = vperm.xlu0 %3481, %v3417
  %v3483 = vpop.permute.xlu0 %3482
  %3484 = vset.pattern.permute.xlu0 0
  %3485 = vperm.xlu0 %3484, %v3418
  %v3486 = vpop.permute.xlu0 %3485
  %3487 = vset.pattern.permute.xlu0 0
  %3488 = vperm.xlu0 %3487, %v3419
  %v3489 = vpop.permute.xlu0 %3488
  %3490 = vset.pattern.permute.xlu0 0
  %3491 = vperm.xlu0 %3490, %v3420
  %v3492 = vpop.permute.xlu0 %3491
  %3493 = vset.pattern.permute.xlu0 0
  %3494 = vperm.xlu0 %3493, %v3421
  %v3495 = vpop.permute.xlu0 %3494
  %3496 = vset.pattern.permute.xlu0 0
  %3497 = vperm.xlu0 %3496, %v3422
  %v3498 = vpop.permute.xlu0 %3497
  %3499 = vset.pattern.permute.xlu0 0
  %3500 = vperm.xlu0 %3499, %v3423
  %v3501 = vpop.permute.xlu0 %3500
  %3502 = vset.pattern.permute.xlu0 0
  %3503 = vperm.xlu0 %3502, %v3424
  %v3504 = vpop.permute.xlu0 %3503
  %3505 = vset.pattern.permute.xlu0 0
  %3506 = vperm.xlu0 %3505, %v3425
  %v3507 = vpop.permute.xlu0 %3506
  %3508 = vset.pattern.permute.xlu0 0
  %3509 = vperm.xlu0 %3508, %v3426
  %v3510 = vpop.permute.xlu0 %3509
  %3511 = vset.pattern.permute.xlu0 0
  %3512 = vperm.xlu0 %3511, %v3427
  %v3513 = vpop.permute.xlu0 %3512
  %3514 = vset.pattern.permute.xlu0 0
  %3515 = vperm.xlu0 %3514, %v3428
  %v3516 = vpop.permute.xlu0 %3515
  %3517 = vset.pattern.permute.xlu0 0
  %3518 = vperm.xlu0 %3517, %v3429
  %v3519 = vpop.permute.xlu0 %3518
  %3520 = vset.pattern.permute.xlu0 0
  %3521 = vperm.xlu0 %3520, %v3430
  %v3522 = vpop.permute.xlu0 %3521
  %3523 = vset.pattern.permute.xlu0 0
  %3524 = vperm.xlu0 %3523, %v3431
  %v3525 = vpop.permute.xlu0 %3524
  %3526 = vset.pattern.permute.xlu0 0
  %3527 = vperm.xlu0 %3526, %v3432
  %v3528 = vpop.permute.xlu0 %3527
  %3529 = vset.pattern.permute.xlu0 0
  %3530 = vperm.xlu0 %3529, %v3433
  %v3531 = vpop.permute.xlu0 %3530
  %3532 = vset.pattern.permute.xlu0 0
  %3533 = vperm.xlu0 %3532, %v3434
  %v3534 = vpop.permute.xlu0 %3533
  %3535 = vset.pattern.permute.xlu0 0
  %3536 = vperm.xlu0 %3535, %v3435
  %v3537 = vpop.permute.xlu0 %3536
  %3538 = vset.pattern.permute.xlu0 0
  %3539 = vperm.xlu0 %3538, %v3436
  %v3540 = vpop.permute.xlu0 %3539
  %3541 = vset.pattern.permute.xlu0 0
  %3542 = vperm.xlu0 %3541, %v3437
  %v3543 = vpop.permute.xlu0 %3542
  %3544 = vset.pattern.permute.xlu0 0
  %3545 = vperm.xlu0 %3544, %v3438
  %v3546 = vpop.permute.xlu0 %3545
  %3547 = vset.pattern.permute.xlu0 0
  %3548 = vperm.xlu0 %3547, %v3439
  %v3549 = vpop.permute.xlu0 %3548
  %3550 = vset.pattern.permute.xlu0 0
  %3551 = vperm.xlu0 %3550, %v3440
  %v3552 = vpop.permute.xlu0 %3551
  %3553 = vset.pattern.permute.xlu0 0
  %3554 = vperm.xlu0 %3553, %v3441
  %v3555 = vpop.permute.xlu0 %3554
  %3556 = vset.pattern.permute.xlu0 0
  %3557 = vperm.xlu0 %3556, %v3442
  %v3558 = vpop.permute.xlu0 %3557
  %3559 = vset.pattern.permute.xlu0 0
  %3560 = vperm.xlu0 %3559, %v3443
  %v3561 = vpop.permute.xlu0 %3560
  %3562 = vset.pattern.permute.xlu0 0
  %3563 = vperm.xlu0 %3562, %v3444
  %v3564 = vpop.permute.xlu0 %3563
  %3565 = vset.pattern.permute.xlu0 0
  %3566 = vperm.xlu0 %3565, %v3445
  %v3567 = vpop.permute.xlu0 %3566
  %3568 = vset.pattern.permute.xlu0 0
  %3569 = vperm.xlu0 %3568, %v3446
  %v3570 = vpop.permute.xlu0 %3569
  %3571 = vset.pattern.permute.xlu0 0
  %3572 = vperm.xlu0 %3571, %v3447
  %v3573 = vpop.permute.xlu0 %3572
  %3574 = vset.pattern.permute.xlu0 0
  %3575 = vperm.xlu0 %3574, %v3448
  %v3576 = vpop.permute.xlu0 %3575
  %3577 = vset.pattern.permute.xlu0 0
  %3578 = vperm.xlu0 %3577, %v3449
  %v3579 = vpop.permute.xlu0 %3578
  %3580 = vset.pattern.permute.xlu0 0
  %3581 = vperm.xlu0 %3580, %v3450
  %v3582 = vpop.permute.xlu0 %3581
  %3583 = vset.pattern.permute.xlu0 0
  %3584 = vperm.xlu0 %3583, %v3451
  %v3585 = vpop.permute.xlu0 %3584
  %3586 = vset.pattern.permute.xlu0 0
  %3587 = vperm.xlu0 %3586, %v3452
  %v3588 = vpop.permute.xlu0 %3587
  %3589 = vset.pattern.permute.xlu0 0
  %3590 = vperm.xlu0 %3589, %v3453
  %v3591 = vpop.permute.xlu0 %3590
  %3592 = vset.pattern.permute.xlu0 0
  %3593 = vperm.xlu0 %3592, %v3454
  %v3594 = vpop.permute.xlu0 %3593
  %3595 = vset.pattern.permute.xlu0 0
  %3596 = vperm.xlu0 %3595, %v3455
  %v3597 = vpop.permute.xlu0 %3596
  %3598 = vset.pattern.permute.xlu0 0
  %3599 = vperm.xlu0 %3598, %v3456
  %v3600 = vpop.permute.xlu0 %3599
  %3601 = vset.pattern.permute.xlu0 0
  %3602 = vperm.xlu0 %3601, %v3457
  %v3603 = vpop.permute.xlu0 %3602
  %3604 = vset.pattern.permute.xlu0 0
  %3605 = vperm.xlu0 %3604, %v3458
  %v3606 = vpop.permute.xlu0 %3605
  %3607 = vset.pattern.permute.xlu0 0
  %3608 = vperm.xlu0 %3607, %v3459
  %v3609 = vpop.permute.xlu0 %3608
  %3610 = vset.pattern.permute.xlu0 0
  %3611 = vperm.xlu0 %3610, %v3460
  %v3612 = vpop.permute.xlu0 %3611
  %3613 = vset.pattern.permute.xlu0 0
  %3614 = vperm.xlu0 %3613, %v3461
  %v3615 = vpop.permute.xlu0 %3614
  %3616 = vset.pattern.permute.xlu0 0
  %3617 = vperm.xlu0 %3616, %v3462
  %v3618 = vpop.permute.xlu0 %3617
  %3619 = vset.pattern.permute.xlu0 0
  %3620 = vperm.xlu0 %3619, %v3463
  %v3621 = vpop.permute.xlu0 %3620
  %3622 = vset.pattern.permute.xlu0 0
  %3623 = vperm.xlu0 %3622, %v3464
  %v3624 = vpop.permute.xlu0 %3623
  %3625 = vset.pattern.permute.xlu0 0
  %3626 = vperm.xlu0 %3625, %v3465
  %v3627 = vpop.permute.xlu0 %3626
  %3628 = vset.pattern.permute.xlu0 0
  %3629 = vperm.xlu0 %3628, %v3466
  %v3630 = vpop.permute.xlu0 %3629
  %3631 = vset.pattern.permute.xlu0 0
  %3632 = vperm.xlu0 %3631, %v3467
  %v3633 = vpop.permute.xlu0 %3632
  %3634 = vset.pattern.permute.xlu0 0
  %3635 = vperm.xlu0 %3634, %v3468
  %v3636 = vpop.permute.xlu0 %3635
  %3637 = vset.pattern.permute.xlu0 0
  %3638 = vperm.xlu0 %3637, %v3469
  %v3639 = vpop.permute.xlu0 %3638
  %3640 = vset.pattern.permute.xlu0 0
  %3641 = vperm.xlu0 %3640, %v3470
  %v3642 = vpop.permute.xlu0 %3641
  %3643 = vset.pattern.permute.xlu0 0
  %3644 = vperm.xlu0 %3643, %v3471
  %v3645 = vpop.permute.xlu0 %3644
  %3646 = vset.pattern.permute.xlu0 0
  %3647 = vperm.xlu0 %3646, %v3472
  %v3648 = vpop.permute.xlu0 %3647
  %3649 = vset.pattern.permute.xlu0 0
  %3650 = vperm.xlu0 %3649, %v3473
  %v3651 = vpop.permute.xlu0 %3650
  %3652 = vset.pattern.permute.xlu0 0
  %3653 = vperm.xlu0 %3652, %v3474
  %v3654 = vpop.permute.xlu0 %3653
  %3655 = vset.pattern.permute.xlu0 0
  %3656 = vperm.xlu0 %3655, %v3475
  %v3657 = vpop.permute.xlu0 %3656
  %3658 = vset.pattern.permute.xlu0 0
  %3659 = vperm.xlu0 %3658, %v3476
  %v3660 = vpop.permute.xlu0 %3659
  %3661 = vset.pattern.permute.xlu0 0
  %3662 = vperm.xlu0 %3661, %v3477
  %v3663 = vpop.permute.xlu0 %3662
  %3664 = vset.pattern.permute.xlu0 0
  %3665 = vperm.xlu0 %3664, %v3478
  %v3666 = vpop.permute.xlu0 %3665
  %3667 = vset.pattern.permute.xlu0 0
  %3668 = vperm.xlu0 %3667, %v3479
  %v3669 = vpop.permute.xlu0 %3668
  %3670 = vset.pattern.permute.xlu0 0
  %3671 = vperm.xlu0 %3670, %v3480
  %v3672 = vpop.permute.xlu0 %3671
  %v3673 = vlaneseq
  %v3674 = vshrl.u32 %v3673, 7
  %v3675 = vsub.s32 %v31, %v3674
  %v3676 = vrot.slane %v3483, %v3675
  %v3677 = vlaneseq
  %v3678 = vshrl.u32 %v3677, 7
  %v3679 = vsub.s32 %v438, %v3678
  %v3680 = vrot.slane %v3486, %v3679
  %v3681 = vsel %vm443, %v3680, %v3676
  %v3682 = vlaneseq
  %v3683 = vshrl.u32 %v3682, 7
  %v3684 = vsub.s32 %v31, %v3683
  %v3685 = vrot.slane %v3489, %v3684
  %v3686 = vlaneseq
  %v3687 = vshrl.u32 %v3686, 7
  %v3688 = vsub.s32 %v438, %v3687
  %v3689 = vrot.slane %v3492, %v3688
  %v3690 = vsel %vm443, %v3689, %v3685
  %v3691 = vlaneseq
  %v3692 = vshrl.u32 %v3691, 7
  %v3693 = vsub.s32 %v31, %v3692
  %v3694 = vrot.slane %v3495, %v3693
  %v3695 = vlaneseq
  %v3696 = vshrl.u32 %v3695, 7
  %v3697 = vsub.s32 %v438, %v3696
  %v3698 = vrot.slane %v3498, %v3697
  %v3699 = vsel %vm443, %v3698, %v3694
  %v3700 = vlaneseq
  %v3701 = vshrl.u32 %v3700, 7
  %v3702 = vsub.s32 %v31, %v3701
  %v3703 = vrot.slane %v3501, %v3702
  %v3704 = vlaneseq
  %v3705 = vshrl.u32 %v3704, 7
  %v3706 = vsub.s32 %v438, %v3705
  %v3707 = vrot.slane %v3504, %v3706
  %v3708 = vsel %vm443, %v3707, %v3703
  %v3709 = vlaneseq
  %v3710 = vshrl.u32 %v3709, 7
  %v3711 = vsub.s32 %v31, %v3710
  %v3712 = vrot.slane %v3507, %v3711
  %v3713 = vlaneseq
  %v3714 = vshrl.u32 %v3713, 7
  %v3715 = vsub.s32 %v438, %v3714
  %v3716 = vrot.slane %v3510, %v3715
  %v3717 = vsel %vm443, %v3716, %v3712
  %v3718 = vlaneseq
  %v3719 = vshrl.u32 %v3718, 7
  %v3720 = vsub.s32 %v31, %v3719
  %v3721 = vrot.slane %v3513, %v3720
  %v3722 = vlaneseq
  %v3723 = vshrl.u32 %v3722, 7
  %v3724 = vsub.s32 %v438, %v3723
  %v3725 = vrot.slane %v3516, %v3724
  %v3726 = vsel %vm443, %v3725, %v3721
  %v3727 = vlaneseq
  %v3728 = vshrl.u32 %v3727, 7
  %v3729 = vsub.s32 %v31, %v3728
  %v3730 = vrot.slane %v3519, %v3729
  %v3731 = vlaneseq
  %v3732 = vshrl.u32 %v3731, 7
  %v3733 = vsub.s32 %v438, %v3732
  %v3734 = vrot.slane %v3522, %v3733
  %v3735 = vsel %vm443, %v3734, %v3730
  %v3736 = vlaneseq
  %v3737 = vshrl.u32 %v3736, 7
  %v3738 = vsub.s32 %v31, %v3737
  %v3739 = vrot.slane %v3525, %v3738
  %v3740 = vlaneseq
  %v3741 = vshrl.u32 %v3740, 7
  %v3742 = vsub.s32 %v438, %v3741
  %v3743 = vrot.slane %v3528, %v3742
  %v3744 = vsel %vm443, %v3743, %v3739
  %v3745 = vlaneseq
  %v3746 = vshrl.u32 %v3745, 7
  %v3747 = vsub.s32 %v31, %v3746
  %v3748 = vrot.slane %v3531, %v3747
  %v3749 = vlaneseq
  %v3750 = vshrl.u32 %v3749, 7
  %v3751 = vsub.s32 %v438, %v3750
  %v3752 = vrot.slane %v3534, %v3751
  %v3753 = vsel %vm443, %v3752, %v3748
  %v3754 = vlaneseq
  %v3755 = vshrl.u32 %v3754, 7
  %v3756 = vsub.s32 %v31, %v3755
  %v3757 = vrot.slane %v3537, %v3756
  %v3758 = vlaneseq
  %v3759 = vshrl.u32 %v3758, 7
  %v3760 = vsub.s32 %v438, %v3759
  %v3761 = vrot.slane %v3540, %v3760
  %v3762 = vsel %vm443, %v3761, %v3757
  %v3763 = vlaneseq
  %v3764 = vshrl.u32 %v3763, 7
  %v3765 = vsub.s32 %v31, %v3764
  %v3766 = vrot.slane %v3543, %v3765
  %v3767 = vlaneseq
  %v3768 = vshrl.u32 %v3767, 7
  %v3769 = vsub.s32 %v438, %v3768
  %v3770 = vrot.slane %v3546, %v3769
  %v3771 = vsel %vm443, %v3770, %v3766
  %v3772 = vlaneseq
  %v3773 = vshrl.u32 %v3772, 7
  %v3774 = vsub.s32 %v31, %v3773
  %v3775 = vrot.slane %v3549, %v3774
  %v3776 = vlaneseq
  %v3777 = vshrl.u32 %v3776, 7
  %v3778 = vsub.s32 %v438, %v3777
  %v3779 = vrot.slane %v3552, %v3778
  %v3780 = vsel %vm443, %v3779, %v3775
  %v3781 = vlaneseq
  %v3782 = vshrl.u32 %v3781, 7
  %v3783 = vsub.s32 %v31, %v3782
  %v3784 = vrot.slane %v3555, %v3783
  %v3785 = vlaneseq
  %v3786 = vshrl.u32 %v3785, 7
  %v3787 = vsub.s32 %v438, %v3786
  %v3788 = vrot.slane %v3558, %v3787
  %v3789 = vsel %vm443, %v3788, %v3784
  %v3790 = vlaneseq
  %v3791 = vshrl.u32 %v3790, 7
  %v3792 = vsub.s32 %v31, %v3791
  %v3793 = vrot.slane %v3561, %v3792
  %v3794 = vlaneseq
  %v3795 = vshrl.u32 %v3794, 7
  %v3796 = vsub.s32 %v438, %v3795
  %v3797 = vrot.slane %v3564, %v3796
  %v3798 = vsel %vm443, %v3797, %v3793
  %v3799 = vlaneseq
  %v3800 = vshrl.u32 %v3799, 7
  %v3801 = vsub.s32 %v31, %v3800
  %v3802 = vrot.slane %v3567, %v3801
  %v3803 = vlaneseq
  %v3804 = vshrl.u32 %v3803, 7
  %v3805 = vsub.s32 %v438, %v3804
  %v3806 = vrot.slane %v3570, %v3805
  %v3807 = vsel %vm443, %v3806, %v3802
  %v3808 = vlaneseq
  %v3809 = vshrl.u32 %v3808, 7
  %v3810 = vsub.s32 %v31, %v3809
  %v3811 = vrot.slane %v3573, %v3810
  %v3812 = vlaneseq
  %v3813 = vshrl.u32 %v3812, 7
  %v3814 = vsub.s32 %v438, %v3813
  %v3815 = vrot.slane %v3576, %v3814
  %v3816 = vsel %vm443, %v3815, %v3811
  %v3817 = vlaneseq
  %v3818 = vshrl.u32 %v3817, 7
  %v3819 = vsub.s32 %v31, %v3818
  %v3820 = vrot.slane %v3579, %v3819
  %v3821 = vlaneseq
  %v3822 = vshrl.u32 %v3821, 7
  %v3823 = vsub.s32 %v438, %v3822
  %v3824 = vrot.slane %v3582, %v3823
  %v3825 = vsel %vm443, %v3824, %v3820
  %v3826 = vlaneseq
  %v3827 = vshrl.u32 %v3826, 7
  %v3828 = vsub.s32 %v31, %v3827
  %v3829 = vrot.slane %v3585, %v3828
  %v3830 = vlaneseq
  %v3831 = vshrl.u32 %v3830, 7
  %v3832 = vsub.s32 %v438, %v3831
  %v3833 = vrot.slane %v3588, %v3832
  %v3834 = vsel %vm443, %v3833, %v3829
  %v3835 = vlaneseq
  %v3836 = vshrl.u32 %v3835, 7
  %v3837 = vsub.s32 %v31, %v3836
  %v3838 = vrot.slane %v3591, %v3837
  %v3839 = vlaneseq
  %v3840 = vshrl.u32 %v3839, 7
  %v3841 = vsub.s32 %v438, %v3840
  %v3842 = vrot.slane %v3594, %v3841
  %v3843 = vsel %vm443, %v3842, %v3838
  %v3844 = vlaneseq
  %v3845 = vshrl.u32 %v3844, 7
  %v3846 = vsub.s32 %v31, %v3845
  %v3847 = vrot.slane %v3597, %v3846
  %v3848 = vlaneseq
  %v3849 = vshrl.u32 %v3848, 7
  %v3850 = vsub.s32 %v438, %v3849
  %v3851 = vrot.slane %v3600, %v3850
  %v3852 = vsel %vm443, %v3851, %v3847
  %v3853 = vlaneseq
  %v3854 = vshrl.u32 %v3853, 7
  %v3855 = vsub.s32 %v31, %v3854
  %v3856 = vrot.slane %v3603, %v3855
  %v3857 = vlaneseq
  %v3858 = vshrl.u32 %v3857, 7
  %v3859 = vsub.s32 %v438, %v3858
  %v3860 = vrot.slane %v3606, %v3859
  %v3861 = vsel %vm443, %v3860, %v3856
  %v3862 = vlaneseq
  %v3863 = vshrl.u32 %v3862, 7
  %v3864 = vsub.s32 %v31, %v3863
  %v3865 = vrot.slane %v3609, %v3864
  %v3866 = vlaneseq
  %v3867 = vshrl.u32 %v3866, 7
  %v3868 = vsub.s32 %v438, %v3867
  %v3869 = vrot.slane %v3612, %v3868
  %v3870 = vsel %vm443, %v3869, %v3865
  %v3871 = vlaneseq
  %v3872 = vshrl.u32 %v3871, 7
  %v3873 = vsub.s32 %v31, %v3872
  %v3874 = vrot.slane %v3615, %v3873
  %v3875 = vlaneseq
  %v3876 = vshrl.u32 %v3875, 7
  %v3877 = vsub.s32 %v438, %v3876
  %v3878 = vrot.slane %v3618, %v3877
  %v3879 = vsel %vm443, %v3878, %v3874
  %v3880 = vlaneseq
  %v3881 = vshrl.u32 %v3880, 7
  %v3882 = vsub.s32 %v31, %v3881
  %v3883 = vrot.slane %v3621, %v3882
  %v3884 = vlaneseq
  %v3885 = vshrl.u32 %v3884, 7
  %v3886 = vsub.s32 %v438, %v3885
  %v3887 = vrot.slane %v3624, %v3886
  %v3888 = vsel %vm443, %v3887, %v3883
  %v3889 = vlaneseq
  %v3890 = vshrl.u32 %v3889, 7
  %v3891 = vsub.s32 %v31, %v3890
  %v3892 = vrot.slane %v3627, %v3891
  %v3893 = vlaneseq
  %v3894 = vshrl.u32 %v3893, 7
  %v3895 = vsub.s32 %v438, %v3894
  %v3896 = vrot.slane %v3630, %v3895
  %v3897 = vsel %vm443, %v3896, %v3892
  %v3898 = vlaneseq
  %v3899 = vshrl.u32 %v3898, 7
  %v3900 = vsub.s32 %v31, %v3899
  %v3901 = vrot.slane %v3633, %v3900
  %v3902 = vlaneseq
  %v3903 = vshrl.u32 %v3902, 7
  %v3904 = vsub.s32 %v438, %v3903
  %v3905 = vrot.slane %v3636, %v3904
  %v3906 = vsel %vm443, %v3905, %v3901
  %v3907 = vlaneseq
  %v3908 = vshrl.u32 %v3907, 7
  %v3909 = vsub.s32 %v31, %v3908
  %v3910 = vrot.slane %v3639, %v3909
  %v3911 = vlaneseq
  %v3912 = vshrl.u32 %v3911, 7
  %v3913 = vsub.s32 %v438, %v3912
  %v3914 = vrot.slane %v3642, %v3913
  %v3915 = vsel %vm443, %v3914, %v3910
  %v3916 = vlaneseq
  %v3917 = vshrl.u32 %v3916, 7
  %v3918 = vsub.s32 %v31, %v3917
  %v3919 = vrot.slane %v3645, %v3918
  %v3920 = vlaneseq
  %v3921 = vshrl.u32 %v3920, 7
  %v3922 = vsub.s32 %v438, %v3921
  %v3923 = vrot.slane %v3648, %v3922
  %v3924 = vsel %vm443, %v3923, %v3919
  %v3925 = vlaneseq
  %v3926 = vshrl.u32 %v3925, 7
  %v3927 = vsub.s32 %v31, %v3926
  %v3928 = vrot.slane %v3651, %v3927
  %v3929 = vlaneseq
  %v3930 = vshrl.u32 %v3929, 7
  %v3931 = vsub.s32 %v438, %v3930
  %v3932 = vrot.slane %v3654, %v3931
  %v3933 = vsel %vm443, %v3932, %v3928
  %v3934 = vlaneseq
  %v3935 = vshrl.u32 %v3934, 7
  %v3936 = vsub.s32 %v31, %v3935
  %v3937 = vrot.slane %v3657, %v3936
  %v3938 = vlaneseq
  %v3939 = vshrl.u32 %v3938, 7
  %v3940 = vsub.s32 %v438, %v3939
  %v3941 = vrot.slane %v3660, %v3940
  %v3942 = vsel %vm443, %v3941, %v3937
  %v3943 = vlaneseq
  %v3944 = vshrl.u32 %v3943, 7
  %v3945 = vsub.s32 %v31, %v3944
  %v3946 = vrot.slane %v3663, %v3945
  %v3947 = vlaneseq
  %v3948 = vshrl.u32 %v3947, 7
  %v3949 = vsub.s32 %v438, %v3948
  %v3950 = vrot.slane %v3666, %v3949
  %v3951 = vsel %vm443, %v3950, %v3946
  %v3952 = vlaneseq
  %v3953 = vshrl.u32 %v3952, 7
  %v3954 = vsub.s32 %v31, %v3953
  %v3955 = vrot.slane %v3669, %v3954
  %v3956 = vlaneseq
  %v3957 = vshrl.u32 %v3956, 7
  %v3958 = vsub.s32 %v438, %v3957
  %v3959 = vrot.slane %v3672, %v3958
  %v3960 = vsel %vm443, %v3959, %v3955
  %v3961 = vsel %vm724, %v3690, %v3681
  %v3962 = vsel %vm726, %v3699, %v3961
  %v3963 = vsel %vm728, %v3708, %v3962
  %v3964 = vsel %vm730, %v3717, %v3963
  %v3965 = vsel %vm732, %v3726, %v3964
  %v3966 = vsel %vm734, %v3735, %v3965
  %v3967 = vsel %vm736, %v3744, %v3966
  %v3968 = vsel %vm724, %v3762, %v3753
  %v3969 = vsel %vm726, %v3771, %v3968
  %v3970 = vsel %vm728, %v3780, %v3969
  %v3971 = vsel %vm730, %v3789, %v3970
  %v3972 = vsel %vm732, %v3798, %v3971
  %v3973 = vsel %vm734, %v3807, %v3972
  %v3974 = vsel %vm736, %v3816, %v3973
  %v3975 = vsel %vm724, %v3834, %v3825
  %v3976 = vsel %vm726, %v3843, %v3975
  %v3977 = vsel %vm728, %v3852, %v3976
  %v3978 = vsel %vm730, %v3861, %v3977
  %v3979 = vsel %vm732, %v3870, %v3978
  %v3980 = vsel %vm734, %v3879, %v3979
  %v3981 = vsel %vm736, %v3888, %v3980
  %v3982 = vsel %vm724, %v3906, %v3897
  %v3983 = vsel %vm726, %v3915, %v3982
  %v3984 = vsel %vm728, %v3924, %v3983
  %v3985 = vsel %vm730, %v3933, %v3984
  %v3986 = vsel %vm732, %v3942, %v3985
  %v3987 = vsel %vm734, %v3951, %v3986
  %v3988 = vsel %vm736, %v3960, %v3987
  %v3989 = vpack.c.b16 %v3974, %v3967
  %v3990 = vpack.c.b16 %v3988, %v3981
  %v3994 = vsel %vm801, %v3384, 0
  %3996 = vmatprep.subr.bf16.mxu0 0
  %3997 = vmatpush1.bf16.msra.mxu0 %v3989
  %3998 = vmatprep.subr.bf16.mxu0 0
  %3999 = vmatpush1.bf16.msra.mxu0 %v3990
  %4000 = vmatprep.subr.bf16.mxu0 0
  %4001 = vmatpush1.bf16.msra.mxu0 0
  %4002 = vmatprep.subr.bf16.mxu0 0
  %4003 = vmatpush1.bf16.msra.mxu0 0
  %4004 = vmatprep.subr.bf16.mxu0 0
  %4005 = vmatpush1.bf16.msra.mxu0 0
  %4006 = vmatprep.subr.bf16.mxu0 0
  %4007 = vmatpush1.bf16.msra.mxu0 0
  %4008 = vmatprep.subr.bf16.mxu0 0
  %4009 = vmatpush1.bf16.msra.mxu0 0
  %4010 = vmatprep.subr.bf16.mxu0 0
  %4011 = vmatpush1.bf16.msra.mxu0 0
  %4012 = vmatprep.subr.bf16.mxu0 0
  %4013 = vmatpush1.bf16.msra.mxu0 0
  %4014 = vmatprep.subr.bf16.mxu0 0
  %4015 = vmatpush1.bf16.msra.mxu0 0
  %4016 = vmatprep.subr.bf16.mxu0 0
  %4017 = vmatpush1.bf16.msra.mxu0 0
  %4018 = vmatprep.subr.bf16.mxu0 0
  %4019 = vmatpush1.bf16.msra.mxu0 0
  %4020 = vmatprep.subr.bf16.mxu0 0
  %4021 = vmatpush1.bf16.msra.mxu0 0
  %4022 = vmatprep.subr.bf16.mxu0 0
  %4023 = vmatpush1.bf16.msra.mxu0 0
  %4024 = vmatprep.subr.bf16.mxu0 0
  %4025 = vmatpush1.bf16.msra.mxu0 0
  %4026 = vmatprep.subr.bf16.mxu0 0
  %4027 = vmatpush1.bf16.msra.mxu0 0
  %4028 = vmatprep.mubr.bf16.mxu0 0
  %4029 = vmatmul.mubr.bf16.gmra.mrb[0].mxu0 %v3994
  %v4030 = vpop.f32.mrb[0].mxu0
  %v4031 = vadd.f32 0.0, %v4030
  %v4032 = vpop.f32.mrb[0].mxu0
  %v4033 = vpop.f32.mrb[0].mxu0
  %v4034 = vpop.f32.mrb[0].mxu0
  %4035 = vdwg.mxu0
  %v4036 = vpack.c.bf16 %v4031, %v4031
  %v4038 = vsel %vm763, %v4036, 0
  %4040 = vmatprep.subr.bf16.mxu0 0
  %4041 = vmatpush1.bf16.msra.mxu0 %v47
  %4042 = vmatprep.subr.bf16.mxu0 0
  %4043 = vmatpush1.bf16.msra.mxu0 0
  %4044 = vmatprep.subr.bf16.mxu0 0
  %4045 = vmatpush1.bf16.msra.mxu0 0
  %4046 = vmatprep.subr.bf16.mxu0 0
  %4047 = vmatpush1.bf16.msra.mxu0 0
  %4048 = vmatprep.subr.bf16.mxu0 0
  %4049 = vmatpush1.bf16.msra.mxu0 0
  %4050 = vmatprep.subr.bf16.mxu0 0
  %4051 = vmatpush1.bf16.msra.mxu0 0
  %4052 = vmatprep.subr.bf16.mxu0 0
  %4053 = vmatpush1.bf16.msra.mxu0 0
  %4054 = vmatprep.subr.bf16.mxu0 0
  %4055 = vmatpush1.bf16.msra.mxu0 0
  %4056 = vmatprep.subr.bf16.mxu0 0
  %4057 = vmatpush1.bf16.msra.mxu0 0
  %4058 = vmatprep.subr.bf16.mxu0 0
  %4059 = vmatpush1.bf16.msra.mxu0 0
  %4060 = vmatprep.subr.bf16.mxu0 0
  %4061 = vmatpush1.bf16.msra.mxu0 0
  %4062 = vmatprep.subr.bf16.mxu0 0
  %4063 = vmatpush1.bf16.msra.mxu0 0
  %4064 = vmatprep.subr.bf16.mxu0 0
  %4065 = vmatpush1.bf16.msra.mxu0 0
  %4066 = vmatprep.subr.bf16.mxu0 0
  %4067 = vmatpush1.bf16.msra.mxu0 0
  %4068 = vmatprep.subr.bf16.mxu0 0
  %4069 = vmatpush1.bf16.msra.mxu0 0
  %4070 = vmatprep.subr.bf16.mxu0 0
  %4071 = vmatpush1.bf16.msra.mxu0 0
  %4072 = vmatprep.mubr.bf16.mxu0 0
  %4073 = vmatmul.mubr.bf16.gmra.mrb[0].mxu0 %v4038
  %v4074 = vpop.f32.mrb[0].mxu0
  %v4075 = vadd.f32 0.0, %v4074
  %v4076 = vpop.f32.mrb[0].mxu0
  %v4077 = vpop.f32.mrb[0].mxu0
  %v4078 = vpop.f32.mrb[0].mxu0
  %4079 = vdwg.mxu0
  %v4081 = vsel %vm801, %v3383, 0
  %4083 = vmatprep.subr.bf16.mxu0 0
  %4084 = vmatpush1.bf16.msra.mxu0 %v3989
  %4085 = vmatprep.subr.bf16.mxu0 0
  %4086 = vmatpush1.bf16.msra.mxu0 %v3990
  %4087 = vmatprep.subr.bf16.mxu0 0
  %4088 = vmatpush1.bf16.msra.mxu0 0
  %4089 = vmatprep.subr.bf16.mxu0 0
  %4090 = vmatpush1.bf16.msra.mxu0 0
  %4091 = vmatprep.subr.bf16.mxu0 0
  %4092 = vmatpush1.bf16.msra.mxu0 0
  %4093 = vmatprep.subr.bf16.mxu0 0
  %4094 = vmatpush1.bf16.msra.mxu0 0
  %4095 = vmatprep.subr.bf16.mxu0 0
  %4096 = vmatpush1.bf16.msra.mxu0 0
  %4097 = vmatprep.subr.bf16.mxu0 0
  %4098 = vmatpush1.bf16.msra.mxu0 0
  %4099 = vmatprep.subr.bf16.mxu0 0
  %4100 = vmatpush1.bf16.msra.mxu0 0
  %4101 = vmatprep.subr.bf16.mxu0 0
  %4102 = vmatpush1.bf16.msra.mxu0 0
  %4103 = vmatprep.subr.bf16.mxu0 0
  %4104 = vmatpush1.bf16.msra.mxu0 0
  %4105 = vmatprep.subr.bf16.mxu0 0
  %4106 = vmatpush1.bf16.msra.mxu0 0
  %4107 = vmatprep.subr.bf16.mxu0 0
  %4108 = vmatpush1.bf16.msra.mxu0 0
  %4109 = vmatprep.subr.bf16.mxu0 0
  %4110 = vmatpush1.bf16.msra.mxu0 0
  %4111 = vmatprep.subr.bf16.mxu0 0
  %4112 = vmatpush1.bf16.msra.mxu0 0
  %4113 = vmatprep.subr.bf16.mxu0 0
  %4114 = vmatpush1.bf16.msra.mxu0 0
  %4115 = vmatprep.mubr.bf16.mxu0 0
  %4116 = vmatmul.mubr.bf16.gmra.mrb[0].mxu0 %v4081
  %v4117 = vpop.f32.mrb[0].mxu0
  %v4118 = vadd.f32 %v4075, %v4117
  %v4119 = vpop.f32.mrb[0].mxu0
  %v4120 = vpop.f32.mrb[0].mxu0
  %v4121 = vpop.f32.mrb[0].mxu0
  %4122 = vdwg.mxu0
  %v4123 = vld [vmem:[%s1870] sm:$0xf]
  %v4125 = vsel %vm801, %v4123, 0
  %4127 = vmatprep.subr.bf16.mxu0 0
  %4128 = vmatpush1.bf16.msra.mxu0 %v3989
  %4129 = vmatprep.subr.bf16.mxu0 0
  %4130 = vmatpush1.bf16.msra.mxu0 %v3990
  %4131 = vmatprep.subr.bf16.mxu0 0
  %4132 = vmatpush1.bf16.msra.mxu0 0
  %4133 = vmatprep.subr.bf16.mxu0 0
  %4134 = vmatpush1.bf16.msra.mxu0 0
  %4135 = vmatprep.subr.bf16.mxu0 0
  %4136 = vmatpush1.bf16.msra.mxu0 0
  %4137 = vmatprep.subr.bf16.mxu0 0
  %4138 = vmatpush1.bf16.msra.mxu0 0
  %4139 = vmatprep.subr.bf16.mxu0 0
  %4140 = vmatpush1.bf16.msra.mxu0 0
  %4141 = vmatprep.subr.bf16.mxu0 0
  %4142 = vmatpush1.bf16.msra.mxu0 0
  %4143 = vmatprep.subr.bf16.mxu0 0
  %4144 = vmatpush1.bf16.msra.mxu0 0
  %4145 = vmatprep.subr.bf16.mxu0 0
  %4146 = vmatpush1.bf16.msra.mxu0 0
  %4147 = vmatprep.subr.bf16.mxu0 0
  %4148 = vmatpush1.bf16.msra.mxu0 0
  %4149 = vmatprep.subr.bf16.mxu0 0
  %4150 = vmatpush1.bf16.msra.mxu0 0
  %4151 = vmatprep.subr.bf16.mxu0 0
  %4152 = vmatpush1.bf16.msra.mxu0 0
  %4153 = vmatprep.subr.bf16.mxu0 0
  %4154 = vmatpush1.bf16.msra.mxu0 0
  %4155 = vmatprep.subr.bf16.mxu0 0
  %4156 = vmatpush1.bf16.msra.mxu0 0
  %4157 = vmatprep.subr.bf16.mxu0 0
  %4158 = vmatpush1.bf16.msra.mxu0 0
  %4159 = vmatprep.mubr.bf16.mxu0 0
  %4160 = vmatmul.mubr.bf16.gmra.mrb[0].mxu0 %v4125
  %v4161 = vpop.f32.mrb[0].mxu0
  %v4162 = vadd.f32 0.0, %v4161
  %v4163 = vpop.f32.mrb[0].mxu0
  %v4164 = vpop.f32.mrb[0].mxu0
  %v4165 = vpop.f32.mrb[0].mxu0
  %4166 = vdwg.mxu0
  %v4167 = vpack.c.bf16 %v4162, %v4162
  %v4169 = vsel %vm763, %v4167, 0
  %4171 = vmatprep.subr.bf16.mxu0 0
  %4172 = vmatpush1.bf16.msra.mxu0 %v39
  %4173 = vmatprep.subr.bf16.mxu0 0
  %4174 = vmatpush1.bf16.msra.mxu0 0
  %4175 = vmatprep.subr.bf16.mxu0 0
  %4176 = vmatpush1.bf16.msra.mxu0 0
  %4177 = vmatprep.subr.bf16.mxu0 0
  %4178 = vmatpush1.bf16.msra.mxu0 0
  %4179 = vmatprep.subr.bf16.mxu0 0
  %4180 = vmatpush1.bf16.msra.mxu0 0
  %4181 = vmatprep.subr.bf16.mxu0 0
  %4182 = vmatpush1.bf16.msra.mxu0 0
  %4183 = vmatprep.subr.bf16.mxu0 0
  %4184 = vmatpush1.bf16.msra.mxu0 0
  %4185 = vmatprep.subr.bf16.mxu0 0
  %4186 = vmatpush1.bf16.msra.mxu0 0
  %4187 = vmatprep.subr.bf16.mxu0 0
  %4188 = vmatpush1.bf16.msra.mxu0 0
  %4189 = vmatprep.subr.bf16.mxu0 0
  %4190 = vmatpush1.bf16.msra.mxu0 0
  %4191 = vmatprep.subr.bf16.mxu0 0
  %4192 = vmatpush1.bf16.msra.mxu0 0
  %4193 = vmatprep.subr.bf16.mxu0 0
  %4194 = vmatpush1.bf16.msra.mxu0 0
  %4195 = vmatprep.subr.bf16.mxu0 0
  %4196 = vmatpush1.bf16.msra.mxu0 0
  %4197 = vmatprep.subr.bf16.mxu0 0
  %4198 = vmatpush1.bf16.msra.mxu0 0
  %4199 = vmatprep.subr.bf16.mxu0 0
  %4200 = vmatpush1.bf16.msra.mxu0 0
  %4201 = vmatprep.subr.bf16.mxu0 0
  %4202 = vmatpush1.bf16.msra.mxu0 0
  %4203 = vmatprep.mubr.bf16.mxu0 0
  %4204 = vmatmul.mubr.bf16.gmra.mrb[0].mxu0 %v4169
  %v4205 = vpop.f32.mrb[0].mxu0
  %v4206 = vadd.f32 0.0, %v4205
  %v4207 = vpop.f32.mrb[0].mxu0
  %v4208 = vpop.f32.mrb[0].mxu0
  %v4209 = vpop.f32.mrb[0].mxu0
  %4210 = vdwg.mxu0
  %v4211 = vadd.f32 %v4118, %v4206
  %v4212 = vld [vmem:[%s4] sm:$0xff]
  %4214 = vset.pattern.permute.xlu0 0
  %4215 = vperm.xlu0 %4214, %v4212
  %v4216 = vpop.permute.xlu0 %4215
  %v4218 = vmul.f32 %v4211, %v4216
  %v4219 = vld [vmem:[%s5] sm:$0xff]
  %4221 = vset.pattern.permute.xlu0 0
  %4222 = vperm.xlu0 %4221, %v4219
  %v4223 = vpop.permute.xlu0 %4222
  %v4225 = vadd.f32 %v4218, %v4223
  %v4226 = vmax.f32 %v4225, 0.0
  %v4227 = vpack.c.bf16 %v4226, %v4226
  %v4228 = vld [vmem:[%s1976] sm:$0xf]
  %v4229 = vld [vmem:[%s1976 + $0x4] sm:$0xf]
  %v4230 = vld [vmem:[%s1976 + $0x8] sm:$0xf]
  %v4231 = vld [vmem:[%s1976 + $0xc] sm:$0xf]
  %v4232 = vld [vmem:[%s6] sm:$0xf]
  %v4233 = vld [vmem:[%s6 + $0x4] sm:$0xf]
  %v4234 = vld [vmem:[%s6 + $0x8] sm:$0xf]
  %v4235 = vld [vmem:[%s6 + $0xc] sm:$0xf]
  %v4240 = vunpack.c.l.b16 %v4232
  %v4241 = vunpack.c.l.b16 %v4233
  %v4242 = vunpack.c.l.b16 %v4234
  %v4243 = vunpack.c.l.b16 %v4235
  %v4244 = vpack.c.b16 %v4241, %v4240
  %v4245 = vpack.c.b16 %v4243, %v4242
  %v4247 = vsel %vm112, %v4244, 0
  %v4250 = vsel %vm112, %v4245, 0
  %v4253 = vsel %vm2001, %v4227, 0
  %4255 = vmatprep.subr.bf16.mxu0 0
  %4256 = vmatpush1.bf16.msra.mxu0 %v4253
  %4257 = vmatprep.subr.bf16.mxu0 0
  %4258 = vmatpush1.bf16.msra.mxu0 0
  %4259 = vmatprep.subr.bf16.mxu0 0
  %4260 = vmatpush1.bf16.msra.mxu0 0
  %4261 = vmatprep.subr.bf16.mxu0 0
  %4262 = vmatpush1.bf16.msra.mxu0 0
  %4263 = vmatprep.subr.bf16.mxu0 0
  %4264 = vmatpush1.bf16.msra.mxu0 0
  %4265 = vmatprep.subr.bf16.mxu0 0
  %4266 = vmatpush1.bf16.msra.mxu0 0
  %4267 = vmatprep.subr.bf16.mxu0 0
  %4268 = vmatpush1.bf16.msra.mxu0 0
  %4269 = vmatprep.subr.bf16.mxu0 0
  %4270 = vmatpush1.bf16.msra.mxu0 0
  %4271 = vmatprep.subr.bf16.mxu0 0
  %4272 = vmatpush1.bf16.msra.mxu0 0
  %4273 = vmatprep.subr.bf16.mxu0 0
  %4274 = vmatpush1.bf16.msra.mxu0 0
  %4275 = vmatprep.subr.bf16.mxu0 0
  %4276 = vmatpush1.bf16.msra.mxu0 0
  %4277 = vmatprep.subr.bf16.mxu0 0
  %4278 = vmatpush1.bf16.msra.mxu0 0
  %4279 = vmatprep.subr.bf16.mxu0 0
  %4280 = vmatpush1.bf16.msra.mxu0 0
  %4281 = vmatprep.subr.bf16.mxu0 0
  %4282 = vmatpush1.bf16.msra.mxu0 0
  %4283 = vmatprep.subr.bf16.mxu0 0
  %4284 = vmatpush1.bf16.msra.mxu0 0
  %4285 = vmatprep.subr.bf16.mxu0 0
  %4286 = vmatpush1.bf16.msra.mxu0 0
  %4287 = vmatprep.mubr.bf16.mxu0 0
  %4288 = vmatmul.mubr.bf16.gmra.mrb[0].mxu0 %v4247
  %v4289 = vpop.f32.mrb[0].mxu0
  %v4290 = vadd.f32 0.0, %v4289
  %v4291 = vpop.f32.mrb[0].mxu0
  %v4292 = vpop.f32.mrb[0].mxu0
  %v4293 = vadd.f32 0.0, %v4292
  %v4294 = vpop.f32.mrb[0].mxu0
  %4295 = vmatprep.mubr.bf16.mxu0 0
  %4296 = vmatmul.mubr.bf16.gmra.mrb[0].mxu0 %v4250
  %v4297 = vpop.f32.mrb[0].mxu0
  %v4298 = vadd.f32 0.0, %v4297
  %v4299 = vpop.f32.mrb[0].mxu0
  %v4300 = vpop.f32.mrb[0].mxu0
  %v4301 = vadd.f32 0.0, %v4300
  %v4302 = vpop.f32.mrb[0].mxu0
  %4303 = vdwg.mxu0
  %v4304 = vpack.c.bf16 %v4293, %v4290
  %v4305 = vpack.c.bf16 %v4301, %v4298
  %v4307 = vsel %vm763, %v4304, 0
  %v4310 = vsel %vm763, %v4305, 0
  %4312 = vmatprep.subr.bf16.mxu0 0
  %4313 = vmatpush1.bf16.msra.mxu0 %v47
  %4314 = vmatprep.subr.bf16.mxu0 0
  %4315 = vmatpush1.bf16.msra.mxu0 0
  %4316 = vmatprep.subr.bf16.mxu0 0
  %4317 = vmatpush1.bf16.msra.mxu0 0
  %4318 = vmatprep.subr.bf16.mxu0 0
  %4319 = vmatpush1.bf16.msra.mxu0 0
  %4320 = vmatprep.subr.bf16.mxu0 0
  %4321 = vmatpush1.bf16.msra.mxu0 0
  %4322 = vmatprep.subr.bf16.mxu0 0
  %4323 = vmatpush1.bf16.msra.mxu0 0
  %4324 = vmatprep.subr.bf16.mxu0 0
  %4325 = vmatpush1.bf16.msra.mxu0 0
  %4326 = vmatprep.subr.bf16.mxu0 0
  %4327 = vmatpush1.bf16.msra.mxu0 0
  %4328 = vmatprep.subr.bf16.mxu0 0
  %4329 = vmatpush1.bf16.msra.mxu0 0
  %4330 = vmatprep.subr.bf16.mxu0 0
  %4331 = vmatpush1.bf16.msra.mxu0 0
  %4332 = vmatprep.subr.bf16.mxu0 0
  %4333 = vmatpush1.bf16.msra.mxu0 0
  %4334 = vmatprep.subr.bf16.mxu0 0
  %4335 = vmatpush1.bf16.msra.mxu0 0
  %4336 = vmatprep.subr.bf16.mxu0 0
  %4337 = vmatpush1.bf16.msra.mxu0 0
  %4338 = vmatprep.subr.bf16.mxu0 0
  %4339 = vmatpush1.bf16.msra.mxu0 0
  %4340 = vmatprep.subr.bf16.mxu0 0
  %4341 = vmatpush1.bf16.msra.mxu0 0
  %4342 = vmatprep.subr.bf16.mxu0 0
  %4343 = vmatpush1.bf16.msra.mxu0 0
  %4344 = vmatprep.mubr.bf16.mxu0 0
  %4345 = vmatmul.mubr.bf16.gmra.mrb[0].mxu0 %v4307
  %v4346 = vpop.f32.mrb[0].mxu0
  %v4347 = vadd.f32 0.0, %v4346
  %v4348 = vpop.f32.mrb[0].mxu0
  %v4349 = vpop.f32.mrb[0].mxu0
  %v4350 = vadd.f32 0.0, %v4349
  %v4351 = vpop.f32.mrb[0].mxu0
  %4352 = vmatprep.mubr.bf16.mxu0 0
  %4353 = vmatmul.mubr.bf16.gmra.mrb[0].mxu0 %v4310
  %v4354 = vpop.f32.mrb[0].mxu0
  %v4355 = vadd.f32 0.0, %v4354
  %v4356 = vpop.f32.mrb[0].mxu0
  %v4357 = vpop.f32.mrb[0].mxu0
  %v4358 = vadd.f32 0.0, %v4357
  %v4359 = vpop.f32.mrb[0].mxu0
  %4360 = vdwg.mxu0
  %v4365 = vunpack.c.l.b16 %v4228
  %v4366 = vunpack.c.l.b16 %v4229
  %v4367 = vunpack.c.l.b16 %v4230
  %v4368 = vunpack.c.l.b16 %v4231
  %v4369 = vpack.c.b16 %v4366, %v4365
  %v4370 = vpack.c.b16 %v4368, %v4367
  %v4372 = vsel %vm112, %v4369, 0
  %v4375 = vsel %vm112, %v4370, 0
  %4377 = vmatprep.subr.bf16.mxu0 0
  %4378 = vmatpush1.bf16.msra.mxu0 %v4253
  %4379 = vmatprep.subr.bf16.mxu0 0
  %4380 = vmatpush1.bf16.msra.mxu0 0
  %4381 = vmatprep.subr.bf16.mxu0 0
  %4382 = vmatpush1.bf16.msra.mxu0 0
  %4383 = vmatprep.subr.bf16.mxu0 0
  %4384 = vmatpush1.bf16.msra.mxu0 0
  %4385 = vmatprep.subr.bf16.mxu0 0
  %4386 = vmatpush1.bf16.msra.mxu0 0
  %4387 = vmatprep.subr.bf16.mxu0 0
  %4388 = vmatpush1.bf16.msra.mxu0 0
  %4389 = vmatprep.subr.bf16.mxu0 0
  %4390 = vmatpush1.bf16.msra.mxu0 0
  %4391 = vmatprep.subr.bf16.mxu0 0
  %4392 = vmatpush1.bf16.msra.mxu0 0
  %4393 = vmatprep.subr.bf16.mxu0 0
  %4394 = vmatpush1.bf16.msra.mxu0 0
  %4395 = vmatprep.subr.bf16.mxu0 0
  %4396 = vmatpush1.bf16.msra.mxu0 0
  %4397 = vmatprep.subr.bf16.mxu0 0
  %4398 = vmatpush1.bf16.msra.mxu0 0
  %4399 = vmatprep.subr.bf16.mxu0 0
  %4400 = vmatpush1.bf16.msra.mxu0 0
  %4401 = vmatprep.subr.bf16.mxu0 0
  %4402 = vmatpush1.bf16.msra.mxu0 0
  %4403 = vmatprep.subr.bf16.mxu0 0
  %4404 = vmatpush1.bf16.msra.mxu0 0
  %4405 = vmatprep.subr.bf16.mxu0 0
  %4406 = vmatpush1.bf16.msra.mxu0 0
  %4407 = vmatprep.subr.bf16.mxu0 0
  %4408 = vmatpush1.bf16.msra.mxu0 0
  %4409 = vmatprep.mubr.bf16.mxu0 0
  %4410 = vmatmul.mubr.bf16.gmra.mrb[0].mxu0 %v4372
  %v4411 = vpop.f32.mrb[0].mxu0
  %v4412 = vadd.f32 %v4347, %v4411
  %v4413 = vpop.f32.mrb[0].mxu0
  %v4414 = vpop.f32.mrb[0].mxu0
  %v4415 = vadd.f32 %v4350, %v4414
  %v4416 = vpop.f32.mrb[0].mxu0
  %4417 = vmatprep.mubr.bf16.mxu0 0
  %4418 = vmatmul.mubr.bf16.gmra.mrb[0].mxu0 %v4375
  %v4419 = vpop.f32.mrb[0].mxu0
  %v4420 = vadd.f32 %v4355, %v4419
  %v4421 = vpop.f32.mrb[0].mxu0
  %v4422 = vpop.f32.mrb[0].mxu0
  %v4423 = vadd.f32 %v4358, %v4422
  %v4424 = vpop.f32.mrb[0].mxu0
  %4425 = vdwg.mxu0
  %v4426 = vld [vmem:[%s2176] sm:$0xf]
  %v4427 = vld [vmem:[%s2176 + $0x4] sm:$0xf]
  %v4428 = vld [vmem:[%s2176 + $0x8] sm:$0xf]
  %v4429 = vld [vmem:[%s2176 + $0xc] sm:$0xf]
  %v4434 = vunpack.c.l.b16 %v4426
  %v4435 = vunpack.c.l.b16 %v4427
  %v4436 = vunpack.c.l.b16 %v4428
  %v4437 = vunpack.c.l.b16 %v4429
  %v4438 = vpack.c.b16 %v4435, %v4434
  %v4439 = vpack.c.b16 %v4437, %v4436
  %v4441 = vsel %vm112, %v4438, 0
  %v4444 = vsel %vm112, %v4439, 0
  %4446 = vmatprep.subr.bf16.mxu0 0
  %4447 = vmatpush1.bf16.msra.mxu0 %v4253
  %4448 = vmatprep.subr.bf16.mxu0 0
  %4449 = vmatpush1.bf16.msra.mxu0 0
  %4450 = vmatprep.subr.bf16.mxu0 0
  %4451 = vmatpush1.bf16.msra.mxu0 0
  %4452 = vmatprep.subr.bf16.mxu0 0
  %4453 = vmatpush1.bf16.msra.mxu0 0
  %4454 = vmatprep.subr.bf16.mxu0 0
  %4455 = vmatpush1.bf16.msra.mxu0 0
  %4456 = vmatprep.subr.bf16.mxu0 0
  %4457 = vmatpush1.bf16.msra.mxu0 0
  %4458 = vmatprep.subr.bf16.mxu0 0
  %4459 = vmatpush1.bf16.msra.mxu0 0
  %4460 = vmatprep.subr.bf16.mxu0 0
  %4461 = vmatpush1.bf16.msra.mxu0 0
  %4462 = vmatprep.subr.bf16.mxu0 0
  %4463 = vmatpush1.bf16.msra.mxu0 0
  %4464 = vmatprep.subr.bf16.mxu0 0
  %4465 = vmatpush1.bf16.msra.mxu0 0
  %4466 = vmatprep.subr.bf16.mxu0 0
  %4467 = vmatpush1.bf16.msra.mxu0 0
  %4468 = vmatprep.subr.bf16.mxu0 0
  %4469 = vmatpush1.bf16.msra.mxu0 0
  %4470 = vmatprep.subr.bf16.mxu0 0
  %4471 = vmatpush1.bf16.msra.mxu0 0
  %4472 = vmatprep.subr.bf16.mxu0 0
  %4473 = vmatpush1.bf16.msra.mxu0 0
  %4474 = vmatprep.subr.bf16.mxu0 0
  %4475 = vmatpush1.bf16.msra.mxu0 0
  %4476 = vmatprep.subr.bf16.mxu0 0
  %4477 = vmatpush1.bf16.msra.mxu0 0
  %4478 = vmatprep.mubr.bf16.mxu0 0
  %4479 = vmatmul.mubr.bf16.gmra.mrb[0].mxu0 %v4441
  %v4480 = vpop.f32.mrb[0].mxu0
  %v4481 = vadd.f32 0.0, %v4480
  %v4482 = vpop.f32.mrb[0].mxu0
  %v4483 = vpop.f32.mrb[0].mxu0
  %v4484 = vadd.f32 0.0, %v4483
  %v4485 = vpop.f32.mrb[0].mxu0
  %4486 = vmatprep.mubr.bf16.mxu0 0
  %4487 = vmatmul.mubr.bf16.gmra.mrb[0].mxu0 %v4444
  %v4488 = vpop.f32.mrb[0].mxu0
  %v4489 = vadd.f32 0.0, %v4488
  %v4490 = vpop.f32.mrb[0].mxu0
  %v4491 = vpop.f32.mrb[0].mxu0
  %v4492 = vadd.f32 0.0, %v4491
  %v4493 = vpop.f32.mrb[0].mxu0
  %4494 = vdwg.mxu0
  %v4495 = vpack.c.bf16 %v4484, %v4481
  %v4496 = vpack.c.bf16 %v4492, %v4489
  %v4498 = vsel %vm763, %v4495, 0
  %v4501 = vsel %vm763, %v4496, 0
  %4503 = vmatprep.subr.bf16.mxu0 0
  %4504 = vmatpush1.bf16.msra.mxu0 %v39
  %4505 = vmatprep.subr.bf16.mxu0 0
  %4506 = vmatpush1.bf16.msra.mxu0 0
  %4507 = vmatprep.subr.bf16.mxu0 0
  %4508 = vmatpush1.bf16.msra.mxu0 0
  %4509 = vmatprep.subr.bf16.mxu0 0
  %4510 = vmatpush1.bf16.msra.mxu0 0
  %4511 = vmatprep.subr.bf16.mxu0 0
  %4512 = vmatpush1.bf16.msra.mxu0 0
  %4513 = vmatprep.subr.bf16.mxu0 0
  %4514 = vmatpush1.bf16.msra.mxu0 0
  %4515 = vmatprep.subr.bf16.mxu0 0
  %4516 = vmatpush1.bf16.msra.mxu0 0
  %4517 = vmatprep.subr.bf16.mxu0 0
  %4518 = vmatpush1.bf16.msra.mxu0 0
  %4519 = vmatprep.subr.bf16.mxu0 0
  %4520 = vmatpush1.bf16.msra.mxu0 0
  %4521 = vmatprep.subr.bf16.mxu0 0
  %4522 = vmatpush1.bf16.msra.mxu0 0
  %4523 = vmatprep.subr.bf16.mxu0 0
  %4524 = vmatpush1.bf16.msra.mxu0 0
  %4525 = vmatprep.subr.bf16.mxu0 0
  %4526 = vmatpush1.bf16.msra.mxu0 0
  %4527 = vmatprep.subr.bf16.mxu0 0
  %4528 = vmatpush1.bf16.msra.mxu0 0
  %4529 = vmatprep.subr.bf16.mxu0 0
  %4530 = vmatpush1.bf16.msra.mxu0 0
  %4531 = vmatprep.subr.bf16.mxu0 0
  %4532 = vmatpush1.bf16.msra.mxu0 0
  %4533 = vmatprep.subr.bf16.mxu0 0
  %4534 = vmatpush1.bf16.msra.mxu0 0
  %4535 = vmatprep.mubr.bf16.mxu0 0
  %4536 = vmatmul.mubr.bf16.gmra.mrb[0].mxu0 %v4498
  %v4537 = vpop.f32.mrb[0].mxu0
  %v4538 = vadd.f32 0.0, %v4537
  %v4539 = vpop.f32.mrb[0].mxu0
  %v4540 = vpop.f32.mrb[0].mxu0
  %v4541 = vadd.f32 0.0, %v4540
  %v4542 = vpop.f32.mrb[0].mxu0
  %4543 = vmatprep.mubr.bf16.mxu0 0
  %4544 = vmatmul.mubr.bf16.gmra.mrb[0].mxu0 %v4501
  %v4545 = vpop.f32.mrb[0].mxu0
  %v4546 = vadd.f32 0.0, %v4545
  %v4547 = vpop.f32.mrb[0].mxu0
  %v4548 = vpop.f32.mrb[0].mxu0
  %v4549 = vadd.f32 0.0, %v4548
  %v4550 = vpop.f32.mrb[0].mxu0
  %4551 = vdwg.mxu0
  %v4552 = vadd.f32 %v4412, %v4538
  %v4553 = vadd.f32 %v4415, %v4541
  %v4554 = vadd.f32 %v4420, %v4546
  %v4555 = vadd.f32 %v4423, %v4549
  %v4556 = vadd.f32 %v4552, 1.0
  %v4557 = vadd.f32 %v4553, 1.0
  %v4558 = vadd.f32 %v4554, 1.0
  %v4559 = vadd.f32 %v4555, 1.0
  %s4560 = scalar_lea.vmem %s7, 32
  %4561 = vst.msk [vmem:[%s4560] sm:$0xff] %vm763, %v4556
  %4562 = vst.msk [vmem:[%s4560 + $0x8] sm:$0xff] %vm763, %v4557
  %4563 = vst.msk [vmem:[%s4560 + $0x10] sm:$0xff] %vm763, %v4558
  %4564 = vst.msk [vmem:[%s4560 + $0x18] sm:$0xff] %vm763, %v4559
  // Predicated region
  $region30: #{route_func_mlp_forward.1} parent=0 // pred_check
    _
  $region31: #{route_func_mlp_forward.1} parent=0 // pred_check_branch
    %4566 = sbr.rel (0) target = $region33
  $region32: #{route_func_mlp_forward.1} parent=0 // pred_region
    _
  $region33: #{route_func_mlp_forward.1} parent=0 // pred_fallthru
    _
  // Predicated region
  $region34: #{route_func_mlp_forward.1} parent=0 // pred_check
    _
  $region35: #{route_func_mlp_forward.1} parent=0 // pred_check_branch
    %4568 = sbr.rel (0) target = $region37
  $region36: #{route_func_mlp_forward.1} parent=0 // pred_region
    _
  $region37: #{route_func_mlp_forward.1} parent=0 // pred_fallthru
    _

</llo_original>
